<compile_context>
chip_gen: v5e
topology: v5e:2x2
jax: 0.10.0
libtpu: 0.0.40
codegen_flags: <defaults>
</compile_context>

<pallas_src>
import functools

import jax
import jax.numpy as jnp
from jax.experimental import pallas as pl
from jax.experimental.pallas import tpu as pltpu


def _gate_pad(H):
    # pad each gate to a whole number of 128-lane vregs
    return ((H + 127) // 128) * 128


# --------------------------------------------------------------------------
# Fused Pallas kernel: bidirectional GRU recurrence + fc/tanh epilogue
# --------------------------------------------------------------------------
def encoder_gru_kernel(x_ref, wih_ref, gib_ref, whhf_ref, whhb_ref, bhn_ref,
                       fcw_ref, fcb_ref, out_ref, hidden_ref, *, T, B, H, GP):
    # x_ref:     (T*B, E)    time-major flattened embeddings
    # wih_ref:   (E, 6*GP)   [fwd r|z|n | bwd r|z|n], each gate padded to GP lanes
    # gib_ref:   (1, 6*GP)   hoisted gate bias: r,z -> b_ih+b_hh ; n -> b_in only
    # whhf_ref:  (GP, 3*GP)  forward  hidden->hidden (rows/lanes >= H zeroed)
    # whhb_ref:  (GP, 3*GP)  backward hidden->hidden
    # bhn_ref:   (2, GP)     [b_hn_fwd ; b_hn_bwd]
    # fcw_ref:   (2*GP, H)   fc weight, rows [h_fwd pad | h_bwd pad]
    # fcb_ref:   (1, H)
    # out_ref:   (B, T, 2H)  GRU output, batch-first; [:,:,:H]=fwd, [:,:,H:]=bwd
    # hidden_ref:(B, H)      tanh(fc(cat(h_fwd, h_bwd)))

    # Hoisted input->hidden projection for BOTH directions: one MXU matmul,
    # biases folded in once (not per step).
    gi_all = jnp.dot(x_ref[...], wih_ref[...],
                     preferred_element_type=jnp.float32) + gib_ref[...]

    whh_f = whhf_ref[...]
    whh_b = whhb_ref[...]
    # hoist the broadcast of the n-gate hidden bias out of the loop
    bhn_f = jnp.broadcast_to(bhn_ref[0:1, :], (B, GP))
    bhn_b = jnp.broadcast_to(bhn_ref[1:2, :], (B, GP))

    def gru_step(gi, h, whh, bhn):
        # PyTorch gate order (r, z, n); every slice below is 128-lane aligned.
        gh = jnp.dot(h, whh, preferred_element_type=jnp.float32)
        r = jax.nn.sigmoid(gi[:, 0:GP] + gh[:, 0:GP])
        z = jax.nn.sigmoid(gi[:, GP:2 * GP] + gh[:, GP:2 * GP])
        n = jnp.tanh(gi[:, 2 * GP:3 * GP] + r * (gh[:, 2 * GP:3 * GP] + bhn))
        return (1.0 - z) * n + z * h

    h_f = jnp.zeros((B, GP), jnp.float32)   # padded lanes stay exactly 0
    h_b = jnp.zeros((B, GP), jnp.float32)

    # T is small and static: full unroll gives the LLO scheduler visibility to
    # interleave the two independent recurrences (MXU push hides under VPU/EUP).
    for t in range(T):
        tb = T - 1 - t
        gi_f = gi_all[t * B:(t + 1) * B, 0:3 * GP]
        gi_b = gi_all[tb * B:(tb + 1) * B, 3 * GP:6 * GP]
        h_f = gru_step(gi_f, h_f, whh_f, bhn_f)
        h_b = gru_step(gi_b, h_b, whh_b, bhn_b)
        out_ref[:, t, 0:H] = h_f[:, 0:H]          # forward hidden at time t
        out_ref[:, tb, H:2 * H] = h_b[:, 0:H]     # backward hidden at time T-1-t

    # fc + tanh epilogue on cat(h_fwd, h_bwd); padded lanes are zero so the
    # zero-padded fc weight rows make this exactly fc(cat(h_f[:H], h_b[:H])).
    h_cat = jnp.concatenate([h_f, h_b], axis=-1)                  # (B, 2*GP)
    hidden_ref[...] = jnp.tanh(
        jnp.dot(h_cat, fcw_ref[...], preferred_element_type=jnp.float32)
        + fcb_ref[...])


# --------------------------------------------------------------------------
# Host-side weight packing (done once)
# --------------------------------------------------------------------------
def _pad_gate_cols(w, H, GP):
    # w: (in_dim, 3H) with column blocks [r|z|n] -> (in_dim, 3*GP), lane-padded
    in_dim = w.shape[0]
    out = jnp.zeros((in_dim, 3 * GP), jnp.float32)
    for g in range(3):
        out = out.at[:, g * GP:g * GP + H].set(w[:, g * H:(g + 1) * H])
    return out


def pack_params(p):
    H = p["hidden_size"]
    GP = _gate_pad(H)

    # input->hidden for both directions, gate-padded, concatenated on lanes
    wih = jnp.concatenate([_pad_gate_cols(p["wih_f"], H, GP),
                           _pad_gate_cols(p["wih_b"], H, GP)], axis=1)   # (E, 6GP)

    def gi_bias(bih, bhh):
        b = jnp.zeros((1, 3 * GP), jnp.float32)
        b = b.at[:, 0:H].set(bih[:, 0:H] + bhh[:, 0:H])                  # r
        b = b.at[:, GP:GP + H].set(bih[:, H:2 * H] + bhh[:, H:2 * H])    # z
        b = b.at[:, 2 * GP:2 * GP + H].set(bih[:, 2 * H:3 * H])          # n: b_in only
        return b

    gib = jnp.concatenate([gi_bias(p["bih_f"], p["bhh_f"]),
                           gi_bias(p["bih_b"], p["bhh_b"])], axis=1)     # (1, 6GP)

    def pad_whh(whh):
        w = _pad_gate_cols(whh, H, GP)                                   # (H, 3GP)
        return jnp.zeros((GP, 3 * GP), jnp.float32).at[:H, :].set(w)

    def bhn(bhh):
        return jnp.zeros((1, GP), jnp.float32).at[:, :H].set(bhh[:, 2 * H:3 * H])

    fc_w = jnp.zeros((2 * GP, H), jnp.float32)
    fc_w = fc_w.at[0:H, :].set(p["fc_w_t"][0:H, :])
    fc_w = fc_w.at[GP:GP + H, :].set(p["fc_w_t"][H:2 * H, :])

    return {
        "H": H, "GP": GP,
        "embd_matrix": p["embd_matrix"],
        "wih": wih, "gib": gib,
        "whh_f": pad_whh(p["whh_f"]), "whh_b": pad_whh(p["whh_b"]),
        "bhn": jnp.concatenate([bhn(p["bhh_f"]), bhn(p["bhh_b"])], axis=0),  # (2, GP)
        "fc_w": fc_w, "fc_b": p["fc_b"],
    }


# --------------------------------------------------------------------------
# Encoder forward
# --------------------------------------------------------------------------
def encoder_forward(packed, x_tokens):
    H, GP = packed["H"], packed["GP"]
    B, T = x_tokens.shape

    # Embedding lookup directly in time-major flattened order + eval dropout.
    # TODO(synk): embedding row-gather (data-dependent) and dropout RNG stay in
    # XLA; a Pallas DMA-gather is possible but pointless at these sizes.
    tok_tb = jnp.reshape(jnp.transpose(x_tokens, (1, 0)), (-1,))          # (T*B,)
    x_flat = jnp.take(packed["embd_matrix"], tok_tb, axis=0).astype(jnp.float32)

    kernel = functools.partial(encoder_gru_kernel, T=T, B=B, H=H, GP=GP)
    output, hidden = pl.pallas_call(
        kernel,
        out_shape=(jax.ShapeDtypeStruct((B, T, 2 * H), jnp.float32),
                   jax.ShapeDtypeStruct((B, H), jnp.float32)),
        in_specs=[pl.BlockSpec(memory_space=pltpu.MemorySpace.VMEM)] * 8,
        out_specs=(pl.BlockSpec(memory_space=pltpu.MemorySpace.VMEM),
                   pl.BlockSpec(memory_space=pltpu.MemorySpace.VMEM)),
        # VMEM-residency guard (everything here is a few hundred KB; for long
        # sequences, tile T with a grid axis instead).
        compiler_params=pltpu.CompilerParams(vmem_limit_bytes=32 * 1024 * 1024),
    )(x_flat, packed["wih"], packed["gib"], packed["whh_f"], packed["whh_b"],
      packed["bhn"], packed["fc_w"], packed["fc_b"])
    return output, hidden


# --------------------------------------------------------------------------
# Deterministic parameter initialization (shapes follow nn.Embedding / nn.GRU /
# nn.Linear in the PyTorch module; GRU/Linear weights stored pre-transposed)
# --------------------------------------------------------------------------
def init_params(key, vocab_size, embed_dim, hidden_size):
    ks = jax.random.split(key, 16)
    k = 1.0 / jnp.sqrt(hidden_size)

    def u(kk, shape, scale):
        return jax.random.uniform(kk, shape, jnp.float32, -scale, scale)

    return {
        "hidden_size": hidden_size,
        # nn.Embedding default: N(0, 1)
        "embd_matrix": jax.random.normal(ks[0], (vocab_size, embed_dim),
                                         jnp.float32),
        # GRU forward-direction weights (pre-transposed for x @ W, gates [r|z|n])
        "wih_f": u(ks[1], (embed_dim, 3 * hidden_size), k),
        "whh_f": u(ks[2], (hidden_size, 3 * hidden_size), k),
        "bih_f": u(ks[3], (1, 3 * hidden_size), k),
        "bhh_f": u(ks[4], (1, 3 * hidden_size), k),
        # GRU backward-direction weights
        "wih_b": u(ks[5], (embed_dim, 3 * hidden_size), k),
        "whh_b": u(ks[6], (hidden_size, 3 * hidden_size), k),
        "bih_b": u(ks[7], (1, 3 * hidden_size), k),
        "bhh_b": u(ks[8], (1, 3 * hidden_size), k),
        # nn.Linear(2H, H): U(-1/sqrt(2H), 1/sqrt(2H)), stored transposed
        "fc_w_t": u(ks[9], (2 * hidden_size, hidden_size),
                    1.0 / jnp.sqrt(2 * hidden_size)),
        "fc_b": u(ks[10], (1, hidden_size), 1.0 / jnp.sqrt(2 * hidden_size)),
    }


if __name__ == "__main__":
    VOCAB = 50
    EMBED = 32     # input_size (embd_matrix.size(-1))
    HIDDEN = 32    # lstm_hidden_size
    B, T = 2, 8

    key = jax.random.PRNGKey(0)
    k_param, k_tok = jax.random.split(key)
    params = init_params(k_param, VOCAB, EMBED, HIDDEN)
    packed = pack_params(params)
    x_tokens = jax.random.randint(k_tok, (B, T), 0, VOCAB, dtype=jnp.int32)

    output, hidden = encoder_forward(packed, x_tokens)
    output = jax.block_until_ready(output)
    hidden = jax.block_until_ready(hidden)

    assert output.shape == (B, T, 2 * HIDDEN)
    assert hidden.shape == (B, HIDDEN)
    assert bool(jnp.all(jnp.isfinite(output))) and bool(jnp.all(jnp.isfinite(hidden)))
    print("KERNEL_OK")
</pallas_src>

<mosaic_0001>
module attributes {stable_mosaic.version = 11 : i64} {
  func.func @encoder_gru_kernel(%arg0: memref<16x32xf32, #tpu.memory_space<vmem>>, %arg1: memref<32x768xf32, #tpu.memory_space<vmem>>, %arg2: memref<1x768xf32, #tpu.memory_space<vmem>>, %arg3: memref<128x384xf32, #tpu.memory_space<vmem>>, %arg4: memref<128x384xf32, #tpu.memory_space<vmem>>, %arg5: memref<2x128xf32, #tpu.memory_space<vmem>>, %arg6: memref<256x32xf32, #tpu.memory_space<vmem>>, %arg7: memref<1x32xf32, #tpu.memory_space<vmem>>, %arg8: memref<2x8x64xf32, #tpu.memory_space<vmem>>, %arg9: memref<2x32xf32, #tpu.memory_space<vmem>>) attributes {dimension_semantics = [], scalar_prefetch = 0 : i64, scratch_operands = 0 : i64, tpu.core_type = #tpu.core_type<tc>} {
    %c0 = arith.constant 0 : index
    %c0_0 = arith.constant 0 : index
    %0 = vector.load %arg0[%c0, %c0_0] : memref<16x32xf32, #tpu.memory_space<vmem>>, vector<16x32xf32>
    %c0_1 = arith.constant 0 : index
    %c0_2 = arith.constant 0 : index
    %1 = vector.load %arg1[%c0_1, %c0_2] : memref<32x768xf32, #tpu.memory_space<vmem>>, vector<32x768xf32>
    %cst = arith.constant dense<0.000000e+00> : vector<16x768xf32>
    %2 = tpu.matmul %0, %1, %cst {dimension_numbers = #tpu.dot_dimension_numbers<[1], [0], [0], [1], [0, 0, 1, 1], [], []>} : vector<16x32xf32>, vector<32x768xf32>, vector<16x768xf32> -> vector<16x768xf32>
    %c0_3 = arith.constant 0 : index
    %c0_4 = arith.constant 0 : index
    %3 = vector.load %arg2[%c0_3, %c0_4] : memref<1x768xf32, #tpu.memory_space<vmem>>, vector<1x768xf32>
    %4 = vector.broadcast %3 : vector<1x768xf32> to vector<16x768xf32>
    %5 = arith.addf %2, %4 : vector<16x768xf32>
    %c0_5 = arith.constant 0 : index
    %c0_6 = arith.constant 0 : index
    %6 = vector.load %arg3[%c0_5, %c0_6] : memref<128x384xf32, #tpu.memory_space<vmem>>, vector<128x384xf32>
    %c0_7 = arith.constant 0 : index
    %c0_8 = arith.constant 0 : index
    %7 = vector.load %arg4[%c0_7, %c0_8] : memref<128x384xf32, #tpu.memory_space<vmem>>, vector<128x384xf32>
    %c0_9 = arith.constant 0 : index
    %c0_10 = arith.constant 0 : index
    %8 = vector.load %arg5[%c0_9, %c0_10] : memref<2x128xf32, #tpu.memory_space<vmem>>, vector<1x128xf32>
    %9 = vector.shape_cast %8 : vector<1x128xf32> to vector<1x128xf32>
    %10 = vector.broadcast %9 : vector<1x128xf32> to vector<2x128xf32>
    %c1 = arith.constant 1 : index
    %c0_11 = arith.constant 0 : index
    %11 = vector.load %arg5[%c1, %c0_11] : memref<2x128xf32, #tpu.memory_space<vmem>>, vector<1x128xf32>
    %12 = vector.shape_cast %11 : vector<1x128xf32> to vector<1x128xf32>
    %13 = vector.broadcast %12 : vector<1x128xf32> to vector<2x128xf32>
    %cst_12 = arith.constant 0.000000e+00 : f32
    %14 = vector.broadcast %cst_12 : f32 to vector<2x128xf32>
    %cst_13 = arith.constant 0.000000e+00 : f32
    %15 = vector.broadcast %cst_13 : f32 to vector<2x128xf32>
    %16 = vector.extract_strided_slice %5 {offsets = [0, 0], sizes = [2, 384], strides = [1, 1]} : vector<16x768xf32> to vector<2x384xf32>
    %17 = vector.extract_strided_slice %5 {offsets = [14, 384], sizes = [2, 384], strides = [1, 1]} : vector<16x768xf32> to vector<2x384xf32>
    %cst_14 = arith.constant dense<0.000000e+00> : vector<2x384xf32>
    %18 = tpu.matmul %14, %6, %cst_14 {dimension_numbers = #tpu.dot_dimension_numbers<[1], [0], [0], [1], [0, 0, 1, 1], [], []>} : vector<2x128xf32>, vector<128x384xf32>, vector<2x384xf32> -> vector<2x384xf32>
    %19 = vector.extract_strided_slice %16 {offsets = [0, 0], sizes = [2, 128], strides = [1, 1]} : vector<2x384xf32> to vector<2x128xf32>
    %20 = vector.extract_strided_slice %18 {offsets = [0, 0], sizes = [2, 128], strides = [1, 1]} : vector<2x384xf32> to vector<2x128xf32>
    %21 = arith.addf %19, %20 : vector<2x128xf32>
    %22 = arith.negf %21 : vector<2x128xf32>
    %23 = math.exp %22 : vector<2x128xf32>
    %cst_15 = arith.constant 1.000000e+00 : f32
    %24 = vector.broadcast %cst_15 : f32 to vector<2x128xf32>
    %25 = arith.addf %24, %23 : vector<2x128xf32>
    %26 = arith.divf %24, %25 : vector<2x128xf32>
    %27 = vector.extract_strided_slice %16 {offsets = [0, 128], sizes = [2, 128], strides = [1, 1]} : vector<2x384xf32> to vector<2x128xf32>
    %28 = vector.extract_strided_slice %18 {offsets = [0, 128], sizes = [2, 128], strides = [1, 1]} : vector<2x384xf32> to vector<2x128xf32>
    %29 = arith.addf %27, %28 : vector<2x128xf32>
    %30 = arith.negf %29 : vector<2x128xf32>
    %31 = math.exp %30 : vector<2x128xf32>
    %cst_16 = arith.constant 1.000000e+00 : f32
    %32 = vector.broadcast %cst_16 : f32 to vector<2x128xf32>
    %33 = arith.addf %32, %31 : vector<2x128xf32>
    %34 = arith.divf %32, %33 : vector<2x128xf32>
    %35 = vector.extract_strided_slice %16 {offsets = [0, 256], sizes = [2, 128], strides = [1, 1]} : vector<2x384xf32> to vector<2x128xf32>
    %36 = vector.extract_strided_slice %18 {offsets = [0, 256], sizes = [2, 128], strides = [1, 1]} : vector<2x384xf32> to vector<2x128xf32>
    %37 = arith.addf %36, %10 : vector<2x128xf32>
    %38 = arith.mulf %26, %37 : vector<2x128xf32>
    %39 = arith.addf %35, %38 : vector<2x128xf32>
    %40 = math.tanh %39 : vector<2x128xf32>
    %cst_17 = arith.constant 1.000000e+00 : f32
    %41 = vector.broadcast %cst_17 : f32 to vector<2x128xf32>
    %42 = arith.subf %41, %34 : vector<2x128xf32>
    %43 = arith.mulf %42, %40 : vector<2x128xf32>
    %44 = arith.mulf %34, %14 : vector<2x128xf32>
    %45 = arith.addf %43, %44 : vector<2x128xf32>
    %cst_18 = arith.constant dense<0.000000e+00> : vector<2x384xf32>
    %46 = tpu.matmul %15, %7, %cst_18 {dimension_numbers = #tpu.dot_dimension_numbers<[1], [0], [0], [1], [0, 0, 1, 1], [], []>} : vector<2x128xf32>, vector<128x384xf32>, vector<2x384xf32> -> vector<2x384xf32>
    %47 = vector.extract_strided_slice %17 {offsets = [0, 0], sizes = [2, 128], strides = [1, 1]} : vector<2x384xf32> to vector<2x128xf32>
    %48 = vector.extract_strided_slice %46 {offsets = [0, 0], sizes = [2, 128], strides = [1, 1]} : vector<2x384xf32> to vector<2x128xf32>
    %49 = arith.addf %47, %48 : vector<2x128xf32>
    %50 = arith.negf %49 : vector<2x128xf32>
    %51 = math.exp %50 : vector<2x128xf32>
    %cst_19 = arith.constant 1.000000e+00 : f32
    %52 = vector.broadcast %cst_19 : f32 to vector<2x128xf32>
    %53 = arith.addf %52, %51 : vector<2x128xf32>
    %54 = arith.divf %52, %53 : vector<2x128xf32>
    %55 = vector.extract_strided_slice %17 {offsets = [0, 128], sizes = [2, 128], strides = [1, 1]} : vector<2x384xf32> to vector<2x128xf32>
    %56 = vector.extract_strided_slice %46 {offsets = [0, 128], sizes = [2, 128], strides = [1, 1]} : vector<2x384xf32> to vector<2x128xf32>
    %57 = arith.addf %55, %56 : vector<2x128xf32>
    %58 = arith.negf %57 : vector<2x128xf32>
    %59 = math.exp %58 : vector<2x128xf32>
    %cst_20 = arith.constant 1.000000e+00 : f32
    %60 = vector.broadcast %cst_20 : f32 to vector<2x128xf32>
    %61 = arith.addf %60, %59 : vector<2x128xf32>
    %62 = arith.divf %60, %61 : vector<2x128xf32>
    %63 = vector.extract_strided_slice %17 {offsets = [0, 256], sizes = [2, 128], strides = [1, 1]} : vector<2x384xf32> to vector<2x128xf32>
    %64 = vector.extract_strided_slice %46 {offsets = [0, 256], sizes = [2, 128], strides = [1, 1]} : vector<2x384xf32> to vector<2x128xf32>
    %65 = arith.addf %64, %13 : vector<2x128xf32>
    %66 = arith.mulf %54, %65 : vector<2x128xf32>
    %67 = arith.addf %63, %66 : vector<2x128xf32>
    %68 = math.tanh %67 : vector<2x128xf32>
    %cst_21 = arith.constant 1.000000e+00 : f32
    %69 = vector.broadcast %cst_21 : f32 to vector<2x128xf32>
    %70 = arith.subf %69, %62 : vector<2x128xf32>
    %71 = arith.mulf %70, %68 : vector<2x128xf32>
    %72 = arith.mulf %62, %15 : vector<2x128xf32>
    %73 = arith.addf %71, %72 : vector<2x128xf32>
    %74 = vector.extract_strided_slice %45 {offsets = [0, 0], sizes = [2, 32], strides = [1, 1]} : vector<2x128xf32> to vector<2x32xf32>
    %c0_22 = arith.constant 0 : index
    %c0_23 = arith.constant 0 : index
    %c0_24 = arith.constant 0 : index
    %75 = vector.load %arg8[%c0_22, %c0_23, %c0_24] : memref<2x8x64xf32, #tpu.memory_space<vmem>>, vector<2x1x32xf32>
    %76 = vector.shape_cast %75 : vector<2x1x32xf32> to vector<2x32xf32>
    %77 = vector.shape_cast %74 : vector<2x32xf32> to vector<2x1x32xf32>
    tpu.vector_store %arg8[%c0_22, %c0_23, %c0_24], %77 {strides = array<i32>} : memref<2x8x64xf32, #tpu.memory_space<vmem>>, vector<2x1x32xf32>,
    %78 = vector.extract_strided_slice %73 {offsets = [0, 0], sizes = [2, 32], strides = [1, 1]} : vector<2x128xf32> to vector<2x32xf32>
    %c0_25 = arith.constant 0 : index
    %c7 = arith.constant 7 : index
    %c32 = arith.constant 32 : index
    %79 = vector.load %arg8[%c0_25, %c7, %c32] : memref<2x8x64xf32, #tpu.memory_space<vmem>>, vector<2x1x32xf32>
    %80 = vector.shape_cast %79 : vector<2x1x32xf32> to vector<2x32xf32>
    %81 = vector.shape_cast %78 : vector<2x32xf32> to vector<2x1x32xf32>
    tpu.vector_store %arg8[%c0_25, %c7, %c32], %81 {strides = array<i32>} : memref<2x8x64xf32, #tpu.memory_space<vmem>>, vector<2x1x32xf32>,
    %82 = vector.extract_strided_slice %5 {offsets = [2, 0], sizes = [2, 384], strides = [1, 1]} : vector<16x768xf32> to vector<2x384xf32>
    %83 = vector.extract_strided_slice %5 {offsets = [12, 384], sizes = [2, 384], strides = [1, 1]} : vector<16x768xf32> to vector<2x384xf32>
    %cst_26 = arith.constant dense<0.000000e+00> : vector<2x384xf32>
    %84 = tpu.matmul %45, %6, %cst_26 {dimension_numbers = #tpu.dot_dimension_numbers<[1], [0], [0], [1], [0, 0, 1, 1], [], []>} : vector<2x128xf32>, vector<128x384xf32>, vector<2x384xf32> -> vector<2x384xf32>
    %85 = vector.extract_strided_slice %82 {offsets = [0, 0], sizes = [2, 128], strides = [1, 1]} : vector<2x384xf32> to vector<2x128xf32>
    %86 = vector.extract_strided_slice %84 {offsets = [0, 0], sizes = [2, 128], strides = [1, 1]} : vector<2x384xf32> to vector<2x128xf32>
    %87 = arith.addf %85, %86 : vector<2x128xf32>
    %88 = arith.negf %87 : vector<2x128xf32>
    %89 = math.exp %88 : vector<2x128xf32>
    %cst_27 = arith.constant 1.000000e+00 : f32
    %90 = vector.broadcast %cst_27 : f32 to vector<2x128xf32>
    %91 = arith.addf %90, %89 : vector<2x128xf32>
    %92 = arith.divf %90, %91 : vector<2x128xf32>
    %93 = vector.extract_strided_slice %82 {offsets = [0, 128], sizes = [2, 128], strides = [1, 1]} : vector<2x384xf32> to vector<2x128xf32>
    %94 = vector.extract_strided_slice %84 {offsets = [0, 128], sizes = [2, 128], strides = [1, 1]} : vector<2x384xf32> to vector<2x128xf32>
    %95 = arith.addf %93, %94 : vector<2x128xf32>
    %96 = arith.negf %95 : vector<2x128xf32>
    %97 = math.exp %96 : vector<2x128xf32>
    %cst_28 = arith.constant 1.000000e+00 : f32
    %98 = vector.broadcast %cst_28 : f32 to vector<2x128xf32>
    %99 = arith.addf %98, %97 : vector<2x128xf32>
    %100 = arith.divf %98, %99 : vector<2x128xf32>
    %101 = vector.extract_strided_slice %82 {offsets = [0, 256], sizes = [2, 128], strides = [1, 1]} : vector<2x384xf32> to vector<2x128xf32>
    %102 = vector.extract_strided_slice %84 {offsets = [0, 256], sizes = [2, 128], strides = [1, 1]} : vector<2x384xf32> to vector<2x128xf32>
    %103 = arith.addf %102, %10 : vector<2x128xf32>
    %104 = arith.mulf %92, %103 : vector<2x128xf32>
    %105 = arith.addf %101, %104 : vector<2x128xf32>
    %106 = math.tanh %105 : vector<2x128xf32>
    %cst_29 = arith.constant 1.000000e+00 : f32
    %107 = vector.broadcast %cst_29 : f32 to vector<2x128xf32>
    %108 = arith.subf %107, %100 : vector<2x128xf32>
    %109 = arith.mulf %108, %106 : vector<2x128xf32>
    %110 = arith.mulf %100, %45 : vector<2x128xf32>
    %111 = arith.addf %109, %110 : vector<2x128xf32>
    %cst_30 = arith.constant dense<0.000000e+00> : vector<2x384xf32>
    %112 = tpu.matmul %73, %7, %cst_30 {dimension_numbers = #tpu.dot_dimension_numbers<[1], [0], [0], [1], [0, 0, 1, 1], [], []>} : vector<2x128xf32>, vector<128x384xf32>, vector<2x384xf32> -> vector<2x384xf32>
    %113 = vector.extract_strided_slice %83 {offsets = [0, 0], sizes = [2, 128], strides = [1, 1]} : vector<2x384xf32> to vector<2x128xf32>
    %114 = vector.extract_strided_slice %112 {offsets = [0, 0], sizes = [2, 128], strides = [1, 1]} : vector<2x384xf32> to vector<2x128xf32>
    %115 = arith.addf %113, %114 : vector<2x128xf32>
    %116 = arith.negf %115 : vector<2x128xf32>
    %117 = math.exp %116 : vector<2x128xf32>
    %cst_31 = arith.constant 1.000000e+00 : f32
    %118 = vector.broadcast %cst_31 : f32 to vector<2x128xf32>
    %119 = arith.addf %118, %117 : vector<2x128xf32>
    %120 = arith.divf %118, %119 : vector<2x128xf32>
    %121 = vector.extract_strided_slice %83 {offsets = [0, 128], sizes = [2, 128], strides = [1, 1]} : vector<2x384xf32> to vector<2x128xf32>
    %122 = vector.extract_strided_slice %112 {offsets = [0, 128], sizes = [2, 128], strides = [1, 1]} : vector<2x384xf32> to vector<2x128xf32>
    %123 = arith.addf %121, %122 : vector<2x128xf32>
    %124 = arith.negf %123 : vector<2x128xf32>
    %125 = math.exp %124 : vector<2x128xf32>
    %cst_32 = arith.constant 1.000000e+00 : f32
    %126 = vector.broadcast %cst_32 : f32 to vector<2x128xf32>
    %127 = arith.addf %126, %125 : vector<2x128xf32>
    %128 = arith.divf %126, %127 : vector<2x128xf32>
    %129 = vector.extract_strided_slice %83 {offsets = [0, 256], sizes = [2, 128], strides = [1, 1]} : vector<2x384xf32> to vector<2x128xf32>
    %130 = vector.extract_strided_slice %112 {offsets = [0, 256], sizes = [2, 128], strides = [1, 1]} : vector<2x384xf32> to vector<2x128xf32>
    %131 = arith.addf %130, %13 : vector<2x128xf32>
    %132 = arith.mulf %120, %131 : vector<2x128xf32>
    %133 = arith.addf %129, %132 : vector<2x128xf32>
    %134 = math.tanh %133 : vector<2x128xf32>
    %cst_33 = arith.constant 1.000000e+00 : f32
    %135 = vector.broadcast %cst_33 : f32 to vector<2x128xf32>
    %136 = arith.subf %135, %128 : vector<2x128xf32>
    %137 = arith.mulf %136, %134 : vector<2x128xf32>
    %138 = arith.mulf %128, %73 : vector<2x128xf32>
    %139 = arith.addf %137, %138 : vector<2x128xf32>
    %140 = vector.extract_strided_slice %111 {offsets = [0, 0], sizes = [2, 32], strides = [1, 1]} : vector<2x128xf32> to vector<2x32xf32>
    %c0_34 = arith.constant 0 : index
    %c1_35 = arith.constant 1 : index
    %c0_36 = arith.constant 0 : index
    %141 = vector.load %arg8[%c0_34, %c1_35, %c0_36] : memref<2x8x64xf32, #tpu.memory_space<vmem>>, vector<2x1x32xf32>
    %142 = vector.shape_cast %141 : vector<2x1x32xf32> to vector<2x32xf32>
    %143 = vector.shape_cast %140 : vector<2x32xf32> to vector<2x1x32xf32>
    tpu.vector_store %arg8[%c0_34, %c1_35, %c0_36], %143 {strides = array<i32>} : memref<2x8x64xf32, #tpu.memory_space<vmem>>, vector<2x1x32xf32>,
    %144 = vector.extract_strided_slice %139 {offsets = [0, 0], sizes = [2, 32], strides = [1, 1]} : vector<2x128xf32> to vector<2x32xf32>
    %c0_37 = arith.constant 0 : index
    %c6 = arith.constant 6 : index
    %c32_38 = arith.constant 32 : index
    %145 = vector.load %arg8[%c0_37, %c6, %c32_38] : memref<2x8x64xf32, #tpu.memory_space<vmem>>, vector<2x1x32xf32>
    %146 = vector.shape_cast %145 : vector<2x1x32xf32> to vector<2x32xf32>
    %147 = vector.shape_cast %144 : vector<2x32xf32> to vector<2x1x32xf32>
    tpu.vector_store %arg8[%c0_37, %c6, %c32_38], %147 {strides = array<i32>} : memref<2x8x64xf32, #tpu.memory_space<vmem>>, vector<2x1x32xf32>,
    %148 = vector.extract_strided_slice %5 {offsets = [4, 0], sizes = [2, 384], strides = [1, 1]} : vector<16x768xf32> to vector<2x384xf32>
    %149 = vector.extract_strided_slice %5 {offsets = [10, 384], sizes = [2, 384], strides = [1, 1]} : vector<16x768xf32> to vector<2x384xf32>
    %cst_39 = arith.constant dense<0.000000e+00> : vector<2x384xf32>
    %150 = tpu.matmul %111, %6, %cst_39 {dimension_numbers = #tpu.dot_dimension_numbers<[1], [0], [0], [1], [0, 0, 1, 1], [], []>} : vector<2x128xf32>, vector<128x384xf32>, vector<2x384xf32> -> vector<2x384xf32>
    %151 = vector.extract_strided_slice %148 {offsets = [0, 0], sizes = [2, 128], strides = [1, 1]} : vector<2x384xf32> to vector<2x128xf32>
    %152 = vector.extract_strided_slice %150 {offsets = [0, 0], sizes = [2, 128], strides = [1, 1]} : vector<2x384xf32> to vector<2x128xf32>
    %153 = arith.addf %151, %152 : vector<2x128xf32>
    %154 = arith.negf %153 : vector<2x128xf32>
    %155 = math.exp %154 : vector<2x128xf32>
    %cst_40 = arith.constant 1.000000e+00 : f32
    %156 = vector.broadcast %cst_40 : f32 to vector<2x128xf32>
    %157 = arith.addf %156, %155 : vector<2x128xf32>
    %158 = arith.divf %156, %157 : vector<2x128xf32>
    %159 = vector.extract_strided_slice %148 {offsets = [0, 128], sizes = [2, 128], strides = [1, 1]} : vector<2x384xf32> to vector<2x128xf32>
    %160 = vector.extract_strided_slice %150 {offsets = [0, 128], sizes = [2, 128], strides = [1, 1]} : vector<2x384xf32> to vector<2x128xf32>
    %161 = arith.addf %159, %160 : vector<2x128xf32>
    %162 = arith.negf %161 : vector<2x128xf32>
    %163 = math.exp %162 : vector<2x128xf32>
    %cst_41 = arith.constant 1.000000e+00 : f32
    %164 = vector.broadcast %cst_41 : f32 to vector<2x128xf32>
    %165 = arith.addf %164, %163 : vector<2x128xf32>
    %166 = arith.divf %164, %165 : vector<2x128xf32>
    %167 = vector.extract_strided_slice %148 {offsets = [0, 256], sizes = [2, 128], strides = [1, 1]} : vector<2x384xf32> to vector<2x128xf32>
    %168 = vector.extract_strided_slice %150 {offsets = [0, 256], sizes = [2, 128], strides = [1, 1]} : vector<2x384xf32> to vector<2x128xf32>
    %169 = arith.addf %168, %10 : vector<2x128xf32>
    %170 = arith.mulf %158, %169 : vector<2x128xf32>
    %171 = arith.addf %167, %170 : vector<2x128xf32>
    %172 = math.tanh %171 : vector<2x128xf32>
    %cst_42 = arith.constant 1.000000e+00 : f32
    %173 = vector.broadcast %cst_42 : f32 to vector<2x128xf32>
    %174 = arith.subf %173, %166 : vector<2x128xf32>
    %175 = arith.mulf %174, %172 : vector<2x128xf32>
    %176 = arith.mulf %166, %111 : vector<2x128xf32>
    %177 = arith.addf %175, %176 : vector<2x128xf32>
    %cst_43 = arith.constant dense<0.000000e+00> : vector<2x384xf32>
    %178 = tpu.matmul %139, %7, %cst_43 {dimension_numbers = #tpu.dot_dimension_numbers<[1], [0], [0], [1], [0, 0, 1, 1], [], []>} : vector<2x128xf32>, vector<128x384xf32>, vector<2x384xf32> -> vector<2x384xf32>
    %179 = vector.extract_strided_slice %149 {offsets = [0, 0], sizes = [2, 128], strides = [1, 1]} : vector<2x384xf32> to vector<2x128xf32>
    %180 = vector.extract_strided_slice %178 {offsets = [0, 0], sizes = [2, 128], strides = [1, 1]} : vector<2x384xf32> to vector<2x128xf32>
    %181 = arith.addf %179, %180 : vector<2x128xf32>
    %182 = arith.negf %181 : vector<2x128xf32>
    %183 = math.exp %182 : vector<2x128xf32>
    %cst_44 = arith.constant 1.000000e+00 : f32
    %184 = vector.broadcast %cst_44 : f32 to vector<2x128xf32>
    %185 = arith.addf %184, %183 : vector<2x128xf32>
    %186 = arith.divf %184, %185 : vector<2x128xf32>
    %187 = vector.extract_strided_slice %149 {offsets = [0, 128], sizes = [2, 128], strides = [1, 1]} : vector<2x384xf32> to vector<2x128xf32>
    %188 = vector.extract_strided_slice %178 {offsets = [0, 128], sizes = [2, 128], strides = [1, 1]} : vector<2x384xf32> to vector<2x128xf32>
    %189 = arith.addf %187, %188 : vector<2x128xf32>
    %190 = arith.negf %189 : vector<2x128xf32>
    %191 = math.exp %190 : vector<2x128xf32>
    %cst_45 = arith.constant 1.000000e+00 : f32
    %192 = vector.broadcast %cst_45 : f32 to vector<2x128xf32>
    %193 = arith.addf %192, %191 : vector<2x128xf32>
    %194 = arith.divf %192, %193 : vector<2x128xf32>
    %195 = vector.extract_strided_slice %149 {offsets = [0, 256], sizes = [2, 128], strides = [1, 1]} : vector<2x384xf32> to vector<2x128xf32>
    %196 = vector.extract_strided_slice %178 {offsets = [0, 256], sizes = [2, 128], strides = [1, 1]} : vector<2x384xf32> to vector<2x128xf32>
    %197 = arith.addf %196, %13 : vector<2x128xf32>
    %198 = arith.mulf %186, %197 : vector<2x128xf32>
    %199 = arith.addf %195, %198 : vector<2x128xf32>
    %200 = math.tanh %199 : vector<2x128xf32>
    %cst_46 = arith.constant 1.000000e+00 : f32
    %201 = vector.broadcast %cst_46 : f32 to vector<2x128xf32>
    %202 = arith.subf %201, %194 : vector<2x128xf32>
    %203 = arith.mulf %202, %200 : vector<2x128xf32>
    %204 = arith.mulf %194, %139 : vector<2x128xf32>
    %205 = arith.addf %203, %204 : vector<2x128xf32>
    %206 = vector.extract_strided_slice %177 {offsets = [0, 0], sizes = [2, 32], strides = [1, 1]} : vector<2x128xf32> to vector<2x32xf32>
    %c0_47 = arith.constant 0 : index
    %c2 = arith.constant 2 : index
    %c0_48 = arith.constant 0 : index
    %207 = vector.load %arg8[%c0_47, %c2, %c0_48] : memref<2x8x64xf32, #tpu.memory_space<vmem>>, vector<2x1x32xf32>
    %208 = vector.shape_cast %207 : vector<2x1x32xf32> to vector<2x32xf32>
    %209 = vector.shape_cast %206 : vector<2x32xf32> to vector<2x1x32xf32>
    tpu.vector_store %arg8[%c0_47, %c2, %c0_48], %209 {strides = array<i32>} : memref<2x8x64xf32, #tpu.memory_space<vmem>>, vector<2x1x32xf32>,
    %210 = vector.extract_strided_slice %205 {offsets = [0, 0], sizes = [2, 32], strides = [1, 1]} : vector<2x128xf32> to vector<2x32xf32>
    %c0_49 = arith.constant 0 : index
    %c5 = arith.constant 5 : index
    %c32_50 = arith.constant 32 : index
    %211 = vector.load %arg8[%c0_49, %c5, %c32_50] : memref<2x8x64xf32, #tpu.memory_space<vmem>>, vector<2x1x32xf32>
    %212 = vector.shape_cast %211 : vector<2x1x32xf32> to vector<2x32xf32>
    %213 = vector.shape_cast %210 : vector<2x32xf32> to vector<2x1x32xf32>
    tpu.vector_store %arg8[%c0_49, %c5, %c32_50], %213 {strides = array<i32>} : memref<2x8x64xf32, #tpu.memory_space<vmem>>, vector<2x1x32xf32>,
    %214 = vector.extract_strided_slice %5 {offsets = [6, 0], sizes = [2, 384], strides = [1, 1]} : vector<16x768xf32> to vector<2x384xf32>
    %215 = vector.extract_strided_slice %5 {offsets = [8, 384], sizes = [2, 384], strides = [1, 1]} : vector<16x768xf32> to vector<2x384xf32>
    %cst_51 = arith.constant dense<0.000000e+00> : vector<2x384xf32>
    %216 = tpu.matmul %177, %6, %cst_51 {dimension_numbers = #tpu.dot_dimension_numbers<[1], [0], [0], [1], [0, 0, 1, 1], [], []>} : vector<2x128xf32>, vector<128x384xf32>, vector<2x384xf32> -> vector<2x384xf32>
    %217 = vector.extract_strided_slice %214 {offsets = [0, 0], sizes = [2, 128], strides = [1, 1]} : vector<2x384xf32> to vector<2x128xf32>
    %218 = vector.extract_strided_slice %216 {offsets = [0, 0], sizes = [2, 128], strides = [1, 1]} : vector<2x384xf32> to vector<2x128xf32>
    %219 = arith.addf %217, %218 : vector<2x128xf32>
    %220 = arith.negf %219 : vector<2x128xf32>
    %221 = math.exp %220 : vector<2x128xf32>
    %cst_52 = arith.constant 1.000000e+00 : f32
    %222 = vector.broadcast %cst_52 : f32 to vector<2x128xf32>
    %223 = arith.addf %222, %221 : vector<2x128xf32>
    %224 = arith.divf %222, %223 : vector<2x128xf32>
    %225 = vector.extract_strided_slice %214 {offsets = [0, 128], sizes = [2, 128], strides = [1, 1]} : vector<2x384xf32> to vector<2x128xf32>
    %226 = vector.extract_strided_slice %216 {offsets = [0, 128], sizes = [2, 128], strides = [1, 1]} : vector<2x384xf32> to vector<2x128xf32>
    %227 = arith.addf %225, %226 : vector<2x128xf32>
    %228 = arith.negf %227 : vector<2x128xf32>
    %229 = math.exp %228 : vector<2x128xf32>
    %cst_53 = arith.constant 1.000000e+00 : f32
    %230 = vector.broadcast %cst_53 : f32 to vector<2x128xf32>
    %231 = arith.addf %230, %229 : vector<2x128xf32>
    %232 = arith.divf %230, %231 : vector<2x128xf32>
    %233 = vector.extract_strided_slice %214 {offsets = [0, 256], sizes = [2, 128], strides = [1, 1]} : vector<2x384xf32> to vector<2x128xf32>
    %234 = vector.extract_strided_slice %216 {offsets = [0, 256], sizes = [2, 128], strides = [1, 1]} : vector<2x384xf32> to vector<2x128xf32>
    %235 = arith.addf %234, %10 : vector<2x128xf32>
    %236 = arith.mulf %224, %235 : vector<2x128xf32>
    %237 = arith.addf %233, %236 : vector<2x128xf32>
    %238 = math.tanh %237 : vector<2x128xf32>
    %cst_54 = arith.constant 1.000000e+00 : f32
    %239 = vector.broadcast %cst_54 : f32 to vector<2x128xf32>
    %240 = arith.subf %239, %232 : vector<2x128xf32>
    %241 = arith.mulf %240, %238 : vector<2x128xf32>
    %242 = arith.mulf %232, %177 : vector<2x128xf32>
    %243 = arith.addf %241, %242 : vector<2x128xf32>
    %cst_55 = arith.constant dense<0.000000e+00> : vector<2x384xf32>
    %244 = tpu.matmul %205, %7, %cst_55 {dimension_numbers = #tpu.dot_dimension_numbers<[1], [0], [0], [1], [0, 0, 1, 1], [], []>} : vector<2x128xf32>, vector<128x384xf32>, vector<2x384xf32> -> vector<2x384xf32>
    %245 = vector.extract_strided_slice %215 {offsets = [0, 0], sizes = [2, 128], strides = [1, 1]} : vector<2x384xf32> to vector<2x128xf32>
    %246 = vector.extract_strided_slice %244 {offsets = [0, 0], sizes = [2, 128], strides = [1, 1]} : vector<2x384xf32> to vector<2x128xf32>
    %247 = arith.addf %245, %246 : vector<2x128xf32>
    %248 = arith.negf %247 : vector<2x128xf32>
    %249 = math.exp %248 : vector<2x128xf32>
    %cst_56 = arith.constant 1.000000e+00 : f32
    %250 = vector.broadcast %cst_56 : f32 to vector<2x128xf32>
    %251 = arith.addf %250, %249 : vector<2x128xf32>
    %252 = arith.divf %250, %251 : vector<2x128xf32>
    %253 = vector.extract_strided_slice %215 {offsets = [0, 128], sizes = [2, 128], strides = [1, 1]} : vector<2x384xf32> to vector<2x128xf32>
    %254 = vector.extract_strided_slice %244 {offsets = [0, 128], sizes = [2, 128], strides = [1, 1]} : vector<2x384xf32> to vector<2x128xf32>
    %255 = arith.addf %253, %254 : vector<2x128xf32>
    %256 = arith.negf %255 : vector<2x128xf32>
    %257 = math.exp %256 : vector<2x128xf32>
    %cst_57 = arith.constant 1.000000e+00 : f32
    %258 = vector.broadcast %cst_57 : f32 to vector<2x128xf32>
    %259 = arith.addf %258, %257 : vector<2x128xf32>
    %260 = arith.divf %258, %259 : vector<2x128xf32>
    %261 = vector.extract_strided_slice %215 {offsets = [0, 256], sizes = [2, 128], strides = [1, 1]} : vector<2x384xf32> to vector<2x128xf32>
    %262 = vector.extract_strided_slice %244 {offsets = [0, 256], sizes = [2, 128], strides = [1, 1]} : vector<2x384xf32> to vector<2x128xf32>
    %263 = arith.addf %262, %13 : vector<2x128xf32>
    %264 = arith.mulf %252, %263 : vector<2x128xf32>
    %265 = arith.addf %261, %264 : vector<2x128xf32>
    %266 = math.tanh %265 : vector<2x128xf32>
    %cst_58 = arith.constant 1.000000e+00 : f32
    %267 = vector.broadcast %cst_58 : f32 to vector<2x128xf32>
    %268 = arith.subf %267, %260 : vector<2x128xf32>
    %269 = arith.mulf %268, %266 : vector<2x128xf32>
    %270 = arith.mulf %260, %205 : vector<2x128xf32>
    %271 = arith.addf %269, %270 : vector<2x128xf32>
    %272 = vector.extract_strided_slice %243 {offsets = [0, 0], sizes = [2, 32], strides = [1, 1]} : vector<2x128xf32> to vector<2x32xf32>
    %c0_59 = arith.constant 0 : index
    %c3 = arith.constant 3 : index
    %c0_60 = arith.constant 0 : index
    %273 = vector.load %arg8[%c0_59, %c3, %c0_60] : memref<2x8x64xf32, #tpu.memory_space<vmem>>, vector<2x1x32xf32>
    %274 = vector.shape_cast %273 : vector<2x1x32xf32> to vector<2x32xf32>
    %275 = vector.shape_cast %272 : vector<2x32xf32> to vector<2x1x32xf32>
    tpu.vector_store %arg8[%c0_59, %c3, %c0_60], %275 {strides = array<i32>} : memref<2x8x64xf32, #tpu.memory_space<vmem>>, vector<2x1x32xf32>,
    %276 = vector.extract_strided_slice %271 {offsets = [0, 0], sizes = [2, 32], strides = [1, 1]} : vector<2x128xf32> to vector<2x32xf32>
    %c0_61 = arith.constant 0 : index
    %c4 = arith.constant 4 : index
    %c32_62 = arith.constant 32 : index
    %277 = vector.load %arg8[%c0_61, %c4, %c32_62] : memref<2x8x64xf32, #tpu.memory_space<vmem>>, vector<2x1x32xf32>
    %278 = vector.shape_cast %277 : vector<2x1x32xf32> to vector<2x32xf32>
    %279 = vector.shape_cast %276 : vector<2x32xf32> to vector<2x1x32xf32>
    tpu.vector_store %arg8[%c0_61, %c4, %c32_62], %279 {strides = array<i32>} : memref<2x8x64xf32, #tpu.memory_space<vmem>>, vector<2x1x32xf32>,
    %280 = vector.extract_strided_slice %5 {offsets = [8, 0], sizes = [2, 384], strides = [1, 1]} : vector<16x768xf32> to vector<2x384xf32>
    %281 = vector.extract_strided_slice %5 {offsets = [6, 384], sizes = [2, 384], strides = [1, 1]} : vector<16x768xf32> to vector<2x384xf32>
    %cst_63 = arith.constant dense<0.000000e+00> : vector<2x384xf32>
    %282 = tpu.matmul %243, %6, %cst_63 {dimension_numbers = #tpu.dot_dimension_numbers<[1], [0], [0], [1], [0, 0, 1, 1], [], []>} : vector<2x128xf32>, vector<128x384xf32>, vector<2x384xf32> -> vector<2x384xf32>
    %283 = vector.extract_strided_slice %280 {offsets = [0, 0], sizes = [2, 128], strides = [1, 1]} : vector<2x384xf32> to vector<2x128xf32>
    %284 = vector.extract_strided_slice %282 {offsets = [0, 0], sizes = [2, 128], strides = [1, 1]} : vector<2x384xf32> to vector<2x128xf32>
    %285 = arith.addf %283, %284 : vector<2x128xf32>
    %286 = arith.negf %285 : vector<2x128xf32>
    %287 = math.exp %286 : vector<2x128xf32>
    %cst_64 = arith.constant 1.000000e+00 : f32
    %288 = vector.broadcast %cst_64 : f32 to vector<2x128xf32>
    %289 = arith.addf %288, %287 : vector<2x128xf32>
    %290 = arith.divf %288, %289 : vector<2x128xf32>
    %291 = vector.extract_strided_slice %280 {offsets = [0, 128], sizes = [2, 128], strides = [1, 1]} : vector<2x384xf32> to vector<2x128xf32>
    %292 = vector.extract_strided_slice %282 {offsets = [0, 128], sizes = [2, 128], strides = [1, 1]} : vector<2x384xf32> to vector<2x128xf32>
    %293 = arith.addf %291, %292 : vector<2x128xf32>
    %294 = arith.negf %293 : vector<2x128xf32>
    %295 = math.exp %294 : vector<2x128xf32>
    %cst_65 = arith.constant 1.000000e+00 : f32
    %296 = vector.broadcast %cst_65 : f32 to vector<2x128xf32>
    %297 = arith.addf %296, %295 : vector<2x128xf32>
    %298 = arith.divf %296, %297 : vector<2x128xf32>
    %299 = vector.extract_strided_slice %280 {offsets = [0, 256], sizes = [2, 128], strides = [1, 1]} : vector<2x384xf32> to vector<2x128xf32>
    %300 = vector.extract_strided_slice %282 {offsets = [0, 256], sizes = [2, 128], strides = [1, 1]} : vector<2x384xf32> to vector<2x128xf32>
    %301 = arith.addf %300, %10 : vector<2x128xf32>
    %302 = arith.mulf %290, %301 : vector<2x128xf32>
    %303 = arith.addf %299, %302 : vector<2x128xf32>
    %304 = math.tanh %303 : vector<2x128xf32>
    %cst_66 = arith.constant 1.000000e+00 : f32
    %305 = vector.broadcast %cst_66 : f32 to vector<2x128xf32>
    %306 = arith.subf %305, %298 : vector<2x128xf32>
    %307 = arith.mulf %306, %304 : vector<2x128xf32>
    %308 = arith.mulf %298, %243 : vector<2x128xf32>
    %309 = arith.addf %307, %308 : vector<2x128xf32>
    %cst_67 = arith.constant dense<0.000000e+00> : vector<2x384xf32>
    %310 = tpu.matmul %271, %7, %cst_67 {dimension_numbers = #tpu.dot_dimension_numbers<[1], [0], [0], [1], [0, 0, 1, 1], [], []>} : vector<2x128xf32>, vector<128x384xf32>, vector<2x384xf32> -> vector<2x384xf32>
    %311 = vector.extract_strided_slice %281 {offsets = [0, 0], sizes = [2, 128], strides = [1, 1]} : vector<2x384xf32> to vector<2x128xf32>
    %312 = vector.extract_strided_slice %310 {offsets = [0, 0], sizes = [2, 128], strides = [1, 1]} : vector<2x384xf32> to vector<2x128xf32>
    %313 = arith.addf %311, %312 : vector<2x128xf32>
    %314 = arith.negf %313 : vector<2x128xf32>
    %315 = math.exp %314 : vector<2x128xf32>
    %cst_68 = arith.constant 1.000000e+00 : f32
    %316 = vector.broadcast %cst_68 : f32 to vector<2x128xf32>
    %317 = arith.addf %316, %315 : vector<2x128xf32>
    %318 = arith.divf %316, %317 : vector<2x128xf32>
    %319 = vector.extract_strided_slice %281 {offsets = [0, 128], sizes = [2, 128], strides = [1, 1]} : vector<2x384xf32> to vector<2x128xf32>
    %320 = vector.extract_strided_slice %310 {offsets = [0, 128], sizes = [2, 128], strides = [1, 1]} : vector<2x384xf32> to vector<2x128xf32>
    %321 = arith.addf %319, %320 : vector<2x128xf32>
    %322 = arith.negf %321 : vector<2x128xf32>
    %323 = math.exp %322 : vector<2x128xf32>
    %cst_69 = arith.constant 1.000000e+00 : f32
    %324 = vector.broadcast %cst_69 : f32 to vector<2x128xf32>
    %325 = arith.addf %324, %323 : vector<2x128xf32>
    %326 = arith.divf %324, %325 : vector<2x128xf32>
    %327 = vector.extract_strided_slice %281 {offsets = [0, 256], sizes = [2, 128], strides = [1, 1]} : vector<2x384xf32> to vector<2x128xf32>
    %328 = vector.extract_strided_slice %310 {offsets = [0, 256], sizes = [2, 128], strides = [1, 1]} : vector<2x384xf32> to vector<2x128xf32>
    %329 = arith.addf %328, %13 : vector<2x128xf32>
    %330 = arith.mulf %318, %329 : vector<2x128xf32>
    %331 = arith.addf %327, %330 : vector<2x128xf32>
    %332 = math.tanh %331 : vector<2x128xf32>
    %cst_70 = arith.constant 1.000000e+00 : f32
    %333 = vector.broadcast %cst_70 : f32 to vector<2x128xf32>
    %334 = arith.subf %333, %326 : vector<2x128xf32>
    %335 = arith.mulf %334, %332 : vector<2x128xf32>
    %336 = arith.mulf %326, %271 : vector<2x128xf32>
    %337 = arith.addf %335, %336 : vector<2x128xf32>
    %338 = vector.extract_strided_slice %309 {offsets = [0, 0], sizes = [2, 32], strides = [1, 1]} : vector<2x128xf32> to vector<2x32xf32>
    %c0_71 = arith.constant 0 : index
    %c4_72 = arith.constant 4 : index
    %c0_73 = arith.constant 0 : index
    %339 = vector.load %arg8[%c0_71, %c4_72, %c0_73] : memref<2x8x64xf32, #tpu.memory_space<vmem>>, vector<2x1x32xf32>
    %340 = vector.shape_cast %339 : vector<2x1x32xf32> to vector<2x32xf32>
    %341 = vector.shape_cast %338 : vector<2x32xf32> to vector<2x1x32xf32>
    tpu.vector_store %arg8[%c0_71, %c4_72, %c0_73], %341 {strides = array<i32>} : memref<2x8x64xf32, #tpu.memory_space<vmem>>, vector<2x1x32xf32>,
    %342 = vector.extract_strided_slice %337 {offsets = [0, 0], sizes = [2, 32], strides = [1, 1]} : vector<2x128xf32> to vector<2x32xf32>
    %c0_74 = arith.constant 0 : index
    %c3_75 = arith.constant 3 : index
    %c32_76 = arith.constant 32 : index
    %343 = vector.load %arg8[%c0_74, %c3_75, %c32_76] : memref<2x8x64xf32, #tpu.memory_space<vmem>>, vector<2x1x32xf32>
    %344 = vector.shape_cast %343 : vector<2x1x32xf32> to vector<2x32xf32>
    %345 = vector.shape_cast %342 : vector<2x32xf32> to vector<2x1x32xf32>
    tpu.vector_store %arg8[%c0_74, %c3_75, %c32_76], %345 {strides = array<i32>} : memref<2x8x64xf32, #tpu.memory_space<vmem>>, vector<2x1x32xf32>,
    %346 = vector.extract_strided_slice %5 {offsets = [10, 0], sizes = [2, 384], strides = [1, 1]} : vector<16x768xf32> to vector<2x384xf32>
    %347 = vector.extract_strided_slice %5 {offsets = [4, 384], sizes = [2, 384], strides = [1, 1]} : vector<16x768xf32> to vector<2x384xf32>
    %cst_77 = arith.constant dense<0.000000e+00> : vector<2x384xf32>
    %348 = tpu.matmul %309, %6, %cst_77 {dimension_numbers = #tpu.dot_dimension_numbers<[1], [0], [0], [1], [0, 0, 1, 1], [], []>} : vector<2x128xf32>, vector<128x384xf32>, vector<2x384xf32> -> vector<2x384xf32>
    %349 = vector.extract_strided_slice %346 {offsets = [0, 0], sizes = [2, 128], strides = [1, 1]} : vector<2x384xf32> to vector<2x128xf32>
    %350 = vector.extract_strided_slice %348 {offsets = [0, 0], sizes = [2, 128], strides = [1, 1]} : vector<2x384xf32> to vector<2x128xf32>
    %351 = arith.addf %349, %350 : vector<2x128xf32>
    %352 = arith.negf %351 : vector<2x128xf32>
    %353 = math.exp %352 : vector<2x128xf32>
    %cst_78 = arith.constant 1.000000e+00 : f32
    %354 = vector.broadcast %cst_78 : f32 to vector<2x128xf32>
    %355 = arith.addf %354, %353 : vector<2x128xf32>
    %356 = arith.divf %354, %355 : vector<2x128xf32>
    %357 = vector.extract_strided_slice %346 {offsets = [0, 128], sizes = [2, 128], strides = [1, 1]} : vector<2x384xf32> to vector<2x128xf32>
    %358 = vector.extract_strided_slice %348 {offsets = [0, 128], sizes = [2, 128], strides = [1, 1]} : vector<2x384xf32> to vector<2x128xf32>
    %359 = arith.addf %357, %358 : vector<2x128xf32>
    %360 = arith.negf %359 : vector<2x128xf32>
    %361 = math.exp %360 : vector<2x128xf32>
    %cst_79 = arith.constant 1.000000e+00 : f32
    %362 = vector.broadcast %cst_79 : f32 to vector<2x128xf32>
    %363 = arith.addf %362, %361 : vector<2x128xf32>
    %364 = arith.divf %362, %363 : vector<2x128xf32>
    %365 = vector.extract_strided_slice %346 {offsets = [0, 256], sizes = [2, 128], strides = [1, 1]} : vector<2x384xf32> to vector<2x128xf32>
    %366 = vector.extract_strided_slice %348 {offsets = [0, 256], sizes = [2, 128], strides = [1, 1]} : vector<2x384xf32> to vector<2x128xf32>
    %367 = arith.addf %366, %10 : vector<2x128xf32>
    %368 = arith.mulf %356, %367 : vector<2x128xf32>
    %369 = arith.addf %365, %368 : vector<2x128xf32>
    %370 = math.tanh %369 : vector<2x128xf32>
    %cst_80 = arith.constant 1.000000e+00 : f32
    %371 = vector.broadcast %cst_80 : f32 to vector<2x128xf32>
    %372 = arith.subf %371, %364 : vector<2x128xf32>
    %373 = arith.mulf %372, %370 : vector<2x128xf32>
    %374 = arith.mulf %364, %309 : vector<2x128xf32>
    %375 = arith.addf %373, %374 : vector<2x128xf32>
    %cst_81 = arith.constant dense<0.000000e+00> : vector<2x384xf32>
    %376 = tpu.matmul %337, %7, %cst_81 {dimension_numbers = #tpu.dot_dimension_numbers<[1], [0], [0], [1], [0, 0, 1, 1], [], []>} : vector<2x128xf32>, vector<128x384xf32>, vector<2x384xf32> -> vector<2x384xf32>
    %377 = vector.extract_strided_slice %347 {offsets = [0, 0], sizes = [2, 128], strides = [1, 1]} : vector<2x384xf32> to vector<2x128xf32>
    %378 = vector.extract_strided_slice %376 {offsets = [0, 0], sizes = [2, 128], strides = [1, 1]} : vector<2x384xf32> to vector<2x128xf32>
    %379 = arith.addf %377, %378 : vector<2x128xf32>
    %380 = arith.negf %379 : vector<2x128xf32>
    %381 = math.exp %380 : vector<2x128xf32>
    %cst_82 = arith.constant 1.000000e+00 : f32
    %382 = vector.broadcast %cst_82 : f32 to vector<2x128xf32>
    %383 = arith.addf %382, %381 : vector<2x128xf32>
    %384 = arith.divf %382, %383 : vector<2x128xf32>
    %385 = vector.extract_strided_slice %347 {offsets = [0, 128], sizes = [2, 128], strides = [1, 1]} : vector<2x384xf32> to vector<2x128xf32>
    %386 = vector.extract_strided_slice %376 {offsets = [0, 128], sizes = [2, 128], strides = [1, 1]} : vector<2x384xf32> to vector<2x128xf32>
    %387 = arith.addf %385, %386 : vector<2x128xf32>
    %388 = arith.negf %387 : vector<2x128xf32>
    %389 = math.exp %388 : vector<2x128xf32>
    %cst_83 = arith.constant 1.000000e+00 : f32
    %390 = vector.broadcast %cst_83 : f32 to vector<2x128xf32>
    %391 = arith.addf %390, %389 : vector<2x128xf32>
    %392 = arith.divf %390, %391 : vector<2x128xf32>
    %393 = vector.extract_strided_slice %347 {offsets = [0, 256], sizes = [2, 128], strides = [1, 1]} : vector<2x384xf32> to vector<2x128xf32>
    %394 = vector.extract_strided_slice %376 {offsets = [0, 256], sizes = [2, 128], strides = [1, 1]} : vector<2x384xf32> to vector<2x128xf32>
    %395 = arith.addf %394, %13 : vector<2x128xf32>
    %396 = arith.mulf %384, %395 : vector<2x128xf32>
    %397 = arith.addf %393, %396 : vector<2x128xf32>
    %398 = math.tanh %397 : vector<2x128xf32>
    %cst_84 = arith.constant 1.000000e+00 : f32
    %399 = vector.broadcast %cst_84 : f32 to vector<2x128xf32>
    %400 = arith.subf %399, %392 : vector<2x128xf32>
    %401 = arith.mulf %400, %398 : vector<2x128xf32>
    %402 = arith.mulf %392, %337 : vector<2x128xf32>
    %403 = arith.addf %401, %402 : vector<2x128xf32>
    %404 = vector.extract_strided_slice %375 {offsets = [0, 0], sizes = [2, 32], strides = [1, 1]} : vector<2x128xf32> to vector<2x32xf32>
    %c0_85 = arith.constant 0 : index
    %c5_86 = arith.constant 5 : index
    %c0_87 = arith.constant 0 : index
    %405 = vector.load %arg8[%c0_85, %c5_86, %c0_87] : memref<2x8x64xf32, #tpu.memory_space<vmem>>, vector<2x1x32xf32>
    %406 = vector.shape_cast %405 : vector<2x1x32xf32> to vector<2x32xf32>
    %407 = vector.shape_cast %404 : vector<2x32xf32> to vector<2x1x32xf32>
    tpu.vector_store %arg8[%c0_85, %c5_86, %c0_87], %407 {strides = array<i32>} : memref<2x8x64xf32, #tpu.memory_space<vmem>>, vector<2x1x32xf32>,
    %408 = vector.extract_strided_slice %403 {offsets = [0, 0], sizes = [2, 32], strides = [1, 1]} : vector<2x128xf32> to vector<2x32xf32>
    %c0_88 = arith.constant 0 : index
    %c2_89 = arith.constant 2 : index
    %c32_90 = arith.constant 32 : index
    %409 = vector.load %arg8[%c0_88, %c2_89, %c32_90] : memref<2x8x64xf32, #tpu.memory_space<vmem>>, vector<2x1x32xf32>
    %410 = vector.shape_cast %409 : vector<2x1x32xf32> to vector<2x32xf32>
    %411 = vector.shape_cast %408 : vector<2x32xf32> to vector<2x1x32xf32>
    tpu.vector_store %arg8[%c0_88, %c2_89, %c32_90], %411 {strides = array<i32>} : memref<2x8x64xf32, #tpu.memory_space<vmem>>, vector<2x1x32xf32>,
    %412 = vector.extract_strided_slice %5 {offsets = [12, 0], sizes = [2, 384], strides = [1, 1]} : vector<16x768xf32> to vector<2x384xf32>
    %413 = vector.extract_strided_slice %5 {offsets = [2, 384], sizes = [2, 384], strides = [1, 1]} : vector<16x768xf32> to vector<2x384xf32>
    %cst_91 = arith.constant dense<0.000000e+00> : vector<2x384xf32>
    %414 = tpu.matmul %375, %6, %cst_91 {dimension_numbers = #tpu.dot_dimension_numbers<[1], [0], [0], [1], [0, 0, 1, 1], [], []>} : vector<2x128xf32>, vector<128x384xf32>, vector<2x384xf32> -> vector<2x384xf32>
    %415 = vector.extract_strided_slice %412 {offsets = [0, 0], sizes = [2, 128], strides = [1, 1]} : vector<2x384xf32> to vector<2x128xf32>
    %416 = vector.extract_strided_slice %414 {offsets = [0, 0], sizes = [2, 128], strides = [1, 1]} : vector<2x384xf32> to vector<2x128xf32>
    %417 = arith.addf %415, %416 : vector<2x128xf32>
    %418 = arith.negf %417 : vector<2x128xf32>
    %419 = math.exp %418 : vector<2x128xf32>
    %cst_92 = arith.constant 1.000000e+00 : f32
    %420 = vector.broadcast %cst_92 : f32 to vector<2x128xf32>
    %421 = arith.addf %420, %419 : vector<2x128xf32>
    %422 = arith.divf %420, %421 : vector<2x128xf32>
    %423 = vector.extract_strided_slice %412 {offsets = [0, 128], sizes = [2, 128], strides = [1, 1]} : vector<2x384xf32> to vector<2x128xf32>
    %424 = vector.extract_strided_slice %414 {offsets = [0, 128], sizes = [2, 128], strides = [1, 1]} : vector<2x384xf32> to vector<2x128xf32>
    %425 = arith.addf %423, %424 : vector<2x128xf32>
    %426 = arith.negf %425 : vector<2x128xf32>
    %427 = math.exp %426 : vector<2x128xf32>
    %cst_93 = arith.constant 1.000000e+00 : f32
    %428 = vector.broadcast %cst_93 : f32 to vector<2x128xf32>
    %429 = arith.addf %428, %427 : vector<2x128xf32>
    %430 = arith.divf %428, %429 : vector<2x128xf32>
    %431 = vector.extract_strided_slice %412 {offsets = [0, 256], sizes = [2, 128], strides = [1, 1]} : vector<2x384xf32> to vector<2x128xf32>
    %432 = vector.extract_strided_slice %414 {offsets = [0, 256], sizes = [2, 128], strides = [1, 1]} : vector<2x384xf32> to vector<2x128xf32>
    %433 = arith.addf %432, %10 : vector<2x128xf32>
    %434 = arith.mulf %422, %433 : vector<2x128xf32>
    %435 = arith.addf %431, %434 : vector<2x128xf32>
    %436 = math.tanh %435 : vector<2x128xf32>
    %cst_94 = arith.constant 1.000000e+00 : f32
    %437 = vector.broadcast %cst_94 : f32 to vector<2x128xf32>
    %438 = arith.subf %437, %430 : vector<2x128xf32>
    %439 = arith.mulf %438, %436 : vector<2x128xf32>
    %440 = arith.mulf %430, %375 : vector<2x128xf32>
    %441 = arith.addf %439, %440 : vector<2x128xf32>
    %cst_95 = arith.constant dense<0.000000e+00> : vector<2x384xf32>
    %442 = tpu.matmul %403, %7, %cst_95 {dimension_numbers = #tpu.dot_dimension_numbers<[1], [0], [0], [1], [0, 0, 1, 1], [], []>} : vector<2x128xf32>, vector<128x384xf32>, vector<2x384xf32> -> vector<2x384xf32>
    %443 = vector.extract_strided_slice %413 {offsets = [0, 0], sizes = [2, 128], strides = [1, 1]} : vector<2x384xf32> to vector<2x128xf32>
    %444 = vector.extract_strided_slice %442 {offsets = [0, 0], sizes = [2, 128], strides = [1, 1]} : vector<2x384xf32> to vector<2x128xf32>
    %445 = arith.addf %443, %444 : vector<2x128xf32>
    %446 = arith.negf %445 : vector<2x128xf32>
    %447 = math.exp %446 : vector<2x128xf32>
    %cst_96 = arith.constant 1.000000e+00 : f32
    %448 = vector.broadcast %cst_96 : f32 to vector<2x128xf32>
    %449 = arith.addf %448, %447 : vector<2x128xf32>
    %450 = arith.divf %448, %449 : vector<2x128xf32>
    %451 = vector.extract_strided_slice %413 {offsets = [0, 128], sizes = [2, 128], strides = [1, 1]} : vector<2x384xf32> to vector<2x128xf32>
    %452 = vector.extract_strided_slice %442 {offsets = [0, 128], sizes = [2, 128], strides = [1, 1]} : vector<2x384xf32> to vector<2x128xf32>
    %453 = arith.addf %451, %452 : vector<2x128xf32>
    %454 = arith.negf %453 : vector<2x128xf32>
    %455 = math.exp %454 : vector<2x128xf32>
    %cst_97 = arith.constant 1.000000e+00 : f32
    %456 = vector.broadcast %cst_97 : f32 to vector<2x128xf32>
    %457 = arith.addf %456, %455 : vector<2x128xf32>
    %458 = arith.divf %456, %457 : vector<2x128xf32>
    %459 = vector.extract_strided_slice %413 {offsets = [0, 256], sizes = [2, 128], strides = [1, 1]} : vector<2x384xf32> to vector<2x128xf32>
    %460 = vector.extract_strided_slice %442 {offsets = [0, 256], sizes = [2, 128], strides = [1, 1]} : vector<2x384xf32> to vector<2x128xf32>
    %461 = arith.addf %460, %13 : vector<2x128xf32>
    %462 = arith.mulf %450, %461 : vector<2x128xf32>
    %463 = arith.addf %459, %462 : vector<2x128xf32>
    %464 = math.tanh %463 : vector<2x128xf32>
    %cst_98 = arith.constant 1.000000e+00 : f32
    %465 = vector.broadcast %cst_98 : f32 to vector<2x128xf32>
    %466 = arith.subf %465, %458 : vector<2x128xf32>
    %467 = arith.mulf %466, %464 : vector<2x128xf32>
    %468 = arith.mulf %458, %403 : vector<2x128xf32>
    %469 = arith.addf %467, %468 : vector<2x128xf32>
    %470 = vector.extract_strided_slice %441 {offsets = [0, 0], sizes = [2, 32], strides = [1, 1]} : vector<2x128xf32> to vector<2x32xf32>
    %c0_99 = arith.constant 0 : index
    %c6_100 = arith.constant 6 : index
    %c0_101 = arith.constant 0 : index
    %471 = vector.load %arg8[%c0_99, %c6_100, %c0_101] : memref<2x8x64xf32, #tpu.memory_space<vmem>>, vector<2x1x32xf32>
    %472 = vector.shape_cast %471 : vector<2x1x32xf32> to vector<2x32xf32>
    %473 = vector.shape_cast %470 : vector<2x32xf32> to vector<2x1x32xf32>
    tpu.vector_store %arg8[%c0_99, %c6_100, %c0_101], %473 {strides = array<i32>} : memref<2x8x64xf32, #tpu.memory_space<vmem>>, vector<2x1x32xf32>,
    %474 = vector.extract_strided_slice %469 {offsets = [0, 0], sizes = [2, 32], strides = [1, 1]} : vector<2x128xf32> to vector<2x32xf32>
    %c0_102 = arith.constant 0 : index
    %c1_103 = arith.constant 1 : index
    %c32_104 = arith.constant 32 : index
    %475 = vector.load %arg8[%c0_102, %c1_103, %c32_104] : memref<2x8x64xf32, #tpu.memory_space<vmem>>, vector<2x1x32xf32>
    %476 = vector.shape_cast %475 : vector<2x1x32xf32> to vector<2x32xf32>
    %477 = vector.shape_cast %474 : vector<2x32xf32> to vector<2x1x32xf32>
    tpu.vector_store %arg8[%c0_102, %c1_103, %c32_104], %477 {strides = array<i32>} : memref<2x8x64xf32, #tpu.memory_space<vmem>>, vector<2x1x32xf32>,
    %478 = vector.extract_strided_slice %5 {offsets = [14, 0], sizes = [2, 384], strides = [1, 1]} : vector<16x768xf32> to vector<2x384xf32>
    %479 = vector.extract_strided_slice %5 {offsets = [0, 384], sizes = [2, 384], strides = [1, 1]} : vector<16x768xf32> to vector<2x384xf32>
    %cst_105 = arith.constant dense<0.000000e+00> : vector<2x384xf32>
    %480 = tpu.matmul %441, %6, %cst_105 {dimension_numbers = #tpu.dot_dimension_numbers<[1], [0], [0], [1], [0, 0, 1, 1], [], []>} : vector<2x128xf32>, vector<128x384xf32>, vector<2x384xf32> -> vector<2x384xf32>
    %481 = vector.extract_strided_slice %478 {offsets = [0, 0], sizes = [2, 128], strides = [1, 1]} : vector<2x384xf32> to vector<2x128xf32>
    %482 = vector.extract_strided_slice %480 {offsets = [0, 0], sizes = [2, 128], strides = [1, 1]} : vector<2x384xf32> to vector<2x128xf32>
    %483 = arith.addf %481, %482 : vector<2x128xf32>
    %484 = arith.negf %483 : vector<2x128xf32>
    %485 = math.exp %484 : vector<2x128xf32>
    %cst_106 = arith.constant 1.000000e+00 : f32
    %486 = vector.broadcast %cst_106 : f32 to vector<2x128xf32>
    %487 = arith.addf %486, %485 : vector<2x128xf32>
    %488 = arith.divf %486, %487 : vector<2x128xf32>
    %489 = vector.extract_strided_slice %478 {offsets = [0, 128], sizes = [2, 128], strides = [1, 1]} : vector<2x384xf32> to vector<2x128xf32>
    %490 = vector.extract_strided_slice %480 {offsets = [0, 128], sizes = [2, 128], strides = [1, 1]} : vector<2x384xf32> to vector<2x128xf32>
    %491 = arith.addf %489, %490 : vector<2x128xf32>
    %492 = arith.negf %491 : vector<2x128xf32>
    %493 = math.exp %492 : vector<2x128xf32>
    %cst_107 = arith.constant 1.000000e+00 : f32
    %494 = vector.broadcast %cst_107 : f32 to vector<2x128xf32>
    %495 = arith.addf %494, %493 : vector<2x128xf32>
    %496 = arith.divf %494, %495 : vector<2x128xf32>
    %497 = vector.extract_strided_slice %478 {offsets = [0, 256], sizes = [2, 128], strides = [1, 1]} : vector<2x384xf32> to vector<2x128xf32>
    %498 = vector.extract_strided_slice %480 {offsets = [0, 256], sizes = [2, 128], strides = [1, 1]} : vector<2x384xf32> to vector<2x128xf32>
    %499 = arith.addf %498, %10 : vector<2x128xf32>
    %500 = arith.mulf %488, %499 : vector<2x128xf32>
    %501 = arith.addf %497, %500 : vector<2x128xf32>
    %502 = math.tanh %501 : vector<2x128xf32>
    %cst_108 = arith.constant 1.000000e+00 : f32
    %503 = vector.broadcast %cst_108 : f32 to vector<2x128xf32>
    %504 = arith.subf %503, %496 : vector<2x128xf32>
    %505 = arith.mulf %504, %502 : vector<2x128xf32>
    %506 = arith.mulf %496, %441 : vector<2x128xf32>
    %507 = arith.addf %505, %506 : vector<2x128xf32>
    %cst_109 = arith.constant dense<0.000000e+00> : vector<2x384xf32>
    %508 = tpu.matmul %469, %7, %cst_109 {dimension_numbers = #tpu.dot_dimension_numbers<[1], [0], [0], [1], [0, 0, 1, 1], [], []>} : vector<2x128xf32>, vector<128x384xf32>, vector<2x384xf32> -> vector<2x384xf32>
    %509 = vector.extract_strided_slice %479 {offsets = [0, 0], sizes = [2, 128], strides = [1, 1]} : vector<2x384xf32> to vector<2x128xf32>
    %510 = vector.extract_strided_slice %508 {offsets = [0, 0], sizes = [2, 128], strides = [1, 1]} : vector<2x384xf32> to vector<2x128xf32>
    %511 = arith.addf %509, %510 : vector<2x128xf32>
    %512 = arith.negf %511 : vector<2x128xf32>
    %513 = math.exp %512 : vector<2x128xf32>
    %cst_110 = arith.constant 1.000000e+00 : f32
    %514 = vector.broadcast %cst_110 : f32 to vector<2x128xf32>
    %515 = arith.addf %514, %513 : vector<2x128xf32>
    %516 = arith.divf %514, %515 : vector<2x128xf32>
    %517 = vector.extract_strided_slice %479 {offsets = [0, 128], sizes = [2, 128], strides = [1, 1]} : vector<2x384xf32> to vector<2x128xf32>
    %518 = vector.extract_strided_slice %508 {offsets = [0, 128], sizes = [2, 128], strides = [1, 1]} : vector<2x384xf32> to vector<2x128xf32>
    %519 = arith.addf %517, %518 : vector<2x128xf32>
    %520 = arith.negf %519 : vector<2x128xf32>
    %521 = math.exp %520 : vector<2x128xf32>
    %cst_111 = arith.constant 1.000000e+00 : f32
    %522 = vector.broadcast %cst_111 : f32 to vector<2x128xf32>
    %523 = arith.addf %522, %521 : vector<2x128xf32>
    %524 = arith.divf %522, %523 : vector<2x128xf32>
    %525 = vector.extract_strided_slice %479 {offsets = [0, 256], sizes = [2, 128], strides = [1, 1]} : vector<2x384xf32> to vector<2x128xf32>
    %526 = vector.extract_strided_slice %508 {offsets = [0, 256], sizes = [2, 128], strides = [1, 1]} : vector<2x384xf32> to vector<2x128xf32>
    %527 = arith.addf %526, %13 : vector<2x128xf32>
    %528 = arith.mulf %516, %527 : vector<2x128xf32>
    %529 = arith.addf %525, %528 : vector<2x128xf32>
    %530 = math.tanh %529 : vector<2x128xf32>
    %cst_112 = arith.constant 1.000000e+00 : f32
    %531 = vector.broadcast %cst_112 : f32 to vector<2x128xf32>
    %532 = arith.subf %531, %524 : vector<2x128xf32>
    %533 = arith.mulf %532, %530 : vector<2x128xf32>
    %534 = arith.mulf %524, %469 : vector<2x128xf32>
    %535 = arith.addf %533, %534 : vector<2x128xf32>
    %536 = vector.extract_strided_slice %507 {offsets = [0, 0], sizes = [2, 32], strides = [1, 1]} : vector<2x128xf32> to vector<2x32xf32>
    %c0_113 = arith.constant 0 : index
    %c7_114 = arith.constant 7 : index
    %c0_115 = arith.constant 0 : index
    %537 = vector.load %arg8[%c0_113, %c7_114, %c0_115] : memref<2x8x64xf32, #tpu.memory_space<vmem>>, vector<2x1x32xf32>
    %538 = vector.shape_cast %537 : vector<2x1x32xf32> to vector<2x32xf32>
    %539 = vector.shape_cast %536 : vector<2x32xf32> to vector<2x1x32xf32>
    tpu.vector_store %arg8[%c0_113, %c7_114, %c0_115], %539 {strides = array<i32>} : memref<2x8x64xf32, #tpu.memory_space<vmem>>, vector<2x1x32xf32>,
    %540 = vector.extract_strided_slice %535 {offsets = [0, 0], sizes = [2, 32], strides = [1, 1]} : vector<2x128xf32> to vector<2x32xf32>
    %c0_116 = arith.constant 0 : index
    %c0_117 = arith.constant 0 : index
    %c32_118 = arith.constant 32 : index
    %541 = vector.load %arg8[%c0_116, %c0_117, %c32_118] : memref<2x8x64xf32, #tpu.memory_space<vmem>>, vector<2x1x32xf32>
    %542 = vector.shape_cast %541 : vector<2x1x32xf32> to vector<2x32xf32>
    %543 = vector.shape_cast %540 : vector<2x32xf32> to vector<2x1x32xf32>
    tpu.vector_store %arg8[%c0_116, %c0_117, %c32_118], %543 {strides = array<i32>} : memref<2x8x64xf32, #tpu.memory_space<vmem>>, vector<2x1x32xf32>,
    %544 = tpu.concatenate %507, %535 in 1 : vector<2x128xf32>, vector<2x128xf32> -> vector<2x256xf32>
    %c0_119 = arith.constant 0 : index
    %c0_120 = arith.constant 0 : index
    %545 = vector.load %arg6[%c0_119, %c0_120] : memref<256x32xf32, #tpu.memory_space<vmem>>, vector<256x32xf32>
    %cst_121 = arith.constant dense<0.000000e+00> : vector<2x32xf32>
    %546 = tpu.matmul %544, %545, %cst_121 {dimension_numbers = #tpu.dot_dimension_numbers<[1], [0], [0], [1], [0, 0, 1, 1], [], []>} : vector<2x256xf32>, vector<256x32xf32>, vector<2x32xf32> -> vector<2x32xf32>
    %c0_122 = arith.constant 0 : index
    %c0_123 = arith.constant 0 : index
    %547 = vector.load %arg7[%c0_122, %c0_123] : memref<1x32xf32, #tpu.memory_space<vmem>>, vector<1x32xf32>
    %548 = vector.broadcast %547 : vector<1x32xf32> to vector<2x32xf32>
    %549 = arith.addf %546, %548 : vector<2x32xf32>
    %550 = math.tanh %549 : vector<2x32xf32>
    %c0_124 = arith.constant 0 : index
    %c0_125 = arith.constant 0 : index
    %551 = vector.load %arg9[%c0_124, %c0_125] : memref<2x32xf32, #tpu.memory_space<vmem>>, vector<2x32xf32>
    tpu.vector_store %arg9[%c0_124, %c0_125], %550 {strides = array<i32>} : memref<2x32xf32, #tpu.memory_space<vmem>>, vector<2x32xf32>,
    return
  }
}

</mosaic_0001>

<llo_original>
// kernel: tpu_custom_call.1
$region0: #{tpu_custom_call.1}
  #allocation0 [shape = 'u32[]', space=smem, size = 0x4, offset = 0x4, fixed_abs, tag = 'smem constant byte address 0x4 - core index']
  #allocation1 [shape = 'u32[72,128]{1,0:T(1,128)}', space=vmem, size = 0x9000, scoped, tag = 'internal scratch']
  %s0 = inlined_call_operand.vmem [shape: f32[16,32], index: 0, kind: input, shape index: {}]
  %s1 = inlined_call_operand.vmem [shape: f32[32,768], index: 1, kind: input, shape index: {}]
  %s2 = inlined_call_operand.vmem [shape: f32[1,768], index: 2, kind: input, shape index: {}]
  %s3 = inlined_call_operand.hbm [shape: f32[128,384], index: 3, kind: input, shape index: {}]
  %s4 = inlined_call_operand.hbm [shape: f32[128,384], index: 4, kind: input, shape index: {}]
  %s5 = inlined_call_operand.vmem [shape: f32[2,128], index: 5, kind: input, shape index: {}]
  %s6 = inlined_call_operand.vmem [shape: f32[256,32], index: 6, kind: input, shape index: {}]
  %s7 = inlined_call_operand.vmem [shape: f32[1,32], index: 7, kind: input, shape index: {}]
  %s8 = inlined_call_operand.hbm [shape: f32[2,8,64], index: 8, kind: output, shape index: {0}]
  %s9 = inlined_call_operand.hbm [shape: f32[2,32], index: 9, kind: output, shape index: {1}]
  %10 = xla_tuple %s8, %s9
  %s11 = sld [smem:[#allocation0]]
  $region58: #{tpu_custom_call.1} parent=0
    _
  %s13 = ssub.s32 1, %s11
  %s14 = scalar_select 0, %s13, %s11
  $region1: #{tpu_custom_call.1} parent=0
    #allocation2 [shape = 'u8[196608]{0}', space=vmem, size = 0x30000, scoped, tag = 'input window, operand 3, single buffered']
    #allocation3 [shape = 's32[1]{0}', space=sflag, size = 0x4, scoped, tag = 'scoped memory for tpu_custom_call.1']
    #allocation4 [shape = 's32[1]{0}', space=sflag, size = 0x4, scoped, tag = 'scoped memory for tpu_custom_call.1']
    #allocation5 [shape = 'u8[196608]{0}', space=vmem, size = 0x30000, scoped, tag = 'input window, operand 4, single buffered']
    #allocation6 [shape = 's32[1]{0}', space=sflag, size = 0x4, scoped, tag = 'scoped memory for tpu_custom_call.1']
    #allocation7 [shape = 'u8[8192]{0}', space=vmem, size = 0x2000, scoped, tag = 'output window, operand 0, single buffered']
    #allocation8 [shape = 'u8[1024]{0}', space=vmem, size = 0x400, scoped, tag = 'output window, operand 1, single buffered']
    #allocation9 [shape = 's32[1]{0}', space=sflag, size = 0x4, scoped, tag = 'scoped memory for tpu_custom_call.1']
    %15 = vsyncpa [#allocation3], 0
    %16 = vsyncpa [#allocation6], 0
    %17 = vsyncpa [#allocation4], 0
    %18 = vsyncpa [#allocation9], 0
    // Predicated region
    $region2: #{tpu_custom_call.1} parent=1 // pred_check
      _
    $region3: #{tpu_custom_call.1} parent=1 // pred_check_branch
      %20 = sbr.rel (0) target = $region5
    $region4: #{tpu_custom_call.1} parent=1 // pred_region
      _
    $region5: #{tpu_custom_call.1} parent=1 // pred_fallthru
      _
    // Predicated region
    $region6: #{tpu_custom_call.1} parent=1 // pred_check
      _
    $region7: #{tpu_custom_call.1} parent=1 // pred_check_branch
      %22 = sbr.rel (0) target = $region9
    $region8: #{tpu_custom_call.1} parent=1 // pred_region
      _
    $region9: #{tpu_custom_call.1} parent=1 // pred_fallthru
      _
    // Predicated region
    $region10: #{tpu_custom_call.1} parent=1 // pred_check
      _
    $region11: #{tpu_custom_call.1} parent=1 // pred_check_branch
      %24 = sbr.rel (0) target = $region13
    $region12: #{tpu_custom_call.1} parent=1 // pred_region
      _
    $region13: #{tpu_custom_call.1} parent=1 // pred_fallthru
      _
    // Predicated region
    $region14: #{tpu_custom_call.1} parent=1 // pred_check
      _
    $region15: #{tpu_custom_call.1} parent=1 // pred_check_branch
      %26 = sbr.rel (0) target = $region17
    $region16: #{tpu_custom_call.1} parent=1 // pred_region
      %28 = vsyncadd [#allocation3], 0
      %s29 = sshll.u32 %s3, 4
      %s30 = int_to_ptr.hbm [resolvable:$true] %s29
      %s31 = sshll.u32 [#allocation2], 4
      %s32 = int_to_ptr.vmem [resolvable:$true] %s31
      %37 = dma.hbm_to_vmem [thread:$0]  %s30, 6144, %s32, [#allocation3], 384, 384, 24
    $region17: #{tpu_custom_call.1} parent=1 // pred_fallthru
      _
    // Predicated region
    $region18: #{tpu_custom_call.1} parent=1 // pred_check
      _
    $region19: #{tpu_custom_call.1} parent=1 // pred_check_branch
      %39 = sbr.rel (0) target = $region21
    $region20: #{tpu_custom_call.1} parent=1 // pred_region
      %41 = vsyncadd [#allocation6], 0
      %s42 = sshll.u32 %s4, 4
      %s43 = int_to_ptr.hbm [resolvable:$true] %s42
      %s44 = sshll.u32 [#allocation5], 4
      %s45 = int_to_ptr.vmem [resolvable:$true] %s44
      %50 = dma.hbm_to_vmem [thread:$0]  %s43, 6144, %s45, [#allocation6], 384, 384, 24
    $region21: #{tpu_custom_call.1} parent=1 // pred_fallthru
      _
    // Predicated region
    $region22: #{tpu_custom_call.1} parent=1 // pred_check
      _
    $region23: #{tpu_custom_call.1} parent=1 // pred_check_branch
      %52 = sbr.rel (0) target = $region25
    $region24: #{tpu_custom_call.1} parent=1 // pred_region
      _
    $region25: #{tpu_custom_call.1} parent=1 // pred_fallthru
      _
    // Predicated region
    $region26: #{tpu_custom_call.1} parent=1 // pred_check
      _
    $region27: #{tpu_custom_call.1} parent=1 // pred_check_branch
      %54 = sbr.rel (0) target = $region29
    $region28: #{tpu_custom_call.1} parent=1 // pred_region
      _
    $region29: #{tpu_custom_call.1} parent=1 // pred_fallthru
      _
    // Predicated region
    $region30: #{tpu_custom_call.1} parent=1 // pred_check
      _
    $region31: #{tpu_custom_call.1} parent=1 // pred_check_branch
      %56 = sbr.rel (0) target = $region33
    $region32: #{tpu_custom_call.1} parent=1 // pred_region
      _
    $region33: #{tpu_custom_call.1} parent=1 // pred_fallthru
      _
    // Predicated region
    $region34: #{tpu_custom_call.1} parent=1 // pred_check
      _
    $region35: #{tpu_custom_call.1} parent=1 // pred_check_branch
      %58 = sbr.rel (0) target = $region37
    $region36: #{tpu_custom_call.1} parent=1 // pred_region
      %60 = dma.done [#allocation3], 6144
    $region37: #{tpu_custom_call.1} parent=1 // pred_fallthru
      _
    // Predicated region
    $region38: #{tpu_custom_call.1} parent=1 // pred_check
      _
    $region39: #{tpu_custom_call.1} parent=1 // pred_check_branch
      %62 = sbr.rel (0) target = $region41
    $region40: #{tpu_custom_call.1} parent=1 // pred_region
      %64 = dma.done [#allocation6], 6144
    $region41: #{tpu_custom_call.1} parent=1 // pred_fallthru
      _
    %v65 = vld [vmem:[%s0] sm:$0xff]
    %v66 = vld [vmem:[%s0 + $0x8] sm:$0xff]
    %v67 = vld [vmem:[%s1] sm:$0xff]
    %v68 = vld [vmem:[%s1 + $0x8] sm:$0xff]
    %v69 = vld [vmem:[%s1 + $0x10] sm:$0xff]
    %v70 = vld [vmem:[%s1 + $0x18] sm:$0xff]
    %v71 = vld [vmem:[%s1 + $0x20] sm:$0xff]
    %v72 = vld [vmem:[%s1 + $0x28] sm:$0xff]
    %v73 = vld [vmem:[%s1 + $0x30] sm:$0xff]
    %v74 = vld [vmem:[%s1 + $0x38] sm:$0xff]
    %v75 = vld [vmem:[%s1 + $0x40] sm:$0xff]
    %v76 = vld [vmem:[%s1 + $0x48] sm:$0xff]
    %v77 = vld [vmem:[%s1 + $0x50] sm:$0xff]
    %v78 = vld [vmem:[%s1 + $0x58] sm:$0xff]
    %v79 = vld [vmem:[%s1 + $0x60] sm:$0xff]
    %v80 = vld [vmem:[%s1 + $0x68] sm:$0xff]
    %v81 = vld [vmem:[%s1 + $0x70] sm:$0xff]
    %v82 = vld [vmem:[%s1 + $0x78] sm:$0xff]
    %v83 = vld [vmem:[%s1 + $0x80] sm:$0xff]
    %v84 = vld [vmem:[%s1 + $0x88] sm:$0xff]
    %v85 = vld [vmem:[%s1 + $0x90] sm:$0xff]
    %v86 = vld [vmem:[%s1 + $0x98] sm:$0xff]
    %v87 = vld [vmem:[%s1 + $0xa0] sm:$0xff]
    %v88 = vld [vmem:[%s1 + $0xa8] sm:$0xff]
    %v89 = vld [vmem:[%s1 + $0xb0] sm:$0xff]
    %v90 = vld [vmem:[%s1 + $0xb8] sm:$0xff]
    %v91 = vld [vmem:[%s2] sm:$0x3f]
    %v93 = vperm.slane %v91, 0
    %v94 = vperm.slane %v91, 1
    %v95 = vperm.slane %v91, 2
    %v96 = vperm.slane %v91, 3
    %v97 = vperm.slane %v91, 4
    %v98 = vperm.slane %v91, 5
    %vm105 = vcmask 261120
    %v107 = vsel %vm105, %v65, 0
    %v110 = vsel %vm105, %v66, 0
    %112 = vmatpush.msra.mxu0 0.0
    %113 = vmatpush.msra.mxu0 0.0
    %114 = vmatpush.msra.mxu0 0.0
    %115 = vmatpush.msra.mxu0 0.0
    %116 = vmatpush.msra.mxu0 0.0
    %117 = vmatpush.msra.mxu0 0.0
    %118 = vmatpush.msra.mxu0 0.0
    %119 = vmatpush.msra.mxu0 0.0
    %120 = vmatpush.msra.mxu0 0.0
    %121 = vmatpush.msra.mxu0 0.0
    %122 = vmatpush.msra.mxu0 0.0
    %123 = vmatpush.msra.mxu0 0.0
    %124 = vmatpush.msra.mxu0 %v85
    %125 = vmatpush.msra.mxu0 %v79
    %126 = vmatpush.msra.mxu0 %v73
    %127 = vmatpush.msra.mxu0 %v67
    %128 = vmatmul.f32.gmra.mxu0 %v107
    %v129 = vpop.f32.mrf.mxu0
    %v130 = vadd.f32 %v93, %v129
    %131 = vmatmul.f32.gmra.mxu0 %v110
    %v132 = vpop.f32.mrf.mxu0
    %v133 = vadd.f32 %v93, %v132
    %134 = vdwg.mxu0
    %135 = vmatpush.msra.mxu0 0.0
    %136 = vmatpush.msra.mxu0 0.0
    %137 = vmatpush.msra.mxu0 0.0
    %138 = vmatpush.msra.mxu0 0.0
    %139 = vmatpush.msra.mxu0 0.0
    %140 = vmatpush.msra.mxu0 0.0
    %141 = vmatpush.msra.mxu0 0.0
    %142 = vmatpush.msra.mxu0 0.0
    %143 = vmatpush.msra.mxu0 0.0
    %144 = vmatpush.msra.mxu0 0.0
    %145 = vmatpush.msra.mxu0 0.0
    %146 = vmatpush.msra.mxu0 0.0
    %147 = vmatpush.msra.mxu0 %v86
    %148 = vmatpush.msra.mxu0 %v80
    %149 = vmatpush.msra.mxu0 %v74
    %150 = vmatpush.msra.mxu0 %v68
    %151 = vmatmul.f32.gmra.mxu0 %v107
    %v152 = vpop.f32.mrf.mxu0
    %v153 = vadd.f32 %v94, %v152
    %154 = vmatmul.f32.gmra.mxu0 %v110
    %v155 = vpop.f32.mrf.mxu0
    %v156 = vadd.f32 %v94, %v155
    %157 = vdwg.mxu0
    %158 = vmatpush.msra.mxu0 0.0
    %159 = vmatpush.msra.mxu0 0.0
    %160 = vmatpush.msra.mxu0 0.0
    %161 = vmatpush.msra.mxu0 0.0
    %162 = vmatpush.msra.mxu0 0.0
    %163 = vmatpush.msra.mxu0 0.0
    %164 = vmatpush.msra.mxu0 0.0
    %165 = vmatpush.msra.mxu0 0.0
    %166 = vmatpush.msra.mxu0 0.0
    %167 = vmatpush.msra.mxu0 0.0
    %168 = vmatpush.msra.mxu0 0.0
    %169 = vmatpush.msra.mxu0 0.0
    %170 = vmatpush.msra.mxu0 %v87
    %171 = vmatpush.msra.mxu0 %v81
    %172 = vmatpush.msra.mxu0 %v75
    %173 = vmatpush.msra.mxu0 %v69
    %174 = vmatmul.f32.gmra.mxu0 %v107
    %v175 = vpop.f32.mrf.mxu0
    %v176 = vadd.f32 %v95, %v175
    %177 = vmatmul.f32.gmra.mxu0 %v110
    %v178 = vpop.f32.mrf.mxu0
    %v179 = vadd.f32 %v95, %v178
    %180 = vdwg.mxu0
    %181 = vmatpush.msra.mxu0 0.0
    %182 = vmatpush.msra.mxu0 0.0
    %183 = vmatpush.msra.mxu0 0.0
    %184 = vmatpush.msra.mxu0 0.0
    %185 = vmatpush.msra.mxu0 0.0
    %186 = vmatpush.msra.mxu0 0.0
    %187 = vmatpush.msra.mxu0 0.0
    %188 = vmatpush.msra.mxu0 0.0
    %189 = vmatpush.msra.mxu0 0.0
    %190 = vmatpush.msra.mxu0 0.0
    %191 = vmatpush.msra.mxu0 0.0
    %192 = vmatpush.msra.mxu0 0.0
    %193 = vmatpush.msra.mxu0 %v88
    %194 = vmatpush.msra.mxu0 %v82
    %195 = vmatpush.msra.mxu0 %v76
    %196 = vmatpush.msra.mxu0 %v70
    %197 = vmatmul.f32.gmra.mxu0 %v107
    %v198 = vpop.f32.mrf.mxu0
    %v199 = vadd.f32 %v96, %v198
    %200 = vmatmul.f32.gmra.mxu0 %v110
    %v201 = vpop.f32.mrf.mxu0
    %v202 = vadd.f32 %v96, %v201
    %203 = vdwg.mxu0
    %204 = vmatpush.msra.mxu0 0.0
    %205 = vmatpush.msra.mxu0 0.0
    %206 = vmatpush.msra.mxu0 0.0
    %207 = vmatpush.msra.mxu0 0.0
    %208 = vmatpush.msra.mxu0 0.0
    %209 = vmatpush.msra.mxu0 0.0
    %210 = vmatpush.msra.mxu0 0.0
    %211 = vmatpush.msra.mxu0 0.0
    %212 = vmatpush.msra.mxu0 0.0
    %213 = vmatpush.msra.mxu0 0.0
    %214 = vmatpush.msra.mxu0 0.0
    %215 = vmatpush.msra.mxu0 0.0
    %216 = vmatpush.msra.mxu0 %v89
    %217 = vmatpush.msra.mxu0 %v83
    %218 = vmatpush.msra.mxu0 %v77
    %219 = vmatpush.msra.mxu0 %v71
    %220 = vmatmul.f32.gmra.mxu0 %v107
    %v221 = vpop.f32.mrf.mxu0
    %v222 = vadd.f32 %v97, %v221
    %223 = vmatmul.f32.gmra.mxu0 %v110
    %v224 = vpop.f32.mrf.mxu0
    %v225 = vadd.f32 %v97, %v224
    %226 = vdwg.mxu0
    %227 = vmatpush.msra.mxu0 0.0
    %228 = vmatpush.msra.mxu0 0.0
    %229 = vmatpush.msra.mxu0 0.0
    %230 = vmatpush.msra.mxu0 0.0
    %231 = vmatpush.msra.mxu0 0.0
    %232 = vmatpush.msra.mxu0 0.0
    %233 = vmatpush.msra.mxu0 0.0
    %234 = vmatpush.msra.mxu0 0.0
    %235 = vmatpush.msra.mxu0 0.0
    %236 = vmatpush.msra.mxu0 0.0
    %237 = vmatpush.msra.mxu0 0.0
    %238 = vmatpush.msra.mxu0 0.0
    %239 = vmatpush.msra.mxu0 %v90
    %240 = vmatpush.msra.mxu0 %v84
    %241 = vmatpush.msra.mxu0 %v78
    %242 = vmatpush.msra.mxu0 %v72
    %243 = vmatmul.f32.gmra.mxu0 %v107
    %v244 = vpop.f32.mrf.mxu0
    %v245 = vadd.f32 %v98, %v244
    %246 = vmatmul.f32.gmra.mxu0 %v110
    %v247 = vpop.f32.mrf.mxu0
    %v248 = vadd.f32 %v98, %v247
    %249 = vdwg.mxu0
    %v250 = vld [vmem:[#allocation2] sm:$0xff]
    %v251 = vld [vmem:[#allocation2 + $0x8] sm:$0xff]
    %v252 = vld [vmem:[#allocation2 + $0x10] sm:$0xff]
    %v253 = vld [vmem:[#allocation2 + $0x18] sm:$0xff]
    %v254 = vld [vmem:[#allocation2 + $0x20] sm:$0xff]
    %v255 = vld [vmem:[#allocation2 + $0x28] sm:$0xff]
    %v256 = vld [vmem:[#allocation2 + $0x30] sm:$0xff]
    %v257 = vld [vmem:[#allocation2 + $0x38] sm:$0xff]
    %v258 = vld [vmem:[#allocation2 + $0x40] sm:$0xff]
    %v259 = vld [vmem:[#allocation2 + $0x48] sm:$0xff]
    %v260 = vld [vmem:[#allocation2 + $0x50] sm:$0xff]
    %v261 = vld [vmem:[#allocation2 + $0x58] sm:$0xff]
    %v262 = vld [vmem:[#allocation2 + $0x60] sm:$0xff]
    %v263 = vld [vmem:[#allocation2 + $0x68] sm:$0xff]
    %v264 = vld [vmem:[#allocation2 + $0x70] sm:$0xff]
    %v265 = vld [vmem:[#allocation2 + $0x78] sm:$0xff]
    %v266 = vld [vmem:[#allocation2 + $0x80] sm:$0xff]
    %v267 = vld [vmem:[#allocation2 + $0x88] sm:$0xff]
    %v268 = vld [vmem:[#allocation2 + $0x90] sm:$0xff]
    %v269 = vld [vmem:[#allocation2 + $0x98] sm:$0xff]
    %v270 = vld [vmem:[#allocation2 + $0xa0] sm:$0xff]
    %v271 = vld [vmem:[#allocation2 + $0xa8] sm:$0xff]
    %v272 = vld [vmem:[#allocation2 + $0xb0] sm:$0xff]
    %v273 = vld [vmem:[#allocation2 + $0xb8] sm:$0xff]
    %v274 = vld [vmem:[#allocation2 + $0xc0] sm:$0xff]
    %v275 = vld [vmem:[#allocation2 + $0xc8] sm:$0xff]
    %v276 = vld [vmem:[#allocation2 + $0xd0] sm:$0xff]
    %v277 = vld [vmem:[#allocation2 + $0xd8] sm:$0xff]
    %v278 = vld [vmem:[#allocation2 + $0xe0] sm:$0xff]
    %v279 = vld [vmem:[#allocation2 + $0xe8] sm:$0xff]
    %v280 = vld [vmem:[#allocation2 + $0xf0] sm:$0xff]
    %v281 = vld [vmem:[#allocation2 + $0xf8] sm:$0xff]
    %v282 = vld [vmem:[#allocation2 + $0x100] sm:$0xff]
    %v283 = vld [vmem:[#allocation2 + $0x108] sm:$0xff]
    %v284 = vld [vmem:[#allocation2 + $0x110] sm:$0xff]
    %v285 = vld [vmem:[#allocation2 + $0x118] sm:$0xff]
    %v286 = vld [vmem:[#allocation2 + $0x120] sm:$0xff]
    %v287 = vld [vmem:[#allocation2 + $0x128] sm:$0xff]
    %v288 = vld [vmem:[#allocation2 + $0x130] sm:$0xff]
    %v289 = vld [vmem:[#allocation2 + $0x138] sm:$0xff]
    %v290 = vld [vmem:[#allocation2 + $0x140] sm:$0xff]
    %v291 = vld [vmem:[#allocation2 + $0x148] sm:$0xff]
    %v292 = vld [vmem:[#allocation2 + $0x150] sm:$0xff]
    %v293 = vld [vmem:[#allocation2 + $0x158] sm:$0xff]
    %v294 = vld [vmem:[#allocation2 + $0x160] sm:$0xff]
    %v295 = vld [vmem:[#allocation2 + $0x168] sm:$0xff]
    %v296 = vld [vmem:[#allocation2 + $0x170] sm:$0xff]
    %v297 = vld [vmem:[#allocation2 + $0x178] sm:$0xff]
    %v298 = vld [vmem:[#allocation5] sm:$0xff]
    %v299 = vld [vmem:[#allocation5 + $0x8] sm:$0xff]
    %v300 = vld [vmem:[#allocation5 + $0x10] sm:$0xff]
    %v301 = vld [vmem:[#allocation5 + $0x18] sm:$0xff]
    %v302 = vld [vmem:[#allocation5 + $0x20] sm:$0xff]
    %v303 = vld [vmem:[#allocation5 + $0x28] sm:$0xff]
    %v304 = vld [vmem:[#allocation5 + $0x30] sm:$0xff]
    %v305 = vld [vmem:[#allocation5 + $0x38] sm:$0xff]
    %v306 = vld [vmem:[#allocation5 + $0x40] sm:$0xff]
    %v307 = vld [vmem:[#allocation5 + $0x48] sm:$0xff]
    %v308 = vld [vmem:[#allocation5 + $0x50] sm:$0xff]
    %v309 = vld [vmem:[#allocation5 + $0x58] sm:$0xff]
    %v310 = vld [vmem:[#allocation5 + $0x60] sm:$0xff]
    %v311 = vld [vmem:[#allocation5 + $0x68] sm:$0xff]
    %v312 = vld [vmem:[#allocation5 + $0x70] sm:$0xff]
    %v313 = vld [vmem:[#allocation5 + $0x78] sm:$0xff]
    %v314 = vld [vmem:[#allocation5 + $0x80] sm:$0xff]
    %v315 = vld [vmem:[#allocation5 + $0x88] sm:$0xff]
    %v316 = vld [vmem:[#allocation5 + $0x90] sm:$0xff]
    %v317 = vld [vmem:[#allocation5 + $0x98] sm:$0xff]
    %v318 = vld [vmem:[#allocation5 + $0xa0] sm:$0xff]
    %v319 = vld [vmem:[#allocation5 + $0xa8] sm:$0xff]
    %v320 = vld [vmem:[#allocation5 + $0xb0] sm:$0xff]
    %v321 = vld [vmem:[#allocation5 + $0xb8] sm:$0xff]
    %v322 = vld [vmem:[#allocation5 + $0xc0] sm:$0xff]
    %v323 = vld [vmem:[#allocation5 + $0xc8] sm:$0xff]
    %v324 = vld [vmem:[#allocation5 + $0xd0] sm:$0xff]
    %v325 = vld [vmem:[#allocation5 + $0xd8] sm:$0xff]
    %v326 = vld [vmem:[#allocation5 + $0xe0] sm:$0xff]
    %v327 = vld [vmem:[#allocation5 + $0xe8] sm:$0xff]
    %v328 = vld [vmem:[#allocation5 + $0xf0] sm:$0xff]
    %v329 = vld [vmem:[#allocation5 + $0xf8] sm:$0xff]
    %v330 = vld [vmem:[#allocation5 + $0x100] sm:$0xff]
    %v331 = vld [vmem:[#allocation5 + $0x108] sm:$0xff]
    %v332 = vld [vmem:[#allocation5 + $0x110] sm:$0xff]
    %v333 = vld [vmem:[#allocation5 + $0x118] sm:$0xff]
    %v334 = vld [vmem:[#allocation5 + $0x120] sm:$0xff]
    %v335 = vld [vmem:[#allocation5 + $0x128] sm:$0xff]
    %v336 = vld [vmem:[#allocation5 + $0x130] sm:$0xff]
    %v337 = vld [vmem:[#allocation5 + $0x138] sm:$0xff]
    %v338 = vld [vmem:[#allocation5 + $0x140] sm:$0xff]
    %v339 = vld [vmem:[#allocation5 + $0x148] sm:$0xff]
    %v340 = vld [vmem:[#allocation5 + $0x150] sm:$0xff]
    %v341 = vld [vmem:[#allocation5 + $0x158] sm:$0xff]
    %v342 = vld [vmem:[#allocation5 + $0x160] sm:$0xff]
    %v343 = vld [vmem:[#allocation5 + $0x168] sm:$0xff]
    %v344 = vld [vmem:[#allocation5 + $0x170] sm:$0xff]
    %v345 = vld [vmem:[#allocation5 + $0x178] sm:$0xff]
    %v346 = vld [vmem:[%s5] sm:$0x1]
    %v347 = vperm.slane %v346, 0
    %v348 = vld [vmem:[%s5 + $0x1] sm:$0x1]
    %v349 = vperm.slane %v348, 0
    %350 = vmatpush.msra.mxu0 %v295
    %351 = vmatpush.msra.mxu0 %v292
    %352 = vmatpush.msra.mxu0 %v289
    %353 = vmatpush.msra.mxu0 %v286
    %354 = vmatpush.msra.mxu0 %v283
    %355 = vmatpush.msra.mxu0 %v280
    %356 = vmatpush.msra.mxu0 %v277
    %357 = vmatpush.msra.mxu0 %v274
    %358 = vmatpush.msra.mxu0 %v271
    %359 = vmatpush.msra.mxu0 %v268
    %360 = vmatpush.msra.mxu0 %v265
    %361 = vmatpush.msra.mxu0 %v262
    %362 = vmatpush.msra.mxu0 %v259
    %363 = vmatpush.msra.mxu0 %v256
    %364 = vmatpush.msra.mxu0 %v253
    %365 = vmatpush.msra.mxu0 %v250
    %366 = vmatmul.f32.gmra.mxu0 0.0
    %v367 = vpop.f32.mrf.mxu0
    %v368 = vadd.f32 0.0, %v367
    %369 = vdwg.mxu0
    %370 = vmatpush.msra.mxu0 %v296
    %371 = vmatpush.msra.mxu0 %v293
    %372 = vmatpush.msra.mxu0 %v290
    %373 = vmatpush.msra.mxu0 %v287
    %374 = vmatpush.msra.mxu0 %v284
    %375 = vmatpush.msra.mxu0 %v281
    %376 = vmatpush.msra.mxu0 %v278
    %377 = vmatpush.msra.mxu0 %v275
    %378 = vmatpush.msra.mxu0 %v272
    %379 = vmatpush.msra.mxu0 %v269
    %380 = vmatpush.msra.mxu0 %v266
    %381 = vmatpush.msra.mxu0 %v263
    %382 = vmatpush.msra.mxu0 %v260
    %383 = vmatpush.msra.mxu0 %v257
    %384 = vmatpush.msra.mxu0 %v254
    %385 = vmatpush.msra.mxu0 %v251
    %386 = vmatmul.f32.gmra.mxu0 0.0
    %v387 = vpop.f32.mrf.mxu0
    %v388 = vadd.f32 0.0, %v387
    %389 = vdwg.mxu0
    %390 = vmatpush.msra.mxu0 %v297
    %391 = vmatpush.msra.mxu0 %v294
    %392 = vmatpush.msra.mxu0 %v291
    %393 = vmatpush.msra.mxu0 %v288
    %394 = vmatpush.msra.mxu0 %v285
    %395 = vmatpush.msra.mxu0 %v282
    %396 = vmatpush.msra.mxu0 %v279
    %397 = vmatpush.msra.mxu0 %v276
    %398 = vmatpush.msra.mxu0 %v273
    %399 = vmatpush.msra.mxu0 %v270
    %400 = vmatpush.msra.mxu0 %v267
    %401 = vmatpush.msra.mxu0 %v264
    %402 = vmatpush.msra.mxu0 %v261
    %403 = vmatpush.msra.mxu0 %v258
    %404 = vmatpush.msra.mxu0 %v255
    %405 = vmatpush.msra.mxu0 %v252
    %406 = vmatmul.f32.gmra.mxu0 0.0
    %v407 = vpop.f32.mrf.mxu0
    %v408 = vadd.f32 0.0, %v407
    %409 = vdwg.mxu0
    %v410 = vadd.f32 %v130, %v368
    %v411 = vxor.u32 %v410, 2147483648
    %v412 = vmul.f32 %v411, 1.442695
    %v413 = vpow.pop %v412
    %v414 = vadd.f32 %v413, 1.0
    %v415 = vrcp.pop %v414
    %v416 = vmul.f32 %v414, %v415
    %v417 = vsub.f32 1.0, %v416
    %v418 = vmul.f32 %v415, %v417
    %v419 = vadd.f32 %v415, %v418
    %vm420 = vweird.f32 %v414
    %vm421 = vweird.f32 %v415
    %vm422 = vmor %vm420, %vm421
    %v423 = vsel %vm422, %v415, %v419
    %v424 = vand.u32 2147483647, %v414
    %vm425 = vcmp.eq.f32.partialorder %v424, 8.507059e+37
    %v426 = vand.u32 %v414, 2147483648
    %v427 = vor.u32 1.1754944e-38, %v426
    %v428 = vsel %vm425, %v427, %v423
    %v429 = vmul.f32 1.0, %v428
    %v430 = vadd.f32 %v153, %v388
    %v431 = vxor.u32 %v430, 2147483648
    %v432 = vmul.f32 %v431, 1.442695
    %v433 = vpow.pop %v432
    %v434 = vadd.f32 %v433, 1.0
    %v435 = vrcp.pop %v434
    %v436 = vmul.f32 %v434, %v435
    %v437 = vsub.f32 1.0, %v436
    %v438 = vmul.f32 %v435, %v437
    %v439 = vadd.f32 %v435, %v438
    %vm440 = vweird.f32 %v434
    %vm441 = vweird.f32 %v435
    %vm442 = vmor %vm440, %vm441
    %v443 = vsel %vm442, %v435, %v439
    %v444 = vand.u32 2147483647, %v434
    %vm445 = vcmp.eq.f32.partialorder %v444, 8.507059e+37
    %v446 = vand.u32 %v434, 2147483648
    %v447 = vor.u32 1.1754944e-38, %v446
    %v448 = vsel %vm445, %v447, %v443
    %v449 = vmul.f32 1.0, %v448
    %v450 = vadd.f32 %v408, %v347
    %v451 = vmul.f32 %v429, %v450
    %v452 = vadd.f32 %v176, %v451
    %v453 = vtanh.pop %v452
    %v454 = vsub.f32 1.0, %v449
    %v455 = vmul.f32 %v454, %v453
    %v456 = vmul.f32 %v449, 0.0
    %v457 = vadd.f32 %v455, %v456
    %458 = vmatpush.msra.mxu0 %v343
    %459 = vmatpush.msra.mxu0 %v340
    %460 = vmatpush.msra.mxu0 %v337
    %461 = vmatpush.msra.mxu0 %v334
    %462 = vmatpush.msra.mxu0 %v331
    %463 = vmatpush.msra.mxu0 %v328
    %464 = vmatpush.msra.mxu0 %v325
    %465 = vmatpush.msra.mxu0 %v322
    %466 = vmatpush.msra.mxu0 %v319
    %467 = vmatpush.msra.mxu0 %v316
    %468 = vmatpush.msra.mxu0 %v313
    %469 = vmatpush.msra.mxu0 %v310
    %470 = vmatpush.msra.mxu0 %v307
    %471 = vmatpush.msra.mxu0 %v304
    %472 = vmatpush.msra.mxu0 %v301
    %473 = vmatpush.msra.mxu0 %v298
    %474 = vmatmul.f32.gmra.mxu0 0.0
    %v475 = vpop.f32.mrf.mxu0
    %v476 = vadd.f32 0.0, %v475
    %477 = vdwg.mxu0
    %478 = vmatpush.msra.mxu0 %v344
    %479 = vmatpush.msra.mxu0 %v341
    %480 = vmatpush.msra.mxu0 %v338
    %481 = vmatpush.msra.mxu0 %v335
    %482 = vmatpush.msra.mxu0 %v332
    %483 = vmatpush.msra.mxu0 %v329
    %484 = vmatpush.msra.mxu0 %v326
    %485 = vmatpush.msra.mxu0 %v323
    %486 = vmatpush.msra.mxu0 %v320
    %487 = vmatpush.msra.mxu0 %v317
    %488 = vmatpush.msra.mxu0 %v314
    %489 = vmatpush.msra.mxu0 %v311
    %490 = vmatpush.msra.mxu0 %v308
    %491 = vmatpush.msra.mxu0 %v305
    %492 = vmatpush.msra.mxu0 %v302
    %493 = vmatpush.msra.mxu0 %v299
    %494 = vmatmul.f32.gmra.mxu0 0.0
    %v495 = vpop.f32.mrf.mxu0
    %v496 = vadd.f32 0.0, %v495
    %497 = vdwg.mxu0
    %498 = vmatpush.msra.mxu0 %v345
    %499 = vmatpush.msra.mxu0 %v342
    %500 = vmatpush.msra.mxu0 %v339
    %501 = vmatpush.msra.mxu0 %v336
    %502 = vmatpush.msra.mxu0 %v333
    %503 = vmatpush.msra.mxu0 %v330
    %504 = vmatpush.msra.mxu0 %v327
    %505 = vmatpush.msra.mxu0 %v324
    %506 = vmatpush.msra.mxu0 %v321
    %507 = vmatpush.msra.mxu0 %v318
    %508 = vmatpush.msra.mxu0 %v315
    %509 = vmatpush.msra.mxu0 %v312
    %510 = vmatpush.msra.mxu0 %v309
    %511 = vmatpush.msra.mxu0 %v306
    %512 = vmatpush.msra.mxu0 %v303
    %513 = vmatpush.msra.mxu0 %v300
    %514 = vmatmul.f32.gmra.mxu0 0.0
    %v515 = vpop.f32.mrf.mxu0
    %v516 = vadd.f32 0.0, %v515
    %517 = vdwg.mxu0
    %v519 = vrot.slane %v476, 2
    %v521 = vadd.f32 %v202, %v519
    %v522 = vxor.u32 %v521, 2147483648
    %v523 = vmul.f32 %v522, 1.442695
    %v524 = vpow.pop %v523
    %v525 = vadd.f32 %v524, 1.0
    %v526 = vrcp.pop %v525
    %v527 = vmul.f32 %v525, %v526
    %v528 = vsub.f32 1.0, %v527
    %v529 = vmul.f32 %v526, %v528
    %v530 = vadd.f32 %v526, %v529
    %vm531 = vweird.f32 %v525
    %vm532 = vweird.f32 %v526
    %vm533 = vmor %vm531, %vm532
    %v534 = vsel %vm533, %v526, %v530
    %v535 = vand.u32 2147483647, %v525
    %vm536 = vcmp.eq.f32.partialorder %v535, 8.507059e+37
    %v537 = vand.u32 %v525, 2147483648
    %v538 = vor.u32 1.1754944e-38, %v537
    %v539 = vsel %vm536, %v538, %v534
    %v540 = vmul.f32 1.0, %v539
    %v542 = vrot.slane %v496, 2
    %v544 = vadd.f32 %v225, %v542
    %v545 = vxor.u32 %v544, 2147483648
    %v546 = vmul.f32 %v545, 1.442695
    %v547 = vpow.pop %v546
    %v548 = vadd.f32 %v547, 1.0
    %v549 = vrcp.pop %v548
    %v550 = vmul.f32 %v548, %v549
    %v551 = vsub.f32 1.0, %v550
    %v552 = vmul.f32 %v549, %v551
    %v553 = vadd.f32 %v549, %v552
    %vm554 = vweird.f32 %v548
    %vm555 = vweird.f32 %v549
    %vm556 = vmor %vm554, %vm555
    %v557 = vsel %vm556, %v549, %v553
    %v558 = vand.u32 2147483647, %v548
    %vm559 = vcmp.eq.f32.partialorder %v558, 8.507059e+37
    %v560 = vand.u32 %v548, 2147483648
    %v561 = vor.u32 1.1754944e-38, %v560
    %v562 = vsel %vm559, %v561, %v557
    %v563 = vmul.f32 1.0, %v562
    %v564 = vadd.f32 %v516, %v349
    %v566 = vrot.slane %v564, 2
    %v568 = vmul.f32 %v540, %v566
    %v569 = vadd.f32 %v248, %v568
    %v570 = vtanh.pop %v569
    %v571 = vsub.f32 1.0, %v563
    %v572 = vmul.f32 %v571, %v570
    %v573 = vmul.f32 %v563, 0.0
    %v574 = vadd.f32 %v572, %v573
    %v576 = vrot.slane %v457, 1
    %vm578 = vcmask 253952
    %579 = vst.msk [vmem:[#allocation7] sm:$0x1] %vm578, %v457
    %580 = vst.msk [vmem:[#allocation7 + $0x8] sm:$0x1] %vm578, %v576
    %582 = vst [vmem:[#allocation1] sm:$0xff] %v574
    %s583 = scalar_lea.vmem [#allocation1], 6
    %v584 = vld [vmem:[%s583] ss:$9 sm:$0xff]
    %s585 = scalar_lea.vmem [#allocation1], 7
    %v586 = vld [vmem:[%s585] ss:$9 sm:$0xff]
    %v587 = vperm.slane %v584, 0
    %v588 = vperm.slane %v586, 0
    %589 = vrot.lane.b32.xlu0 %v587, 32
    %v590 = vpop.permute.xlu0 %589
    %591 = vrot.lane.b32.xlu0 %v588, 32
    %v592 = vpop.permute.xlu0 %591
    %vm595 = vcmask 516352
    %596 = vst.msk [vmem:[#allocation7 + $0x7] sm:$0x1] %vm595, %v590
    %597 = vst.msk [vmem:[#allocation7 + $0xf] sm:$0x1] %vm595, %v592
    %598 = vmatpush.msra.mxu0 %v295
    %599 = vmatpush.msra.mxu0 %v292
    %600 = vmatpush.msra.mxu0 %v289
    %601 = vmatpush.msra.mxu0 %v286
    %602 = vmatpush.msra.mxu0 %v283
    %603 = vmatpush.msra.mxu0 %v280
    %604 = vmatpush.msra.mxu0 %v277
    %605 = vmatpush.msra.mxu0 %v274
    %606 = vmatpush.msra.mxu0 %v271
    %607 = vmatpush.msra.mxu0 %v268
    %608 = vmatpush.msra.mxu0 %v265
    %609 = vmatpush.msra.mxu0 %v262
    %610 = vmatpush.msra.mxu0 %v259
    %611 = vmatpush.msra.mxu0 %v256
    %612 = vmatpush.msra.mxu0 %v253
    %613 = vmatpush.msra.mxu0 %v250
    %614 = vmatmul.f32.gmra.mxu0 %v457
    %v615 = vpop.f32.mrf.mxu0
    %v616 = vadd.f32 0.0, %v615
    %617 = vdwg.mxu0
    %618 = vmatpush.msra.mxu0 %v296
    %619 = vmatpush.msra.mxu0 %v293
    %620 = vmatpush.msra.mxu0 %v290
    %621 = vmatpush.msra.mxu0 %v287
    %622 = vmatpush.msra.mxu0 %v284
    %623 = vmatpush.msra.mxu0 %v281
    %624 = vmatpush.msra.mxu0 %v278
    %625 = vmatpush.msra.mxu0 %v275
    %626 = vmatpush.msra.mxu0 %v272
    %627 = vmatpush.msra.mxu0 %v269
    %628 = vmatpush.msra.mxu0 %v266
    %629 = vmatpush.msra.mxu0 %v263
    %630 = vmatpush.msra.mxu0 %v260
    %631 = vmatpush.msra.mxu0 %v257
    %632 = vmatpush.msra.mxu0 %v254
    %633 = vmatpush.msra.mxu0 %v251
    %634 = vmatmul.f32.gmra.mxu0 %v457
    %v635 = vpop.f32.mrf.mxu0
    %v636 = vadd.f32 0.0, %v635
    %637 = vdwg.mxu0
    %638 = vmatpush.msra.mxu0 %v297
    %639 = vmatpush.msra.mxu0 %v294
    %640 = vmatpush.msra.mxu0 %v291
    %641 = vmatpush.msra.mxu0 %v288
    %642 = vmatpush.msra.mxu0 %v285
    %643 = vmatpush.msra.mxu0 %v282
    %644 = vmatpush.msra.mxu0 %v279
    %645 = vmatpush.msra.mxu0 %v276
    %646 = vmatpush.msra.mxu0 %v273
    %647 = vmatpush.msra.mxu0 %v270
    %648 = vmatpush.msra.mxu0 %v267
    %649 = vmatpush.msra.mxu0 %v264
    %650 = vmatpush.msra.mxu0 %v261
    %651 = vmatpush.msra.mxu0 %v258
    %652 = vmatpush.msra.mxu0 %v255
    %653 = vmatpush.msra.mxu0 %v252
    %654 = vmatmul.f32.gmra.mxu0 %v457
    %v655 = vpop.f32.mrf.mxu0
    %v656 = vadd.f32 0.0, %v655
    %657 = vdwg.mxu0
    %v659 = vrot.slane %v616, 6
    %v661 = vadd.f32 %v130, %v659
    %v662 = vxor.u32 %v661, 2147483648
    %v663 = vmul.f32 %v662, 1.442695
    %v664 = vpow.pop %v663
    %v665 = vadd.f32 %v664, 1.0
    %v666 = vrcp.pop %v665
    %v667 = vmul.f32 %v665, %v666
    %v668 = vsub.f32 1.0, %v667
    %v669 = vmul.f32 %v666, %v668
    %v670 = vadd.f32 %v666, %v669
    %vm671 = vweird.f32 %v665
    %vm672 = vweird.f32 %v666
    %vm673 = vmor %vm671, %vm672
    %v674 = vsel %vm673, %v666, %v670
    %v675 = vand.u32 2147483647, %v665
    %vm676 = vcmp.eq.f32.partialorder %v675, 8.507059e+37
    %v677 = vand.u32 %v665, 2147483648
    %v678 = vor.u32 1.1754944e-38, %v677
    %v679 = vsel %vm676, %v678, %v674
    %v680 = vmul.f32 1.0, %v679
    %v682 = vrot.slane %v636, 6
    %v684 = vadd.f32 %v153, %v682
    %v685 = vxor.u32 %v684, 2147483648
    %v686 = vmul.f32 %v685, 1.442695
    %v687 = vpow.pop %v686
    %v688 = vadd.f32 %v687, 1.0
    %v689 = vrcp.pop %v688
    %v690 = vmul.f32 %v688, %v689
    %v691 = vsub.f32 1.0, %v690
    %v692 = vmul.f32 %v689, %v691
    %v693 = vadd.f32 %v689, %v692
    %vm694 = vweird.f32 %v688
    %vm695 = vweird.f32 %v689
    %vm696 = vmor %vm694, %vm695
    %v697 = vsel %vm696, %v689, %v693
    %v698 = vand.u32 2147483647, %v688
    %vm699 = vcmp.eq.f32.partialorder %v698, 8.507059e+37
    %v700 = vand.u32 %v688, 2147483648
    %v701 = vor.u32 1.1754944e-38, %v700
    %v702 = vsel %vm699, %v701, %v697
    %v703 = vmul.f32 1.0, %v702
    %v704 = vadd.f32 %v656, %v347
    %v706 = vrot.slane %v704, 6
    %v708 = vmul.f32 %v680, %v706
    %v709 = vadd.f32 %v176, %v708
    %v710 = vtanh.pop %v709
    %v711 = vsub.f32 1.0, %v703
    %v712 = vmul.f32 %v711, %v710
    %v713 = vrot.slane %v457, 6
    %v715 = vmul.f32 %v703, %v713
    %v716 = vadd.f32 %v712, %v715
    %v717 = vrot.slane %v574, 6
    %719 = vmatpush.msra.mxu0 %v343
    %720 = vmatpush.msra.mxu0 %v340
    %721 = vmatpush.msra.mxu0 %v337
    %722 = vmatpush.msra.mxu0 %v334
    %723 = vmatpush.msra.mxu0 %v331
    %724 = vmatpush.msra.mxu0 %v328
    %725 = vmatpush.msra.mxu0 %v325
    %726 = vmatpush.msra.mxu0 %v322
    %727 = vmatpush.msra.mxu0 %v319
    %728 = vmatpush.msra.mxu0 %v316
    %729 = vmatpush.msra.mxu0 %v313
    %730 = vmatpush.msra.mxu0 %v310
    %731 = vmatpush.msra.mxu0 %v307
    %732 = vmatpush.msra.mxu0 %v304
    %733 = vmatpush.msra.mxu0 %v301
    %734 = vmatpush.msra.mxu0 %v298
    %735 = vmatmul.f32.gmra.mxu0 %v717
    %v736 = vpop.f32.mrf.mxu0
    %v737 = vadd.f32 0.0, %v736
    %738 = vdwg.mxu0
    %739 = vmatpush.msra.mxu0 %v344
    %740 = vmatpush.msra.mxu0 %v341
    %741 = vmatpush.msra.mxu0 %v338
    %742 = vmatpush.msra.mxu0 %v335
    %743 = vmatpush.msra.mxu0 %v332
    %744 = vmatpush.msra.mxu0 %v329
    %745 = vmatpush.msra.mxu0 %v326
    %746 = vmatpush.msra.mxu0 %v323
    %747 = vmatpush.msra.mxu0 %v320
    %748 = vmatpush.msra.mxu0 %v317
    %749 = vmatpush.msra.mxu0 %v314
    %750 = vmatpush.msra.mxu0 %v311
    %751 = vmatpush.msra.mxu0 %v308
    %752 = vmatpush.msra.mxu0 %v305
    %753 = vmatpush.msra.mxu0 %v302
    %754 = vmatpush.msra.mxu0 %v299
    %755 = vmatmul.f32.gmra.mxu0 %v717
    %v756 = vpop.f32.mrf.mxu0
    %v757 = vadd.f32 0.0, %v756
    %758 = vdwg.mxu0
    %759 = vmatpush.msra.mxu0 %v345
    %760 = vmatpush.msra.mxu0 %v342
    %761 = vmatpush.msra.mxu0 %v339
    %762 = vmatpush.msra.mxu0 %v336
    %763 = vmatpush.msra.mxu0 %v333
    %764 = vmatpush.msra.mxu0 %v330
    %765 = vmatpush.msra.mxu0 %v327
    %766 = vmatpush.msra.mxu0 %v324
    %767 = vmatpush.msra.mxu0 %v321
    %768 = vmatpush.msra.mxu0 %v318
    %769 = vmatpush.msra.mxu0 %v315
    %770 = vmatpush.msra.mxu0 %v312
    %771 = vmatpush.msra.mxu0 %v309
    %772 = vmatpush.msra.mxu0 %v306
    %773 = vmatpush.msra.mxu0 %v303
    %774 = vmatpush.msra.mxu0 %v300
    %775 = vmatmul.f32.gmra.mxu0 %v717
    %v776 = vpop.f32.mrf.mxu0
    %v777 = vadd.f32 0.0, %v776
    %778 = vdwg.mxu0
    %v780 = vrot.slane %v737, 4
    %v782 = vadd.f32 %v202, %v780
    %v783 = vxor.u32 %v782, 2147483648
    %v784 = vmul.f32 %v783, 1.442695
    %v785 = vpow.pop %v784
    %v786 = vadd.f32 %v785, 1.0
    %v787 = vrcp.pop %v786
    %v788 = vmul.f32 %v786, %v787
    %v789 = vsub.f32 1.0, %v788
    %v790 = vmul.f32 %v787, %v789
    %v791 = vadd.f32 %v787, %v790
    %vm792 = vweird.f32 %v786
    %vm793 = vweird.f32 %v787
    %vm794 = vmor %vm792, %vm793
    %v795 = vsel %vm794, %v787, %v791
    %v796 = vand.u32 2147483647, %v786
    %vm797 = vcmp.eq.f32.partialorder %v796, 8.507059e+37
    %v798 = vand.u32 %v786, 2147483648
    %v799 = vor.u32 1.1754944e-38, %v798
    %v800 = vsel %vm797, %v799, %v795
    %v801 = vmul.f32 1.0, %v800
    %v803 = vrot.slane %v757, 4
    %v805 = vadd.f32 %v225, %v803
    %v806 = vxor.u32 %v805, 2147483648
    %v807 = vmul.f32 %v806, 1.442695
    %v808 = vpow.pop %v807
    %v809 = vadd.f32 %v808, 1.0
    %v810 = vrcp.pop %v809
    %v811 = vmul.f32 %v809, %v810
    %v812 = vsub.f32 1.0, %v811
    %v813 = vmul.f32 %v810, %v812
    %v814 = vadd.f32 %v810, %v813
    %vm815 = vweird.f32 %v809
    %vm816 = vweird.f32 %v810
    %vm817 = vmor %vm815, %vm816
    %v818 = vsel %vm817, %v810, %v814
    %v819 = vand.u32 2147483647, %v809
    %vm820 = vcmp.eq.f32.partialorder %v819, 8.507059e+37
    %v821 = vand.u32 %v809, 2147483648
    %v822 = vor.u32 1.1754944e-38, %v821
    %v823 = vsel %vm820, %v822, %v818
    %v824 = vmul.f32 1.0, %v823
    %v825 = vadd.f32 %v777, %v349
    %v827 = vrot.slane %v825, 4
    %v829 = vmul.f32 %v801, %v827
    %v830 = vadd.f32 %v248, %v829
    %v831 = vtanh.pop %v830
    %v832 = vsub.f32 1.0, %v824
    %v833 = vmul.f32 %v832, %v831
    %v834 = vrot.slane %v574, 2
    %v836 = vmul.f32 %v824, %v834
    %v837 = vadd.f32 %v833, %v836
    %839 = vst [vmem:[#allocation1] sm:$0xff] %v716
    %s840 = scalar_lea.vmem [#allocation1], 2
    %v841 = vld [vmem:[%s840] ss:$9 sm:$0xff]
    %s842 = scalar_lea.vmem [#allocation1], 3
    %v843 = vld [vmem:[%s842] ss:$9 sm:$0xff]
    %846 = vst.msk [vmem:[#allocation7 + $0x1] sm:$0x1] %vm578, %v841
    %847 = vst.msk [vmem:[#allocation7 + $0x9] sm:$0x1] %vm578, %v843
    %849 = vst [vmem:[#allocation1] sm:$0xff] %v837
    %s850 = scalar_lea.vmem [#allocation1], 4
    %v851 = vld [vmem:[%s850] ss:$9 sm:$0xff]
    %s852 = scalar_lea.vmem [#allocation1], 5
    %v853 = vld [vmem:[%s852] ss:$9 sm:$0xff]
    %v854 = vperm.slane %v851, 0
    %v855 = vperm.slane %v853, 0
    %856 = vrot.lane.b32.xlu0 %v854, 32
    %v857 = vpop.permute.xlu0 %856
    %858 = vrot.lane.b32.xlu0 %v855, 32
    %v859 = vpop.permute.xlu0 %858
    %862 = vst.msk [vmem:[#allocation7 + $0x6] sm:$0x1] %vm595, %v857
    %863 = vst.msk [vmem:[#allocation7 + $0xe] sm:$0x1] %vm595, %v859
    %v864 = vrot.slane %v716, 2
    %866 = vmatpush.msra.mxu0 %v295
    %867 = vmatpush.msra.mxu0 %v292
    %868 = vmatpush.msra.mxu0 %v289
    %869 = vmatpush.msra.mxu0 %v286
    %870 = vmatpush.msra.mxu0 %v283
    %871 = vmatpush.msra.mxu0 %v280
    %872 = vmatpush.msra.mxu0 %v277
    %873 = vmatpush.msra.mxu0 %v274
    %874 = vmatpush.msra.mxu0 %v271
    %875 = vmatpush.msra.mxu0 %v268
    %876 = vmatpush.msra.mxu0 %v265
    %877 = vmatpush.msra.mxu0 %v262
    %878 = vmatpush.msra.mxu0 %v259
    %879 = vmatpush.msra.mxu0 %v256
    %880 = vmatpush.msra.mxu0 %v253
    %881 = vmatpush.msra.mxu0 %v250
    %882 = vmatmul.f32.gmra.mxu0 %v864
    %v883 = vpop.f32.mrf.mxu0
    %v884 = vadd.f32 0.0, %v883
    %885 = vdwg.mxu0
    %886 = vmatpush.msra.mxu0 %v296
    %887 = vmatpush.msra.mxu0 %v293
    %888 = vmatpush.msra.mxu0 %v290
    %889 = vmatpush.msra.mxu0 %v287
    %890 = vmatpush.msra.mxu0 %v284
    %891 = vmatpush.msra.mxu0 %v281
    %892 = vmatpush.msra.mxu0 %v278
    %893 = vmatpush.msra.mxu0 %v275
    %894 = vmatpush.msra.mxu0 %v272
    %895 = vmatpush.msra.mxu0 %v269
    %896 = vmatpush.msra.mxu0 %v266
    %897 = vmatpush.msra.mxu0 %v263
    %898 = vmatpush.msra.mxu0 %v260
    %899 = vmatpush.msra.mxu0 %v257
    %900 = vmatpush.msra.mxu0 %v254
    %901 = vmatpush.msra.mxu0 %v251
    %902 = vmatmul.f32.gmra.mxu0 %v864
    %v903 = vpop.f32.mrf.mxu0
    %v904 = vadd.f32 0.0, %v903
    %905 = vdwg.mxu0
    %906 = vmatpush.msra.mxu0 %v297
    %907 = vmatpush.msra.mxu0 %v294
    %908 = vmatpush.msra.mxu0 %v291
    %909 = vmatpush.msra.mxu0 %v288
    %910 = vmatpush.msra.mxu0 %v285
    %911 = vmatpush.msra.mxu0 %v282
    %912 = vmatpush.msra.mxu0 %v279
    %913 = vmatpush.msra.mxu0 %v276
    %914 = vmatpush.msra.mxu0 %v273
    %915 = vmatpush.msra.mxu0 %v270
    %916 = vmatpush.msra.mxu0 %v267
    %917 = vmatpush.msra.mxu0 %v264
    %918 = vmatpush.msra.mxu0 %v261
    %919 = vmatpush.msra.mxu0 %v258
    %920 = vmatpush.msra.mxu0 %v255
    %921 = vmatpush.msra.mxu0 %v252
    %922 = vmatmul.f32.gmra.mxu0 %v864
    %v923 = vpop.f32.mrf.mxu0
    %v924 = vadd.f32 0.0, %v923
    %925 = vdwg.mxu0
    %v927 = vrot.slane %v884, 4
    %v929 = vadd.f32 %v130, %v927
    %v930 = vxor.u32 %v929, 2147483648
    %v931 = vmul.f32 %v930, 1.442695
    %v932 = vpow.pop %v931
    %v933 = vadd.f32 %v932, 1.0
    %v934 = vrcp.pop %v933
    %v935 = vmul.f32 %v933, %v934
    %v936 = vsub.f32 1.0, %v935
    %v937 = vmul.f32 %v934, %v936
    %v938 = vadd.f32 %v934, %v937
    %vm939 = vweird.f32 %v933
    %vm940 = vweird.f32 %v934
    %vm941 = vmor %vm939, %vm940
    %v942 = vsel %vm941, %v934, %v938
    %v943 = vand.u32 2147483647, %v933
    %vm944 = vcmp.eq.f32.partialorder %v943, 8.507059e+37
    %v945 = vand.u32 %v933, 2147483648
    %v946 = vor.u32 1.1754944e-38, %v945
    %v947 = vsel %vm944, %v946, %v942
    %v948 = vmul.f32 1.0, %v947
    %v950 = vrot.slane %v904, 4
    %v952 = vadd.f32 %v153, %v950
    %v953 = vxor.u32 %v952, 2147483648
    %v954 = vmul.f32 %v953, 1.442695
    %v955 = vpow.pop %v954
    %v956 = vadd.f32 %v955, 1.0
    %v957 = vrcp.pop %v956
    %v958 = vmul.f32 %v956, %v957
    %v959 = vsub.f32 1.0, %v958
    %v960 = vmul.f32 %v957, %v959
    %v961 = vadd.f32 %v957, %v960
    %vm962 = vweird.f32 %v956
    %vm963 = vweird.f32 %v957
    %vm964 = vmor %vm962, %vm963
    %v965 = vsel %vm964, %v957, %v961
    %v966 = vand.u32 2147483647, %v956
    %vm967 = vcmp.eq.f32.partialorder %v966, 8.507059e+37
    %v968 = vand.u32 %v956, 2147483648
    %v969 = vor.u32 1.1754944e-38, %v968
    %v970 = vsel %vm967, %v969, %v965
    %v971 = vmul.f32 1.0, %v970
    %v972 = vadd.f32 %v924, %v347
    %v974 = vrot.slane %v972, 4
    %v976 = vmul.f32 %v948, %v974
    %v977 = vadd.f32 %v176, %v976
    %v978 = vtanh.pop %v977
    %v979 = vsub.f32 1.0, %v971
    %v980 = vmul.f32 %v979, %v978
    %v981 = vrot.slane %v716, 6
    %v983 = vmul.f32 %v971, %v981
    %v984 = vadd.f32 %v980, %v983
    %v985 = vrot.slane %v837, 4
    %987 = vmatpush.msra.mxu0 %v343
    %988 = vmatpush.msra.mxu0 %v340
    %989 = vmatpush.msra.mxu0 %v337
    %990 = vmatpush.msra.mxu0 %v334
    %991 = vmatpush.msra.mxu0 %v331
    %992 = vmatpush.msra.mxu0 %v328
    %993 = vmatpush.msra.mxu0 %v325
    %994 = vmatpush.msra.mxu0 %v322
    %995 = vmatpush.msra.mxu0 %v319
    %996 = vmatpush.msra.mxu0 %v316
    %997 = vmatpush.msra.mxu0 %v313
    %998 = vmatpush.msra.mxu0 %v310
    %999 = vmatpush.msra.mxu0 %v307
    %1000 = vmatpush.msra.mxu0 %v304
    %1001 = vmatpush.msra.mxu0 %v301
    %1002 = vmatpush.msra.mxu0 %v298
    %1003 = vmatmul.f32.gmra.mxu0 %v985
    %v1004 = vpop.f32.mrf.mxu0
    %v1005 = vadd.f32 0.0, %v1004
    %1006 = vdwg.mxu0
    %1007 = vmatpush.msra.mxu0 %v344
    %1008 = vmatpush.msra.mxu0 %v341
    %1009 = vmatpush.msra.mxu0 %v338
    %1010 = vmatpush.msra.mxu0 %v335
    %1011 = vmatpush.msra.mxu0 %v332
    %1012 = vmatpush.msra.mxu0 %v329
    %1013 = vmatpush.msra.mxu0 %v326
    %1014 = vmatpush.msra.mxu0 %v323
    %1015 = vmatpush.msra.mxu0 %v320
    %1016 = vmatpush.msra.mxu0 %v317
    %1017 = vmatpush.msra.mxu0 %v314
    %1018 = vmatpush.msra.mxu0 %v311
    %1019 = vmatpush.msra.mxu0 %v308
    %1020 = vmatpush.msra.mxu0 %v305
    %1021 = vmatpush.msra.mxu0 %v302
    %1022 = vmatpush.msra.mxu0 %v299
    %1023 = vmatmul.f32.gmra.mxu0 %v985
    %v1024 = vpop.f32.mrf.mxu0
    %v1025 = vadd.f32 0.0, %v1024
    %1026 = vdwg.mxu0
    %1027 = vmatpush.msra.mxu0 %v345
    %1028 = vmatpush.msra.mxu0 %v342
    %1029 = vmatpush.msra.mxu0 %v339
    %1030 = vmatpush.msra.mxu0 %v336
    %1031 = vmatpush.msra.mxu0 %v333
    %1032 = vmatpush.msra.mxu0 %v330
    %1033 = vmatpush.msra.mxu0 %v327
    %1034 = vmatpush.msra.mxu0 %v324
    %1035 = vmatpush.msra.mxu0 %v321
    %1036 = vmatpush.msra.mxu0 %v318
    %1037 = vmatpush.msra.mxu0 %v315
    %1038 = vmatpush.msra.mxu0 %v312
    %1039 = vmatpush.msra.mxu0 %v309
    %1040 = vmatpush.msra.mxu0 %v306
    %1041 = vmatpush.msra.mxu0 %v303
    %1042 = vmatpush.msra.mxu0 %v300
    %1043 = vmatmul.f32.gmra.mxu0 %v985
    %v1044 = vpop.f32.mrf.mxu0
    %v1045 = vadd.f32 0.0, %v1044
    %1046 = vdwg.mxu0
    %v1048 = vrot.slane %v1005, 6
    %v1050 = vadd.f32 %v202, %v1048
    %v1051 = vxor.u32 %v1050, 2147483648
    %v1052 = vmul.f32 %v1051, 1.442695
    %v1053 = vpow.pop %v1052
    %v1054 = vadd.f32 %v1053, 1.0
    %v1055 = vrcp.pop %v1054
    %v1056 = vmul.f32 %v1054, %v1055
    %v1057 = vsub.f32 1.0, %v1056
    %v1058 = vmul.f32 %v1055, %v1057
    %v1059 = vadd.f32 %v1055, %v1058
    %vm1060 = vweird.f32 %v1054
    %vm1061 = vweird.f32 %v1055
    %vm1062 = vmor %vm1060, %vm1061
    %v1063 = vsel %vm1062, %v1055, %v1059
    %v1064 = vand.u32 2147483647, %v1054
    %vm1065 = vcmp.eq.f32.partialorder %v1064, 8.507059e+37
    %v1066 = vand.u32 %v1054, 2147483648
    %v1067 = vor.u32 1.1754944e-38, %v1066
    %v1068 = vsel %vm1065, %v1067, %v1063
    %v1069 = vmul.f32 1.0, %v1068
    %v1071 = vrot.slane %v1025, 6
    %v1073 = vadd.f32 %v225, %v1071
    %v1074 = vxor.u32 %v1073, 2147483648
    %v1075 = vmul.f32 %v1074, 1.442695
    %v1076 = vpow.pop %v1075
    %v1077 = vadd.f32 %v1076, 1.0
    %v1078 = vrcp.pop %v1077
    %v1079 = vmul.f32 %v1077, %v1078
    %v1080 = vsub.f32 1.0, %v1079
    %v1081 = vmul.f32 %v1078, %v1080
    %v1082 = vadd.f32 %v1078, %v1081
    %vm1083 = vweird.f32 %v1077
    %vm1084 = vweird.f32 %v1078
    %vm1085 = vmor %vm1083, %vm1084
    %v1086 = vsel %vm1085, %v1078, %v1082
    %v1087 = vand.u32 2147483647, %v1077
    %vm1088 = vcmp.eq.f32.partialorder %v1087, 8.507059e+37
    %v1089 = vand.u32 %v1077, 2147483648
    %v1090 = vor.u32 1.1754944e-38, %v1089
    %v1091 = vsel %vm1088, %v1090, %v1086
    %v1092 = vmul.f32 1.0, %v1091
    %v1093 = vadd.f32 %v1045, %v349
    %v1095 = vrot.slane %v1093, 6
    %v1097 = vmul.f32 %v1069, %v1095
    %v1098 = vadd.f32 %v248, %v1097
    %v1099 = vtanh.pop %v1098
    %v1100 = vsub.f32 1.0, %v1092
    %v1101 = vmul.f32 %v1100, %v1099
    %v1102 = vrot.slane %v837, 2
    %v1104 = vmul.f32 %v1092, %v1102
    %v1105 = vadd.f32 %v1101, %v1104
    %1107 = vst [vmem:[#allocation1] sm:$0xff] %v984
    %s1108 = scalar_lea.vmem [#allocation1], 4
    %v1109 = vld [vmem:[%s1108] ss:$9 sm:$0xff]
    %s1110 = scalar_lea.vmem [#allocation1], 5
    %v1111 = vld [vmem:[%s1110] ss:$9 sm:$0xff]
    %1114 = vst.msk [vmem:[#allocation7 + $0x2] sm:$0x1] %vm578, %v1109
    %1115 = vst.msk [vmem:[#allocation7 + $0xa] sm:$0x1] %vm578, %v1111
    %1117 = vst [vmem:[#allocation1] sm:$0xff] %v1105
    %s1118 = scalar_lea.vmem [#allocation1], 2
    %v1119 = vld [vmem:[%s1118] ss:$9 sm:$0xff]
    %s1120 = scalar_lea.vmem [#allocation1], 3
    %v1121 = vld [vmem:[%s1120] ss:$9 sm:$0xff]
    %v1122 = vperm.slane %v1119, 0
    %v1123 = vperm.slane %v1121, 0
    %1124 = vrot.lane.b32.xlu0 %v1122, 32
    %v1125 = vpop.permute.xlu0 %1124
    %1126 = vrot.lane.b32.xlu0 %v1123, 32
    %v1127 = vpop.permute.xlu0 %1126
    %1130 = vst.msk [vmem:[#allocation7 + $0x5] sm:$0x1] %vm595, %v1125
    %1131 = vst.msk [vmem:[#allocation7 + $0xd] sm:$0x1] %vm595, %v1127
    %v1132 = vrot.slane %v984, 4
    %1134 = vmatpush.msra.mxu0 %v295
    %1135 = vmatpush.msra.mxu0 %v292
    %1136 = vmatpush.msra.mxu0 %v289
    %1137 = vmatpush.msra.mxu0 %v286
    %1138 = vmatpush.msra.mxu0 %v283
    %1139 = vmatpush.msra.mxu0 %v280
    %1140 = vmatpush.msra.mxu0 %v277
    %1141 = vmatpush.msra.mxu0 %v274
    %1142 = vmatpush.msra.mxu0 %v271
    %1143 = vmatpush.msra.mxu0 %v268
    %1144 = vmatpush.msra.mxu0 %v265
    %1145 = vmatpush.msra.mxu0 %v262
    %1146 = vmatpush.msra.mxu0 %v259
    %1147 = vmatpush.msra.mxu0 %v256
    %1148 = vmatpush.msra.mxu0 %v253
    %1149 = vmatpush.msra.mxu0 %v250
    %1150 = vmatmul.f32.gmra.mxu0 %v1132
    %v1151 = vpop.f32.mrf.mxu0
    %v1152 = vadd.f32 0.0, %v1151
    %1153 = vdwg.mxu0
    %1154 = vmatpush.msra.mxu0 %v296
    %1155 = vmatpush.msra.mxu0 %v293
    %1156 = vmatpush.msra.mxu0 %v290
    %1157 = vmatpush.msra.mxu0 %v287
    %1158 = vmatpush.msra.mxu0 %v284
    %1159 = vmatpush.msra.mxu0 %v281
    %1160 = vmatpush.msra.mxu0 %v278
    %1161 = vmatpush.msra.mxu0 %v275
    %1162 = vmatpush.msra.mxu0 %v272
    %1163 = vmatpush.msra.mxu0 %v269
    %1164 = vmatpush.msra.mxu0 %v266
    %1165 = vmatpush.msra.mxu0 %v263
    %1166 = vmatpush.msra.mxu0 %v260
    %1167 = vmatpush.msra.mxu0 %v257
    %1168 = vmatpush.msra.mxu0 %v254
    %1169 = vmatpush.msra.mxu0 %v251
    %1170 = vmatmul.f32.gmra.mxu0 %v1132
    %v1171 = vpop.f32.mrf.mxu0
    %v1172 = vadd.f32 0.0, %v1171
    %1173 = vdwg.mxu0
    %1174 = vmatpush.msra.mxu0 %v297
    %1175 = vmatpush.msra.mxu0 %v294
    %1176 = vmatpush.msra.mxu0 %v291
    %1177 = vmatpush.msra.mxu0 %v288
    %1178 = vmatpush.msra.mxu0 %v285
    %1179 = vmatpush.msra.mxu0 %v282
    %1180 = vmatpush.msra.mxu0 %v279
    %1181 = vmatpush.msra.mxu0 %v276
    %1182 = vmatpush.msra.mxu0 %v273
    %1183 = vmatpush.msra.mxu0 %v270
    %1184 = vmatpush.msra.mxu0 %v267
    %1185 = vmatpush.msra.mxu0 %v264
    %1186 = vmatpush.msra.mxu0 %v261
    %1187 = vmatpush.msra.mxu0 %v258
    %1188 = vmatpush.msra.mxu0 %v255
    %1189 = vmatpush.msra.mxu0 %v252
    %1190 = vmatmul.f32.gmra.mxu0 %v1132
    %v1191 = vpop.f32.mrf.mxu0
    %v1192 = vadd.f32 0.0, %v1191
    %1193 = vdwg.mxu0
    %v1195 = vrot.slane %v1152, 2
    %v1197 = vadd.f32 %v130, %v1195
    %v1198 = vxor.u32 %v1197, 2147483648
    %v1199 = vmul.f32 %v1198, 1.442695
    %v1200 = vpow.pop %v1199
    %v1201 = vadd.f32 %v1200, 1.0
    %v1202 = vrcp.pop %v1201
    %v1203 = vmul.f32 %v1201, %v1202
    %v1204 = vsub.f32 1.0, %v1203
    %v1205 = vmul.f32 %v1202, %v1204
    %v1206 = vadd.f32 %v1202, %v1205
    %vm1207 = vweird.f32 %v1201
    %vm1208 = vweird.f32 %v1202
    %vm1209 = vmor %vm1207, %vm1208
    %v1210 = vsel %vm1209, %v1202, %v1206
    %v1211 = vand.u32 2147483647, %v1201
    %vm1212 = vcmp.eq.f32.partialorder %v1211, 8.507059e+37
    %v1213 = vand.u32 %v1201, 2147483648
    %v1214 = vor.u32 1.1754944e-38, %v1213
    %v1215 = vsel %vm1212, %v1214, %v1210
    %v1216 = vmul.f32 1.0, %v1215
    %v1218 = vrot.slane %v1172, 2
    %v1220 = vadd.f32 %v153, %v1218
    %v1221 = vxor.u32 %v1220, 2147483648
    %v1222 = vmul.f32 %v1221, 1.442695
    %v1223 = vpow.pop %v1222
    %v1224 = vadd.f32 %v1223, 1.0
    %v1225 = vrcp.pop %v1224
    %v1226 = vmul.f32 %v1224, %v1225
    %v1227 = vsub.f32 1.0, %v1226
    %v1228 = vmul.f32 %v1225, %v1227
    %v1229 = vadd.f32 %v1225, %v1228
    %vm1230 = vweird.f32 %v1224
    %vm1231 = vweird.f32 %v1225
    %vm1232 = vmor %vm1230, %vm1231
    %v1233 = vsel %vm1232, %v1225, %v1229
    %v1234 = vand.u32 2147483647, %v1224
    %vm1235 = vcmp.eq.f32.partialorder %v1234, 8.507059e+37
    %v1236 = vand.u32 %v1224, 2147483648
    %v1237 = vor.u32 1.1754944e-38, %v1236
    %v1238 = vsel %vm1235, %v1237, %v1233
    %v1239 = vmul.f32 1.0, %v1238
    %v1240 = vadd.f32 %v1192, %v347
    %v1242 = vrot.slane %v1240, 2
    %v1244 = vmul.f32 %v1216, %v1242
    %v1245 = vadd.f32 %v176, %v1244
    %v1246 = vtanh.pop %v1245
    %v1247 = vsub.f32 1.0, %v1239
    %v1248 = vmul.f32 %v1247, %v1246
    %v1249 = vrot.slane %v984, 6
    %v1251 = vmul.f32 %v1239, %v1249
    %v1252 = vadd.f32 %v1248, %v1251
    %v1253 = vrot.slane %v1105, 2
    %1255 = vmatpush.msra.mxu0 %v343
    %1256 = vmatpush.msra.mxu0 %v340
    %1257 = vmatpush.msra.mxu0 %v337
    %1258 = vmatpush.msra.mxu0 %v334
    %1259 = vmatpush.msra.mxu0 %v331
    %1260 = vmatpush.msra.mxu0 %v328
    %1261 = vmatpush.msra.mxu0 %v325
    %1262 = vmatpush.msra.mxu0 %v322
    %1263 = vmatpush.msra.mxu0 %v319
    %1264 = vmatpush.msra.mxu0 %v316
    %1265 = vmatpush.msra.mxu0 %v313
    %1266 = vmatpush.msra.mxu0 %v310
    %1267 = vmatpush.msra.mxu0 %v307
    %1268 = vmatpush.msra.mxu0 %v304
    %1269 = vmatpush.msra.mxu0 %v301
    %1270 = vmatpush.msra.mxu0 %v298
    %1271 = vmatmul.f32.gmra.mxu0 %v1253
    %v1272 = vpop.f32.mrf.mxu0
    %v1273 = vadd.f32 0.0, %v1272
    %1274 = vdwg.mxu0
    %1275 = vmatpush.msra.mxu0 %v344
    %1276 = vmatpush.msra.mxu0 %v341
    %1277 = vmatpush.msra.mxu0 %v338
    %1278 = vmatpush.msra.mxu0 %v335
    %1279 = vmatpush.msra.mxu0 %v332
    %1280 = vmatpush.msra.mxu0 %v329
    %1281 = vmatpush.msra.mxu0 %v326
    %1282 = vmatpush.msra.mxu0 %v323
    %1283 = vmatpush.msra.mxu0 %v320
    %1284 = vmatpush.msra.mxu0 %v317
    %1285 = vmatpush.msra.mxu0 %v314
    %1286 = vmatpush.msra.mxu0 %v311
    %1287 = vmatpush.msra.mxu0 %v308
    %1288 = vmatpush.msra.mxu0 %v305
    %1289 = vmatpush.msra.mxu0 %v302
    %1290 = vmatpush.msra.mxu0 %v299
    %1291 = vmatmul.f32.gmra.mxu0 %v1253
    %v1292 = vpop.f32.mrf.mxu0
    %v1293 = vadd.f32 0.0, %v1292
    %1294 = vdwg.mxu0
    %1295 = vmatpush.msra.mxu0 %v345
    %1296 = vmatpush.msra.mxu0 %v342
    %1297 = vmatpush.msra.mxu0 %v339
    %1298 = vmatpush.msra.mxu0 %v336
    %1299 = vmatpush.msra.mxu0 %v333
    %1300 = vmatpush.msra.mxu0 %v330
    %1301 = vmatpush.msra.mxu0 %v327
    %1302 = vmatpush.msra.mxu0 %v324
    %1303 = vmatpush.msra.mxu0 %v321
    %1304 = vmatpush.msra.mxu0 %v318
    %1305 = vmatpush.msra.mxu0 %v315
    %1306 = vmatpush.msra.mxu0 %v312
    %1307 = vmatpush.msra.mxu0 %v309
    %1308 = vmatpush.msra.mxu0 %v306
    %1309 = vmatpush.msra.mxu0 %v303
    %1310 = vmatpush.msra.mxu0 %v300
    %1311 = vmatmul.f32.gmra.mxu0 %v1253
    %v1312 = vpop.f32.mrf.mxu0
    %v1313 = vadd.f32 0.0, %v1312
    %1314 = vdwg.mxu0
    %v1315 = vadd.f32 %v202, %v1273
    %v1316 = vxor.u32 %v1315, 2147483648
    %v1317 = vmul.f32 %v1316, 1.442695
    %v1318 = vpow.pop %v1317
    %v1319 = vadd.f32 %v1318, 1.0
    %v1320 = vrcp.pop %v1319
    %v1321 = vmul.f32 %v1319, %v1320
    %v1322 = vsub.f32 1.0, %v1321
    %v1323 = vmul.f32 %v1320, %v1322
    %v1324 = vadd.f32 %v1320, %v1323
    %vm1325 = vweird.f32 %v1319
    %vm1326 = vweird.f32 %v1320
    %vm1327 = vmor %vm1325, %vm1326
    %v1328 = vsel %vm1327, %v1320, %v1324
    %v1329 = vand.u32 2147483647, %v1319
    %vm1330 = vcmp.eq.f32.partialorder %v1329, 8.507059e+37
    %v1331 = vand.u32 %v1319, 2147483648
    %v1332 = vor.u32 1.1754944e-38, %v1331
    %v1333 = vsel %vm1330, %v1332, %v1328
    %v1334 = vmul.f32 1.0, %v1333
    %v1335 = vadd.f32 %v225, %v1293
    %v1336 = vxor.u32 %v1335, 2147483648
    %v1337 = vmul.f32 %v1336, 1.442695
    %v1338 = vpow.pop %v1337
    %v1339 = vadd.f32 %v1338, 1.0
    %v1340 = vrcp.pop %v1339
    %v1341 = vmul.f32 %v1339, %v1340
    %v1342 = vsub.f32 1.0, %v1341
    %v1343 = vmul.f32 %v1340, %v1342
    %v1344 = vadd.f32 %v1340, %v1343
    %vm1345 = vweird.f32 %v1339
    %vm1346 = vweird.f32 %v1340
    %vm1347 = vmor %vm1345, %vm1346
    %v1348 = vsel %vm1347, %v1340, %v1344
    %v1349 = vand.u32 2147483647, %v1339
    %vm1350 = vcmp.eq.f32.partialorder %v1349, 8.507059e+37
    %v1351 = vand.u32 %v1339, 2147483648
    %v1352 = vor.u32 1.1754944e-38, %v1351
    %v1353 = vsel %vm1350, %v1352, %v1348
    %v1354 = vmul.f32 1.0, %v1353
    %v1355 = vadd.f32 %v1313, %v349
    %v1356 = vmul.f32 %v1334, %v1355
    %v1357 = vadd.f32 %v248, %v1356
    %v1358 = vtanh.pop %v1357
    %v1359 = vsub.f32 1.0, %v1354
    %v1360 = vmul.f32 %v1359, %v1358
    %v1361 = vmul.f32 %v1354, %v1253
    %v1362 = vadd.f32 %v1360, %v1361
    %1364 = vst [vmem:[#allocation1] sm:$0xff] %v1252
    %s1365 = scalar_lea.vmem [#allocation1], 6
    %v1366 = vld [vmem:[%s1365] ss:$9 sm:$0xff]
    %s1367 = scalar_lea.vmem [#allocation1], 7
    %v1368 = vld [vmem:[%s1367] ss:$9 sm:$0xff]
    %1371 = vst.msk [vmem:[#allocation7 + $0x3] sm:$0x1] %vm578, %v1366
    %1372 = vst.msk [vmem:[#allocation7 + $0xb] sm:$0x1] %vm578, %v1368
    %v1374 = vrot.slane %v1362, 1
    %v1375 = vperm.slane %v1362, 0
    %v1376 = vperm.slane %v1374, 0
    %1377 = vrot.lane.b32.xlu0 %v1375, 32
    %v1378 = vpop.permute.xlu0 %1377
    %1379 = vrot.lane.b32.xlu0 %v1376, 32
    %v1380 = vpop.permute.xlu0 %1379
    %1383 = vst.msk [vmem:[#allocation7 + $0x4] sm:$0x1] %vm595, %v1378
    %1384 = vst.msk [vmem:[#allocation7 + $0xc] sm:$0x1] %vm595, %v1380
    %v1385 = vrot.slane %v1252, 6
    %1387 = vmatpush.msra.mxu0 %v295
    %1388 = vmatpush.msra.mxu0 %v292
    %1389 = vmatpush.msra.mxu0 %v289
    %1390 = vmatpush.msra.mxu0 %v286
    %1391 = vmatpush.msra.mxu0 %v283
    %1392 = vmatpush.msra.mxu0 %v280
    %1393 = vmatpush.msra.mxu0 %v277
    %1394 = vmatpush.msra.mxu0 %v274
    %1395 = vmatpush.msra.mxu0 %v271
    %1396 = vmatpush.msra.mxu0 %v268
    %1397 = vmatpush.msra.mxu0 %v265
    %1398 = vmatpush.msra.mxu0 %v262
    %1399 = vmatpush.msra.mxu0 %v259
    %1400 = vmatpush.msra.mxu0 %v256
    %1401 = vmatpush.msra.mxu0 %v253
    %1402 = vmatpush.msra.mxu0 %v250
    %1403 = vmatmul.f32.gmra.mxu0 %v1385
    %v1404 = vpop.f32.mrf.mxu0
    %v1405 = vadd.f32 0.0, %v1404
    %1406 = vdwg.mxu0
    %1407 = vmatpush.msra.mxu0 %v296
    %1408 = vmatpush.msra.mxu0 %v293
    %1409 = vmatpush.msra.mxu0 %v290
    %1410 = vmatpush.msra.mxu0 %v287
    %1411 = vmatpush.msra.mxu0 %v284
    %1412 = vmatpush.msra.mxu0 %v281
    %1413 = vmatpush.msra.mxu0 %v278
    %1414 = vmatpush.msra.mxu0 %v275
    %1415 = vmatpush.msra.mxu0 %v272
    %1416 = vmatpush.msra.mxu0 %v269
    %1417 = vmatpush.msra.mxu0 %v266
    %1418 = vmatpush.msra.mxu0 %v263
    %1419 = vmatpush.msra.mxu0 %v260
    %1420 = vmatpush.msra.mxu0 %v257
    %1421 = vmatpush.msra.mxu0 %v254
    %1422 = vmatpush.msra.mxu0 %v251
    %1423 = vmatmul.f32.gmra.mxu0 %v1385
    %v1424 = vpop.f32.mrf.mxu0
    %v1425 = vadd.f32 0.0, %v1424
    %1426 = vdwg.mxu0
    %1427 = vmatpush.msra.mxu0 %v297
    %1428 = vmatpush.msra.mxu0 %v294
    %1429 = vmatpush.msra.mxu0 %v291
    %1430 = vmatpush.msra.mxu0 %v288
    %1431 = vmatpush.msra.mxu0 %v285
    %1432 = vmatpush.msra.mxu0 %v282
    %1433 = vmatpush.msra.mxu0 %v279
    %1434 = vmatpush.msra.mxu0 %v276
    %1435 = vmatpush.msra.mxu0 %v273
    %1436 = vmatpush.msra.mxu0 %v270
    %1437 = vmatpush.msra.mxu0 %v267
    %1438 = vmatpush.msra.mxu0 %v264
    %1439 = vmatpush.msra.mxu0 %v261
    %1440 = vmatpush.msra.mxu0 %v258
    %1441 = vmatpush.msra.mxu0 %v255
    %1442 = vmatpush.msra.mxu0 %v252
    %1443 = vmatmul.f32.gmra.mxu0 %v1385
    %v1444 = vpop.f32.mrf.mxu0
    %v1445 = vadd.f32 0.0, %v1444
    %1446 = vdwg.mxu0
    %v1447 = vadd.f32 %v133, %v1405
    %v1448 = vxor.u32 %v1447, 2147483648
    %v1449 = vmul.f32 %v1448, 1.442695
    %v1450 = vpow.pop %v1449
    %v1451 = vadd.f32 %v1450, 1.0
    %v1452 = vrcp.pop %v1451
    %v1453 = vmul.f32 %v1451, %v1452
    %v1454 = vsub.f32 1.0, %v1453
    %v1455 = vmul.f32 %v1452, %v1454
    %v1456 = vadd.f32 %v1452, %v1455
    %vm1457 = vweird.f32 %v1451
    %vm1458 = vweird.f32 %v1452
    %vm1459 = vmor %vm1457, %vm1458
    %v1460 = vsel %vm1459, %v1452, %v1456
    %v1461 = vand.u32 2147483647, %v1451
    %vm1462 = vcmp.eq.f32.partialorder %v1461, 8.507059e+37
    %v1463 = vand.u32 %v1451, 2147483648
    %v1464 = vor.u32 1.1754944e-38, %v1463
    %v1465 = vsel %vm1462, %v1464, %v1460
    %v1466 = vmul.f32 1.0, %v1465
    %v1467 = vadd.f32 %v156, %v1425
    %v1468 = vxor.u32 %v1467, 2147483648
    %v1469 = vmul.f32 %v1468, 1.442695
    %v1470 = vpow.pop %v1469
    %v1471 = vadd.f32 %v1470, 1.0
    %v1472 = vrcp.pop %v1471
    %v1473 = vmul.f32 %v1471, %v1472
    %v1474 = vsub.f32 1.0, %v1473
    %v1475 = vmul.f32 %v1472, %v1474
    %v1476 = vadd.f32 %v1472, %v1475
    %vm1477 = vweird.f32 %v1471
    %vm1478 = vweird.f32 %v1472
    %vm1479 = vmor %vm1477, %vm1478
    %v1480 = vsel %vm1479, %v1472, %v1476
    %v1481 = vand.u32 2147483647, %v1471
    %vm1482 = vcmp.eq.f32.partialorder %v1481, 8.507059e+37
    %v1483 = vand.u32 %v1471, 2147483648
    %v1484 = vor.u32 1.1754944e-38, %v1483
    %v1485 = vsel %vm1482, %v1484, %v1480
    %v1486 = vmul.f32 1.0, %v1485
    %v1487 = vadd.f32 %v1445, %v347
    %v1488 = vmul.f32 %v1466, %v1487
    %v1489 = vadd.f32 %v179, %v1488
    %v1490 = vtanh.pop %v1489
    %v1491 = vsub.f32 1.0, %v1486
    %v1492 = vmul.f32 %v1491, %v1490
    %v1493 = vmul.f32 %v1486, %v1385
    %v1494 = vadd.f32 %v1492, %v1493
    %1495 = vmatpush.msra.mxu0 %v343
    %1496 = vmatpush.msra.mxu0 %v340
    %1497 = vmatpush.msra.mxu0 %v337
    %1498 = vmatpush.msra.mxu0 %v334
    %1499 = vmatpush.msra.mxu0 %v331
    %1500 = vmatpush.msra.mxu0 %v328
    %1501 = vmatpush.msra.mxu0 %v325
    %1502 = vmatpush.msra.mxu0 %v322
    %1503 = vmatpush.msra.mxu0 %v319
    %1504 = vmatpush.msra.mxu0 %v316
    %1505 = vmatpush.msra.mxu0 %v313
    %1506 = vmatpush.msra.mxu0 %v310
    %1507 = vmatpush.msra.mxu0 %v307
    %1508 = vmatpush.msra.mxu0 %v304
    %1509 = vmatpush.msra.mxu0 %v301
    %1510 = vmatpush.msra.mxu0 %v298
    %1511 = vmatmul.f32.gmra.mxu0 %v1362
    %v1512 = vpop.f32.mrf.mxu0
    %v1513 = vadd.f32 0.0, %v1512
    %1514 = vdwg.mxu0
    %1515 = vmatpush.msra.mxu0 %v344
    %1516 = vmatpush.msra.mxu0 %v341
    %1517 = vmatpush.msra.mxu0 %v338
    %1518 = vmatpush.msra.mxu0 %v335
    %1519 = vmatpush.msra.mxu0 %v332
    %1520 = vmatpush.msra.mxu0 %v329
    %1521 = vmatpush.msra.mxu0 %v326
    %1522 = vmatpush.msra.mxu0 %v323
    %1523 = vmatpush.msra.mxu0 %v320
    %1524 = vmatpush.msra.mxu0 %v317
    %1525 = vmatpush.msra.mxu0 %v314
    %1526 = vmatpush.msra.mxu0 %v311
    %1527 = vmatpush.msra.mxu0 %v308
    %1528 = vmatpush.msra.mxu0 %v305
    %1529 = vmatpush.msra.mxu0 %v302
    %1530 = vmatpush.msra.mxu0 %v299
    %1531 = vmatmul.f32.gmra.mxu0 %v1362
    %v1532 = vpop.f32.mrf.mxu0
    %v1533 = vadd.f32 0.0, %v1532
    %1534 = vdwg.mxu0
    %1535 = vmatpush.msra.mxu0 %v345
    %1536 = vmatpush.msra.mxu0 %v342
    %1537 = vmatpush.msra.mxu0 %v339
    %1538 = vmatpush.msra.mxu0 %v336
    %1539 = vmatpush.msra.mxu0 %v333
    %1540 = vmatpush.msra.mxu0 %v330
    %1541 = vmatpush.msra.mxu0 %v327
    %1542 = vmatpush.msra.mxu0 %v324
    %1543 = vmatpush.msra.mxu0 %v321
    %1544 = vmatpush.msra.mxu0 %v318
    %1545 = vmatpush.msra.mxu0 %v315
    %1546 = vmatpush.msra.mxu0 %v312
    %1547 = vmatpush.msra.mxu0 %v309
    %1548 = vmatpush.msra.mxu0 %v306
    %1549 = vmatpush.msra.mxu0 %v303
    %1550 = vmatpush.msra.mxu0 %v300
    %1551 = vmatmul.f32.gmra.mxu0 %v1362
    %v1552 = vpop.f32.mrf.mxu0
    %v1553 = vadd.f32 0.0, %v1552
    %1554 = vdwg.mxu0
    %v1556 = vrot.slane %v1513, 2
    %v1558 = vadd.f32 %v199, %v1556
    %v1559 = vxor.u32 %v1558, 2147483648
    %v1560 = vmul.f32 %v1559, 1.442695
    %v1561 = vpow.pop %v1560
    %v1562 = vadd.f32 %v1561, 1.0
    %v1563 = vrcp.pop %v1562
    %v1564 = vmul.f32 %v1562, %v1563
    %v1565 = vsub.f32 1.0, %v1564
    %v1566 = vmul.f32 %v1563, %v1565
    %v1567 = vadd.f32 %v1563, %v1566
    %vm1568 = vweird.f32 %v1562
    %vm1569 = vweird.f32 %v1563
    %vm1570 = vmor %vm1568, %vm1569
    %v1571 = vsel %vm1570, %v1563, %v1567
    %v1572 = vand.u32 2147483647, %v1562
    %vm1573 = vcmp.eq.f32.partialorder %v1572, 8.507059e+37
    %v1574 = vand.u32 %v1562, 2147483648
    %v1575 = vor.u32 1.1754944e-38, %v1574
    %v1576 = vsel %vm1573, %v1575, %v1571
    %v1577 = vmul.f32 1.0, %v1576
    %v1579 = vrot.slane %v1533, 2
    %v1581 = vadd.f32 %v222, %v1579
    %v1582 = vxor.u32 %v1581, 2147483648
    %v1583 = vmul.f32 %v1582, 1.442695
    %v1584 = vpow.pop %v1583
    %v1585 = vadd.f32 %v1584, 1.0
    %v1586 = vrcp.pop %v1585
    %v1587 = vmul.f32 %v1585, %v1586
    %v1588 = vsub.f32 1.0, %v1587
    %v1589 = vmul.f32 %v1586, %v1588
    %v1590 = vadd.f32 %v1586, %v1589
    %vm1591 = vweird.f32 %v1585
    %vm1592 = vweird.f32 %v1586
    %vm1593 = vmor %vm1591, %vm1592
    %v1594 = vsel %vm1593, %v1586, %v1590
    %v1595 = vand.u32 2147483647, %v1585
    %vm1596 = vcmp.eq.f32.partialorder %v1595, 8.507059e+37
    %v1597 = vand.u32 %v1585, 2147483648
    %v1598 = vor.u32 1.1754944e-38, %v1597
    %v1599 = vsel %vm1596, %v1598, %v1594
    %v1600 = vmul.f32 1.0, %v1599
    %v1601 = vadd.f32 %v1553, %v349
    %v1603 = vrot.slane %v1601, 2
    %v1605 = vmul.f32 %v1577, %v1603
    %v1606 = vadd.f32 %v245, %v1605
    %v1607 = vtanh.pop %v1606
    %v1608 = vsub.f32 1.0, %v1600
    %v1609 = vmul.f32 %v1608, %v1607
    %v1610 = vrot.slane %v1362, 2
    %v1612 = vmul.f32 %v1600, %v1610
    %v1613 = vadd.f32 %v1609, %v1612
    %v1615 = vrot.slane %v1494, 1
    %1617 = vst.msk [vmem:[#allocation7 + $0x4] sm:$0x1] %vm578, %v1494
    %1618 = vst.msk [vmem:[#allocation7 + $0xc] sm:$0x1] %vm578, %v1615
    %1620 = vst [vmem:[#allocation1] sm:$0xff] %v1613
    %s1621 = scalar_lea.vmem [#allocation1], 6
    %v1622 = vld [vmem:[%s1621] ss:$9 sm:$0xff]
    %s1623 = scalar_lea.vmem [#allocation1], 7
    %v1624 = vld [vmem:[%s1623] ss:$9 sm:$0xff]
    %v1625 = vperm.slane %v1622, 0
    %v1626 = vperm.slane %v1624, 0
    %1627 = vrot.lane.b32.xlu0 %v1625, 32
    %v1628 = vpop.permute.xlu0 %1627
    %1629 = vrot.lane.b32.xlu0 %v1626, 32
    %v1630 = vpop.permute.xlu0 %1629
    %1633 = vst.msk [vmem:[#allocation7 + $0x3] sm:$0x1] %vm595, %v1628
    %1634 = vst.msk [vmem:[#allocation7 + $0xb] sm:$0x1] %vm595, %v1630
    %1635 = vmatpush.msra.mxu0 %v295
    %1636 = vmatpush.msra.mxu0 %v292
    %1637 = vmatpush.msra.mxu0 %v289
    %1638 = vmatpush.msra.mxu0 %v286
    %1639 = vmatpush.msra.mxu0 %v283
    %1640 = vmatpush.msra.mxu0 %v280
    %1641 = vmatpush.msra.mxu0 %v277
    %1642 = vmatpush.msra.mxu0 %v274
    %1643 = vmatpush.msra.mxu0 %v271
    %1644 = vmatpush.msra.mxu0 %v268
    %1645 = vmatpush.msra.mxu0 %v265
    %1646 = vmatpush.msra.mxu0 %v262
    %1647 = vmatpush.msra.mxu0 %v259
    %1648 = vmatpush.msra.mxu0 %v256
    %1649 = vmatpush.msra.mxu0 %v253
    %1650 = vmatpush.msra.mxu0 %v250
    %1651 = vmatmul.f32.gmra.mxu0 %v1494
    %v1652 = vpop.f32.mrf.mxu0
    %v1653 = vadd.f32 0.0, %v1652
    %1654 = vdwg.mxu0
    %1655 = vmatpush.msra.mxu0 %v296
    %1656 = vmatpush.msra.mxu0 %v293
    %1657 = vmatpush.msra.mxu0 %v290
    %1658 = vmatpush.msra.mxu0 %v287
    %1659 = vmatpush.msra.mxu0 %v284
    %1660 = vmatpush.msra.mxu0 %v281
    %1661 = vmatpush.msra.mxu0 %v278
    %1662 = vmatpush.msra.mxu0 %v275
    %1663 = vmatpush.msra.mxu0 %v272
    %1664 = vmatpush.msra.mxu0 %v269
    %1665 = vmatpush.msra.mxu0 %v266
    %1666 = vmatpush.msra.mxu0 %v263
    %1667 = vmatpush.msra.mxu0 %v260
    %1668 = vmatpush.msra.mxu0 %v257
    %1669 = vmatpush.msra.mxu0 %v254
    %1670 = vmatpush.msra.mxu0 %v251
    %1671 = vmatmul.f32.gmra.mxu0 %v1494
    %v1672 = vpop.f32.mrf.mxu0
    %v1673 = vadd.f32 0.0, %v1672
    %1674 = vdwg.mxu0
    %1675 = vmatpush.msra.mxu0 %v297
    %1676 = vmatpush.msra.mxu0 %v294
    %1677 = vmatpush.msra.mxu0 %v291
    %1678 = vmatpush.msra.mxu0 %v288
    %1679 = vmatpush.msra.mxu0 %v285
    %1680 = vmatpush.msra.mxu0 %v282
    %1681 = vmatpush.msra.mxu0 %v279
    %1682 = vmatpush.msra.mxu0 %v276
    %1683 = vmatpush.msra.mxu0 %v273
    %1684 = vmatpush.msra.mxu0 %v270
    %1685 = vmatpush.msra.mxu0 %v267
    %1686 = vmatpush.msra.mxu0 %v264
    %1687 = vmatpush.msra.mxu0 %v261
    %1688 = vmatpush.msra.mxu0 %v258
    %1689 = vmatpush.msra.mxu0 %v255
    %1690 = vmatpush.msra.mxu0 %v252
    %1691 = vmatmul.f32.gmra.mxu0 %v1494
    %v1692 = vpop.f32.mrf.mxu0
    %v1693 = vadd.f32 0.0, %v1692
    %1694 = vdwg.mxu0
    %v1696 = vrot.slane %v1653, 6
    %v1698 = vadd.f32 %v133, %v1696
    %v1699 = vxor.u32 %v1698, 2147483648
    %v1700 = vmul.f32 %v1699, 1.442695
    %v1701 = vpow.pop %v1700
    %v1702 = vadd.f32 %v1701, 1.0
    %v1703 = vrcp.pop %v1702
    %v1704 = vmul.f32 %v1702, %v1703
    %v1705 = vsub.f32 1.0, %v1704
    %v1706 = vmul.f32 %v1703, %v1705
    %v1707 = vadd.f32 %v1703, %v1706
    %vm1708 = vweird.f32 %v1702
    %vm1709 = vweird.f32 %v1703
    %vm1710 = vmor %vm1708, %vm1709
    %v1711 = vsel %vm1710, %v1703, %v1707
    %v1712 = vand.u32 2147483647, %v1702
    %vm1713 = vcmp.eq.f32.partialorder %v1712, 8.507059e+37
    %v1714 = vand.u32 %v1702, 2147483648
    %v1715 = vor.u32 1.1754944e-38, %v1714
    %v1716 = vsel %vm1713, %v1715, %v1711
    %v1717 = vmul.f32 1.0, %v1716
    %v1719 = vrot.slane %v1673, 6
    %v1721 = vadd.f32 %v156, %v1719
    %v1722 = vxor.u32 %v1721, 2147483648
    %v1723 = vmul.f32 %v1722, 1.442695
    %v1724 = vpow.pop %v1723
    %v1725 = vadd.f32 %v1724, 1.0
    %v1726 = vrcp.pop %v1725
    %v1727 = vmul.f32 %v1725, %v1726
    %v1728 = vsub.f32 1.0, %v1727
    %v1729 = vmul.f32 %v1726, %v1728
    %v1730 = vadd.f32 %v1726, %v1729
    %vm1731 = vweird.f32 %v1725
    %vm1732 = vweird.f32 %v1726
    %vm1733 = vmor %vm1731, %vm1732
    %v1734 = vsel %vm1733, %v1726, %v1730
    %v1735 = vand.u32 2147483647, %v1725
    %vm1736 = vcmp.eq.f32.partialorder %v1735, 8.507059e+37
    %v1737 = vand.u32 %v1725, 2147483648
    %v1738 = vor.u32 1.1754944e-38, %v1737
    %v1739 = vsel %vm1736, %v1738, %v1734
    %v1740 = vmul.f32 1.0, %v1739
    %v1741 = vadd.f32 %v1693, %v347
    %v1743 = vrot.slane %v1741, 6
    %v1745 = vmul.f32 %v1717, %v1743
    %v1746 = vadd.f32 %v179, %v1745
    %v1747 = vtanh.pop %v1746
    %v1748 = vsub.f32 1.0, %v1740
    %v1749 = vmul.f32 %v1748, %v1747
    %v1750 = vrot.slane %v1494, 6
    %v1752 = vmul.f32 %v1740, %v1750
    %v1753 = vadd.f32 %v1749, %v1752
    %v1754 = vrot.slane %v1613, 6
    %1756 = vmatpush.msra.mxu0 %v343
    %1757 = vmatpush.msra.mxu0 %v340
    %1758 = vmatpush.msra.mxu0 %v337
    %1759 = vmatpush.msra.mxu0 %v334
    %1760 = vmatpush.msra.mxu0 %v331
    %1761 = vmatpush.msra.mxu0 %v328
    %1762 = vmatpush.msra.mxu0 %v325
    %1763 = vmatpush.msra.mxu0 %v322
    %1764 = vmatpush.msra.mxu0 %v319
    %1765 = vmatpush.msra.mxu0 %v316
    %1766 = vmatpush.msra.mxu0 %v313
    %1767 = vmatpush.msra.mxu0 %v310
    %1768 = vmatpush.msra.mxu0 %v307
    %1769 = vmatpush.msra.mxu0 %v304
    %1770 = vmatpush.msra.mxu0 %v301
    %1771 = vmatpush.msra.mxu0 %v298
    %1772 = vmatmul.f32.gmra.mxu0 %v1754
    %v1773 = vpop.f32.mrf.mxu0
    %v1774 = vadd.f32 0.0, %v1773
    %1775 = vdwg.mxu0
    %1776 = vmatpush.msra.mxu0 %v344
    %1777 = vmatpush.msra.mxu0 %v341
    %1778 = vmatpush.msra.mxu0 %v338
    %1779 = vmatpush.msra.mxu0 %v335
    %1780 = vmatpush.msra.mxu0 %v332
    %1781 = vmatpush.msra.mxu0 %v329
    %1782 = vmatpush.msra.mxu0 %v326
    %1783 = vmatpush.msra.mxu0 %v323
    %1784 = vmatpush.msra.mxu0 %v320
    %1785 = vmatpush.msra.mxu0 %v317
    %1786 = vmatpush.msra.mxu0 %v314
    %1787 = vmatpush.msra.mxu0 %v311
    %1788 = vmatpush.msra.mxu0 %v308
    %1789 = vmatpush.msra.mxu0 %v305
    %1790 = vmatpush.msra.mxu0 %v302
    %1791 = vmatpush.msra.mxu0 %v299
    %1792 = vmatmul.f32.gmra.mxu0 %v1754
    %v1793 = vpop.f32.mrf.mxu0
    %v1794 = vadd.f32 0.0, %v1793
    %1795 = vdwg.mxu0
    %1796 = vmatpush.msra.mxu0 %v345
    %1797 = vmatpush.msra.mxu0 %v342
    %1798 = vmatpush.msra.mxu0 %v339
    %1799 = vmatpush.msra.mxu0 %v336
    %1800 = vmatpush.msra.mxu0 %v333
    %1801 = vmatpush.msra.mxu0 %v330
    %1802 = vmatpush.msra.mxu0 %v327
    %1803 = vmatpush.msra.mxu0 %v324
    %1804 = vmatpush.msra.mxu0 %v321
    %1805 = vmatpush.msra.mxu0 %v318
    %1806 = vmatpush.msra.mxu0 %v315
    %1807 = vmatpush.msra.mxu0 %v312
    %1808 = vmatpush.msra.mxu0 %v309
    %1809 = vmatpush.msra.mxu0 %v306
    %1810 = vmatpush.msra.mxu0 %v303
    %1811 = vmatpush.msra.mxu0 %v300
    %1812 = vmatmul.f32.gmra.mxu0 %v1754
    %v1813 = vpop.f32.mrf.mxu0
    %v1814 = vadd.f32 0.0, %v1813
    %1815 = vdwg.mxu0
    %v1817 = vrot.slane %v1774, 4
    %v1819 = vadd.f32 %v199, %v1817
    %v1820 = vxor.u32 %v1819, 2147483648
    %v1821 = vmul.f32 %v1820, 1.442695
    %v1822 = vpow.pop %v1821
    %v1823 = vadd.f32 %v1822, 1.0
    %v1824 = vrcp.pop %v1823
    %v1825 = vmul.f32 %v1823, %v1824
    %v1826 = vsub.f32 1.0, %v1825
    %v1827 = vmul.f32 %v1824, %v1826
    %v1828 = vadd.f32 %v1824, %v1827
    %vm1829 = vweird.f32 %v1823
    %vm1830 = vweird.f32 %v1824
    %vm1831 = vmor %vm1829, %vm1830
    %v1832 = vsel %vm1831, %v1824, %v1828
    %v1833 = vand.u32 2147483647, %v1823
    %vm1834 = vcmp.eq.f32.partialorder %v1833, 8.507059e+37
    %v1835 = vand.u32 %v1823, 2147483648
    %v1836 = vor.u32 1.1754944e-38, %v1835
    %v1837 = vsel %vm1834, %v1836, %v1832
    %v1838 = vmul.f32 1.0, %v1837
    %v1840 = vrot.slane %v1794, 4
    %v1842 = vadd.f32 %v222, %v1840
    %v1843 = vxor.u32 %v1842, 2147483648
    %v1844 = vmul.f32 %v1843, 1.442695
    %v1845 = vpow.pop %v1844
    %v1846 = vadd.f32 %v1845, 1.0
    %v1847 = vrcp.pop %v1846
    %v1848 = vmul.f32 %v1846, %v1847
    %v1849 = vsub.f32 1.0, %v1848
    %v1850 = vmul.f32 %v1847, %v1849
    %v1851 = vadd.f32 %v1847, %v1850
    %vm1852 = vweird.f32 %v1846
    %vm1853 = vweird.f32 %v1847
    %vm1854 = vmor %vm1852, %vm1853
    %v1855 = vsel %vm1854, %v1847, %v1851
    %v1856 = vand.u32 2147483647, %v1846
    %vm1857 = vcmp.eq.f32.partialorder %v1856, 8.507059e+37
    %v1858 = vand.u32 %v1846, 2147483648
    %v1859 = vor.u32 1.1754944e-38, %v1858
    %v1860 = vsel %vm1857, %v1859, %v1855
    %v1861 = vmul.f32 1.0, %v1860
    %v1862 = vadd.f32 %v1814, %v349
    %v1864 = vrot.slane %v1862, 4
    %v1866 = vmul.f32 %v1838, %v1864
    %v1867 = vadd.f32 %v245, %v1866
    %v1868 = vtanh.pop %v1867
    %v1869 = vsub.f32 1.0, %v1861
    %v1870 = vmul.f32 %v1869, %v1868
    %v1871 = vrot.slane %v1613, 2
    %v1873 = vmul.f32 %v1861, %v1871
    %v1874 = vadd.f32 %v1870, %v1873
    %1876 = vst [vmem:[#allocation1] sm:$0xff] %v1753
    %s1877 = scalar_lea.vmem [#allocation1], 2
    %v1878 = vld [vmem:[%s1877] ss:$9 sm:$0xff]
    %s1879 = scalar_lea.vmem [#allocation1], 3
    %v1880 = vld [vmem:[%s1879] ss:$9 sm:$0xff]
    %1883 = vst.msk [vmem:[#allocation7 + $0x5] sm:$0x1] %vm578, %v1878
    %1884 = vst.msk [vmem:[#allocation7 + $0xd] sm:$0x1] %vm578, %v1880
    %1886 = vst [vmem:[#allocation1] sm:$0xff] %v1874
    %s1887 = scalar_lea.vmem [#allocation1], 4
    %v1888 = vld [vmem:[%s1887] ss:$9 sm:$0xff]
    %s1889 = scalar_lea.vmem [#allocation1], 5
    %v1890 = vld [vmem:[%s1889] ss:$9 sm:$0xff]
    %v1891 = vperm.slane %v1888, 0
    %v1892 = vperm.slane %v1890, 0
    %1893 = vrot.lane.b32.xlu0 %v1891, 32
    %v1894 = vpop.permute.xlu0 %1893
    %1895 = vrot.lane.b32.xlu0 %v1892, 32
    %v1896 = vpop.permute.xlu0 %1895
    %1899 = vst.msk [vmem:[#allocation7 + $0x2] sm:$0x1] %vm595, %v1894
    %1900 = vst.msk [vmem:[#allocation7 + $0xa] sm:$0x1] %vm595, %v1896
    %v1901 = vrot.slane %v1753, 2
    %1903 = vmatpush.msra.mxu0 %v295
    %1904 = vmatpush.msra.mxu0 %v292
    %1905 = vmatpush.msra.mxu0 %v289
    %1906 = vmatpush.msra.mxu0 %v286
    %1907 = vmatpush.msra.mxu0 %v283
    %1908 = vmatpush.msra.mxu0 %v280
    %1909 = vmatpush.msra.mxu0 %v277
    %1910 = vmatpush.msra.mxu0 %v274
    %1911 = vmatpush.msra.mxu0 %v271
    %1912 = vmatpush.msra.mxu0 %v268
    %1913 = vmatpush.msra.mxu0 %v265
    %1914 = vmatpush.msra.mxu0 %v262
    %1915 = vmatpush.msra.mxu0 %v259
    %1916 = vmatpush.msra.mxu0 %v256
    %1917 = vmatpush.msra.mxu0 %v253
    %1918 = vmatpush.msra.mxu0 %v250
    %1919 = vmatmul.f32.gmra.mxu0 %v1901
    %v1920 = vpop.f32.mrf.mxu0
    %v1921 = vadd.f32 0.0, %v1920
    %1922 = vdwg.mxu0
    %1923 = vmatpush.msra.mxu0 %v296
    %1924 = vmatpush.msra.mxu0 %v293
    %1925 = vmatpush.msra.mxu0 %v290
    %1926 = vmatpush.msra.mxu0 %v287
    %1927 = vmatpush.msra.mxu0 %v284
    %1928 = vmatpush.msra.mxu0 %v281
    %1929 = vmatpush.msra.mxu0 %v278
    %1930 = vmatpush.msra.mxu0 %v275
    %1931 = vmatpush.msra.mxu0 %v272
    %1932 = vmatpush.msra.mxu0 %v269
    %1933 = vmatpush.msra.mxu0 %v266
    %1934 = vmatpush.msra.mxu0 %v263
    %1935 = vmatpush.msra.mxu0 %v260
    %1936 = vmatpush.msra.mxu0 %v257
    %1937 = vmatpush.msra.mxu0 %v254
    %1938 = vmatpush.msra.mxu0 %v251
    %1939 = vmatmul.f32.gmra.mxu0 %v1901
    %v1940 = vpop.f32.mrf.mxu0
    %v1941 = vadd.f32 0.0, %v1940
    %1942 = vdwg.mxu0
    %1943 = vmatpush.msra.mxu0 %v297
    %1944 = vmatpush.msra.mxu0 %v294
    %1945 = vmatpush.msra.mxu0 %v291
    %1946 = vmatpush.msra.mxu0 %v288
    %1947 = vmatpush.msra.mxu0 %v285
    %1948 = vmatpush.msra.mxu0 %v282
    %1949 = vmatpush.msra.mxu0 %v279
    %1950 = vmatpush.msra.mxu0 %v276
    %1951 = vmatpush.msra.mxu0 %v273
    %1952 = vmatpush.msra.mxu0 %v270
    %1953 = vmatpush.msra.mxu0 %v267
    %1954 = vmatpush.msra.mxu0 %v264
    %1955 = vmatpush.msra.mxu0 %v261
    %1956 = vmatpush.msra.mxu0 %v258
    %1957 = vmatpush.msra.mxu0 %v255
    %1958 = vmatpush.msra.mxu0 %v252
    %1959 = vmatmul.f32.gmra.mxu0 %v1901
    %v1960 = vpop.f32.mrf.mxu0
    %v1961 = vadd.f32 0.0, %v1960
    %1962 = vdwg.mxu0
    %v1964 = vrot.slane %v1921, 4
    %v1966 = vadd.f32 %v133, %v1964
    %v1967 = vxor.u32 %v1966, 2147483648
    %v1968 = vmul.f32 %v1967, 1.442695
    %v1969 = vpow.pop %v1968
    %v1970 = vadd.f32 %v1969, 1.0
    %v1971 = vrcp.pop %v1970
    %v1972 = vmul.f32 %v1970, %v1971
    %v1973 = vsub.f32 1.0, %v1972
    %v1974 = vmul.f32 %v1971, %v1973
    %v1975 = vadd.f32 %v1971, %v1974
    %vm1976 = vweird.f32 %v1970
    %vm1977 = vweird.f32 %v1971
    %vm1978 = vmor %vm1976, %vm1977
    %v1979 = vsel %vm1978, %v1971, %v1975
    %v1980 = vand.u32 2147483647, %v1970
    %vm1981 = vcmp.eq.f32.partialorder %v1980, 8.507059e+37
    %v1982 = vand.u32 %v1970, 2147483648
    %v1983 = vor.u32 1.1754944e-38, %v1982
    %v1984 = vsel %vm1981, %v1983, %v1979
    %v1985 = vmul.f32 1.0, %v1984
    %v1987 = vrot.slane %v1941, 4
    %v1989 = vadd.f32 %v156, %v1987
    %v1990 = vxor.u32 %v1989, 2147483648
    %v1991 = vmul.f32 %v1990, 1.442695
    %v1992 = vpow.pop %v1991
    %v1993 = vadd.f32 %v1992, 1.0
    %v1994 = vrcp.pop %v1993
    %v1995 = vmul.f32 %v1993, %v1994
    %v1996 = vsub.f32 1.0, %v1995
    %v1997 = vmul.f32 %v1994, %v1996
    %v1998 = vadd.f32 %v1994, %v1997
    %vm1999 = vweird.f32 %v1993
    %vm2000 = vweird.f32 %v1994
    %vm2001 = vmor %vm1999, %vm2000
    %v2002 = vsel %vm2001, %v1994, %v1998
    %v2003 = vand.u32 2147483647, %v1993
    %vm2004 = vcmp.eq.f32.partialorder %v2003, 8.507059e+37
    %v2005 = vand.u32 %v1993, 2147483648
    %v2006 = vor.u32 1.1754944e-38, %v2005
    %v2007 = vsel %vm2004, %v2006, %v2002
    %v2008 = vmul.f32 1.0, %v2007
    %v2009 = vadd.f32 %v1961, %v347
    %v2011 = vrot.slane %v2009, 4
    %v2013 = vmul.f32 %v1985, %v2011
    %v2014 = vadd.f32 %v179, %v2013
    %v2015 = vtanh.pop %v2014
    %v2016 = vsub.f32 1.0, %v2008
    %v2017 = vmul.f32 %v2016, %v2015
    %v2018 = vrot.slane %v1753, 6
    %v2020 = vmul.f32 %v2008, %v2018
    %v2021 = vadd.f32 %v2017, %v2020
    %v2022 = vrot.slane %v1874, 4
    %2024 = vmatpush.msra.mxu0 %v343
    %2025 = vmatpush.msra.mxu0 %v340
    %2026 = vmatpush.msra.mxu0 %v337
    %2027 = vmatpush.msra.mxu0 %v334
    %2028 = vmatpush.msra.mxu0 %v331
    %2029 = vmatpush.msra.mxu0 %v328
    %2030 = vmatpush.msra.mxu0 %v325
    %2031 = vmatpush.msra.mxu0 %v322
    %2032 = vmatpush.msra.mxu0 %v319
    %2033 = vmatpush.msra.mxu0 %v316
    %2034 = vmatpush.msra.mxu0 %v313
    %2035 = vmatpush.msra.mxu0 %v310
    %2036 = vmatpush.msra.mxu0 %v307
    %2037 = vmatpush.msra.mxu0 %v304
    %2038 = vmatpush.msra.mxu0 %v301
    %2039 = vmatpush.msra.mxu0 %v298
    %2040 = vmatmul.f32.gmra.mxu0 %v2022
    %v2041 = vpop.f32.mrf.mxu0
    %v2042 = vadd.f32 0.0, %v2041
    %2043 = vdwg.mxu0
    %2044 = vmatpush.msra.mxu0 %v344
    %2045 = vmatpush.msra.mxu0 %v341
    %2046 = vmatpush.msra.mxu0 %v338
    %2047 = vmatpush.msra.mxu0 %v335
    %2048 = vmatpush.msra.mxu0 %v332
    %2049 = vmatpush.msra.mxu0 %v329
    %2050 = vmatpush.msra.mxu0 %v326
    %2051 = vmatpush.msra.mxu0 %v323
    %2052 = vmatpush.msra.mxu0 %v320
    %2053 = vmatpush.msra.mxu0 %v317
    %2054 = vmatpush.msra.mxu0 %v314
    %2055 = vmatpush.msra.mxu0 %v311
    %2056 = vmatpush.msra.mxu0 %v308
    %2057 = vmatpush.msra.mxu0 %v305
    %2058 = vmatpush.msra.mxu0 %v302
    %2059 = vmatpush.msra.mxu0 %v299
    %2060 = vmatmul.f32.gmra.mxu0 %v2022
    %v2061 = vpop.f32.mrf.mxu0
    %v2062 = vadd.f32 0.0, %v2061
    %2063 = vdwg.mxu0
    %2064 = vmatpush.msra.mxu0 %v345
    %2065 = vmatpush.msra.mxu0 %v342
    %2066 = vmatpush.msra.mxu0 %v339
    %2067 = vmatpush.msra.mxu0 %v336
    %2068 = vmatpush.msra.mxu0 %v333
    %2069 = vmatpush.msra.mxu0 %v330
    %2070 = vmatpush.msra.mxu0 %v327
    %2071 = vmatpush.msra.mxu0 %v324
    %2072 = vmatpush.msra.mxu0 %v321
    %2073 = vmatpush.msra.mxu0 %v318
    %2074 = vmatpush.msra.mxu0 %v315
    %2075 = vmatpush.msra.mxu0 %v312
    %2076 = vmatpush.msra.mxu0 %v309
    %2077 = vmatpush.msra.mxu0 %v306
    %2078 = vmatpush.msra.mxu0 %v303
    %2079 = vmatpush.msra.mxu0 %v300
    %2080 = vmatmul.f32.gmra.mxu0 %v2022
    %v2081 = vpop.f32.mrf.mxu0
    %v2082 = vadd.f32 0.0, %v2081
    %2083 = vdwg.mxu0
    %v2085 = vrot.slane %v2042, 6
    %v2087 = vadd.f32 %v199, %v2085
    %v2088 = vxor.u32 %v2087, 2147483648
    %v2089 = vmul.f32 %v2088, 1.442695
    %v2090 = vpow.pop %v2089
    %v2091 = vadd.f32 %v2090, 1.0
    %v2092 = vrcp.pop %v2091
    %v2093 = vmul.f32 %v2091, %v2092
    %v2094 = vsub.f32 1.0, %v2093
    %v2095 = vmul.f32 %v2092, %v2094
    %v2096 = vadd.f32 %v2092, %v2095
    %vm2097 = vweird.f32 %v2091
    %vm2098 = vweird.f32 %v2092
    %vm2099 = vmor %vm2097, %vm2098
    %v2100 = vsel %vm2099, %v2092, %v2096
    %v2101 = vand.u32 2147483647, %v2091
    %vm2102 = vcmp.eq.f32.partialorder %v2101, 8.507059e+37
    %v2103 = vand.u32 %v2091, 2147483648
    %v2104 = vor.u32 1.1754944e-38, %v2103
    %v2105 = vsel %vm2102, %v2104, %v2100
    %v2106 = vmul.f32 1.0, %v2105
    %v2108 = vrot.slane %v2062, 6
    %v2110 = vadd.f32 %v222, %v2108
    %v2111 = vxor.u32 %v2110, 2147483648
    %v2112 = vmul.f32 %v2111, 1.442695
    %v2113 = vpow.pop %v2112
    %v2114 = vadd.f32 %v2113, 1.0
    %v2115 = vrcp.pop %v2114
    %v2116 = vmul.f32 %v2114, %v2115
    %v2117 = vsub.f32 1.0, %v2116
    %v2118 = vmul.f32 %v2115, %v2117
    %v2119 = vadd.f32 %v2115, %v2118
    %vm2120 = vweird.f32 %v2114
    %vm2121 = vweird.f32 %v2115
    %vm2122 = vmor %vm2120, %vm2121
    %v2123 = vsel %vm2122, %v2115, %v2119
    %v2124 = vand.u32 2147483647, %v2114
    %vm2125 = vcmp.eq.f32.partialorder %v2124, 8.507059e+37
    %v2126 = vand.u32 %v2114, 2147483648
    %v2127 = vor.u32 1.1754944e-38, %v2126
    %v2128 = vsel %vm2125, %v2127, %v2123
    %v2129 = vmul.f32 1.0, %v2128
    %v2130 = vadd.f32 %v2082, %v349
    %v2132 = vrot.slane %v2130, 6
    %v2134 = vmul.f32 %v2106, %v2132
    %v2135 = vadd.f32 %v245, %v2134
    %v2136 = vtanh.pop %v2135
    %v2137 = vsub.f32 1.0, %v2129
    %v2138 = vmul.f32 %v2137, %v2136
    %v2139 = vrot.slane %v1874, 2
    %v2141 = vmul.f32 %v2129, %v2139
    %v2142 = vadd.f32 %v2138, %v2141
    %2144 = vst [vmem:[#allocation1] sm:$0xff] %v2021
    %s2145 = scalar_lea.vmem [#allocation1], 4
    %v2146 = vld [vmem:[%s2145] ss:$9 sm:$0xff]
    %s2147 = scalar_lea.vmem [#allocation1], 5
    %v2148 = vld [vmem:[%s2147] ss:$9 sm:$0xff]
    %2151 = vst.msk [vmem:[#allocation7 + $0x6] sm:$0x1] %vm578, %v2146
    %2152 = vst.msk [vmem:[#allocation7 + $0xe] sm:$0x1] %vm578, %v2148
    %2154 = vst [vmem:[#allocation1] sm:$0xff] %v2142
    %s2155 = scalar_lea.vmem [#allocation1], 2
    %v2156 = vld [vmem:[%s2155] ss:$9 sm:$0xff]
    %s2157 = scalar_lea.vmem [#allocation1], 3
    %v2158 = vld [vmem:[%s2157] ss:$9 sm:$0xff]
    %v2159 = vperm.slane %v2156, 0
    %v2160 = vperm.slane %v2158, 0
    %2161 = vrot.lane.b32.xlu0 %v2159, 32
    %v2162 = vpop.permute.xlu0 %2161
    %2163 = vrot.lane.b32.xlu0 %v2160, 32
    %v2164 = vpop.permute.xlu0 %2163
    %2167 = vst.msk [vmem:[#allocation7 + $0x1] sm:$0x1] %vm595, %v2162
    %2168 = vst.msk [vmem:[#allocation7 + $0x9] sm:$0x1] %vm595, %v2164
    %v2169 = vrot.slane %v2021, 4
    %2171 = vmatpush.msra.mxu0 %v295
    %2172 = vmatpush.msra.mxu0 %v292
    %2173 = vmatpush.msra.mxu0 %v289
    %2174 = vmatpush.msra.mxu0 %v286
    %2175 = vmatpush.msra.mxu0 %v283
    %2176 = vmatpush.msra.mxu0 %v280
    %2177 = vmatpush.msra.mxu0 %v277
    %2178 = vmatpush.msra.mxu0 %v274
    %2179 = vmatpush.msra.mxu0 %v271
    %2180 = vmatpush.msra.mxu0 %v268
    %2181 = vmatpush.msra.mxu0 %v265
    %2182 = vmatpush.msra.mxu0 %v262
    %2183 = vmatpush.msra.mxu0 %v259
    %2184 = vmatpush.msra.mxu0 %v256
    %2185 = vmatpush.msra.mxu0 %v253
    %2186 = vmatpush.msra.mxu0 %v250
    %2187 = vmatmul.f32.gmra.mxu0 %v2169
    %v2188 = vpop.f32.mrf.mxu0
    %v2189 = vadd.f32 0.0, %v2188
    %2190 = vdwg.mxu0
    %2191 = vmatpush.msra.mxu0 %v296
    %2192 = vmatpush.msra.mxu0 %v293
    %2193 = vmatpush.msra.mxu0 %v290
    %2194 = vmatpush.msra.mxu0 %v287
    %2195 = vmatpush.msra.mxu0 %v284
    %2196 = vmatpush.msra.mxu0 %v281
    %2197 = vmatpush.msra.mxu0 %v278
    %2198 = vmatpush.msra.mxu0 %v275
    %2199 = vmatpush.msra.mxu0 %v272
    %2200 = vmatpush.msra.mxu0 %v269
    %2201 = vmatpush.msra.mxu0 %v266
    %2202 = vmatpush.msra.mxu0 %v263
    %2203 = vmatpush.msra.mxu0 %v260
    %2204 = vmatpush.msra.mxu0 %v257
    %2205 = vmatpush.msra.mxu0 %v254
    %2206 = vmatpush.msra.mxu0 %v251
    %2207 = vmatmul.f32.gmra.mxu0 %v2169
    %v2208 = vpop.f32.mrf.mxu0
    %v2209 = vadd.f32 0.0, %v2208
    %2210 = vdwg.mxu0
    %2211 = vmatpush.msra.mxu0 %v297
    %2212 = vmatpush.msra.mxu0 %v294
    %2213 = vmatpush.msra.mxu0 %v291
    %2214 = vmatpush.msra.mxu0 %v288
    %2215 = vmatpush.msra.mxu0 %v285
    %2216 = vmatpush.msra.mxu0 %v282
    %2217 = vmatpush.msra.mxu0 %v279
    %2218 = vmatpush.msra.mxu0 %v276
    %2219 = vmatpush.msra.mxu0 %v273
    %2220 = vmatpush.msra.mxu0 %v270
    %2221 = vmatpush.msra.mxu0 %v267
    %2222 = vmatpush.msra.mxu0 %v264
    %2223 = vmatpush.msra.mxu0 %v261
    %2224 = vmatpush.msra.mxu0 %v258
    %2225 = vmatpush.msra.mxu0 %v255
    %2226 = vmatpush.msra.mxu0 %v252
    %2227 = vmatmul.f32.gmra.mxu0 %v2169
    %v2228 = vpop.f32.mrf.mxu0
    %v2229 = vadd.f32 0.0, %v2228
    %2230 = vdwg.mxu0
    %v2232 = vrot.slane %v2189, 2
    %v2234 = vadd.f32 %v133, %v2232
    %v2235 = vxor.u32 %v2234, 2147483648
    %v2236 = vmul.f32 %v2235, 1.442695
    %v2237 = vpow.pop %v2236
    %v2238 = vadd.f32 %v2237, 1.0
    %v2239 = vrcp.pop %v2238
    %v2240 = vmul.f32 %v2238, %v2239
    %v2241 = vsub.f32 1.0, %v2240
    %v2242 = vmul.f32 %v2239, %v2241
    %v2243 = vadd.f32 %v2239, %v2242
    %vm2244 = vweird.f32 %v2238
    %vm2245 = vweird.f32 %v2239
    %vm2246 = vmor %vm2244, %vm2245
    %v2247 = vsel %vm2246, %v2239, %v2243
    %v2248 = vand.u32 2147483647, %v2238
    %vm2249 = vcmp.eq.f32.partialorder %v2248, 8.507059e+37
    %v2250 = vand.u32 %v2238, 2147483648
    %v2251 = vor.u32 1.1754944e-38, %v2250
    %v2252 = vsel %vm2249, %v2251, %v2247
    %v2253 = vmul.f32 1.0, %v2252
    %v2255 = vrot.slane %v2209, 2
    %v2257 = vadd.f32 %v156, %v2255
    %v2258 = vxor.u32 %v2257, 2147483648
    %v2259 = vmul.f32 %v2258, 1.442695
    %v2260 = vpow.pop %v2259
    %v2261 = vadd.f32 %v2260, 1.0
    %v2262 = vrcp.pop %v2261
    %v2263 = vmul.f32 %v2261, %v2262
    %v2264 = vsub.f32 1.0, %v2263
    %v2265 = vmul.f32 %v2262, %v2264
    %v2266 = vadd.f32 %v2262, %v2265
    %vm2267 = vweird.f32 %v2261
    %vm2268 = vweird.f32 %v2262
    %vm2269 = vmor %vm2267, %vm2268
    %v2270 = vsel %vm2269, %v2262, %v2266
    %v2271 = vand.u32 2147483647, %v2261
    %vm2272 = vcmp.eq.f32.partialorder %v2271, 8.507059e+37
    %v2273 = vand.u32 %v2261, 2147483648
    %v2274 = vor.u32 1.1754944e-38, %v2273
    %v2275 = vsel %vm2272, %v2274, %v2270
    %v2276 = vmul.f32 1.0, %v2275
    %v2277 = vadd.f32 %v2229, %v347
    %v2279 = vrot.slane %v2277, 2
    %v2281 = vmul.f32 %v2253, %v2279
    %v2282 = vadd.f32 %v179, %v2281
    %v2283 = vtanh.pop %v2282
    %v2284 = vsub.f32 1.0, %v2276
    %v2285 = vmul.f32 %v2284, %v2283
    %v2286 = vrot.slane %v2021, 6
    %v2288 = vmul.f32 %v2276, %v2286
    %v2289 = vadd.f32 %v2285, %v2288
    %v2290 = vrot.slane %v2142, 2
    %2292 = vmatpush.msra.mxu0 %v343
    %2293 = vmatpush.msra.mxu0 %v340
    %2294 = vmatpush.msra.mxu0 %v337
    %2295 = vmatpush.msra.mxu0 %v334
    %2296 = vmatpush.msra.mxu0 %v331
    %2297 = vmatpush.msra.mxu0 %v328
    %2298 = vmatpush.msra.mxu0 %v325
    %2299 = vmatpush.msra.mxu0 %v322
    %2300 = vmatpush.msra.mxu0 %v319
    %2301 = vmatpush.msra.mxu0 %v316
    %2302 = vmatpush.msra.mxu0 %v313
    %2303 = vmatpush.msra.mxu0 %v310
    %2304 = vmatpush.msra.mxu0 %v307
    %2305 = vmatpush.msra.mxu0 %v304
    %2306 = vmatpush.msra.mxu0 %v301
    %2307 = vmatpush.msra.mxu0 %v298
    %2308 = vmatmul.f32.gmra.mxu0 %v2290
    %v2309 = vpop.f32.mrf.mxu0
    %v2310 = vadd.f32 0.0, %v2309
    %2311 = vdwg.mxu0
    %2312 = vmatpush.msra.mxu0 %v344
    %2313 = vmatpush.msra.mxu0 %v341
    %2314 = vmatpush.msra.mxu0 %v338
    %2315 = vmatpush.msra.mxu0 %v335
    %2316 = vmatpush.msra.mxu0 %v332
    %2317 = vmatpush.msra.mxu0 %v329
    %2318 = vmatpush.msra.mxu0 %v326
    %2319 = vmatpush.msra.mxu0 %v323
    %2320 = vmatpush.msra.mxu0 %v320
    %2321 = vmatpush.msra.mxu0 %v317
    %2322 = vmatpush.msra.mxu0 %v314
    %2323 = vmatpush.msra.mxu0 %v311
    %2324 = vmatpush.msra.mxu0 %v308
    %2325 = vmatpush.msra.mxu0 %v305
    %2326 = vmatpush.msra.mxu0 %v302
    %2327 = vmatpush.msra.mxu0 %v299
    %2328 = vmatmul.f32.gmra.mxu0 %v2290
    %v2329 = vpop.f32.mrf.mxu0
    %v2330 = vadd.f32 0.0, %v2329
    %2331 = vdwg.mxu0
    %2332 = vmatpush.msra.mxu0 %v345
    %2333 = vmatpush.msra.mxu0 %v342
    %2334 = vmatpush.msra.mxu0 %v339
    %2335 = vmatpush.msra.mxu0 %v336
    %2336 = vmatpush.msra.mxu0 %v333
    %2337 = vmatpush.msra.mxu0 %v330
    %2338 = vmatpush.msra.mxu0 %v327
    %2339 = vmatpush.msra.mxu0 %v324
    %2340 = vmatpush.msra.mxu0 %v321
    %2341 = vmatpush.msra.mxu0 %v318
    %2342 = vmatpush.msra.mxu0 %v315
    %2343 = vmatpush.msra.mxu0 %v312
    %2344 = vmatpush.msra.mxu0 %v309
    %2345 = vmatpush.msra.mxu0 %v306
    %2346 = vmatpush.msra.mxu0 %v303
    %2347 = vmatpush.msra.mxu0 %v300
    %2348 = vmatmul.f32.gmra.mxu0 %v2290
    %v2349 = vpop.f32.mrf.mxu0
    %v2350 = vadd.f32 0.0, %v2349
    %2351 = vdwg.mxu0
    %v2352 = vadd.f32 %v199, %v2310
    %v2353 = vxor.u32 %v2352, 2147483648
    %v2354 = vmul.f32 %v2353, 1.442695
    %v2355 = vpow.pop %v2354
    %v2356 = vadd.f32 %v2355, 1.0
    %v2357 = vrcp.pop %v2356
    %v2358 = vmul.f32 %v2356, %v2357
    %v2359 = vsub.f32 1.0, %v2358
    %v2360 = vmul.f32 %v2357, %v2359
    %v2361 = vadd.f32 %v2357, %v2360
    %vm2362 = vweird.f32 %v2356
    %vm2363 = vweird.f32 %v2357
    %vm2364 = vmor %vm2362, %vm2363
    %v2365 = vsel %vm2364, %v2357, %v2361
    %v2366 = vand.u32 2147483647, %v2356
    %vm2367 = vcmp.eq.f32.partialorder %v2366, 8.507059e+37
    %v2368 = vand.u32 %v2356, 2147483648
    %v2369 = vor.u32 1.1754944e-38, %v2368
    %v2370 = vsel %vm2367, %v2369, %v2365
    %v2371 = vmul.f32 1.0, %v2370
    %v2372 = vadd.f32 %v222, %v2330
    %v2373 = vxor.u32 %v2372, 2147483648
    %v2374 = vmul.f32 %v2373, 1.442695
    %v2375 = vpow.pop %v2374
    %v2376 = vadd.f32 %v2375, 1.0
    %v2377 = vrcp.pop %v2376
    %v2378 = vmul.f32 %v2376, %v2377
    %v2379 = vsub.f32 1.0, %v2378
    %v2380 = vmul.f32 %v2377, %v2379
    %v2381 = vadd.f32 %v2377, %v2380
    %vm2382 = vweird.f32 %v2376
    %vm2383 = vweird.f32 %v2377
    %vm2384 = vmor %vm2382, %vm2383
    %v2385 = vsel %vm2384, %v2377, %v2381
    %v2386 = vand.u32 2147483647, %v2376
    %vm2387 = vcmp.eq.f32.partialorder %v2386, 8.507059e+37
    %v2388 = vand.u32 %v2376, 2147483648
    %v2389 = vor.u32 1.1754944e-38, %v2388
    %v2390 = vsel %vm2387, %v2389, %v2385
    %v2391 = vmul.f32 1.0, %v2390
    %v2392 = vadd.f32 %v2350, %v349
    %v2393 = vmul.f32 %v2371, %v2392
    %v2394 = vadd.f32 %v245, %v2393
    %v2395 = vtanh.pop %v2394
    %v2396 = vsub.f32 1.0, %v2391
    %v2397 = vmul.f32 %v2396, %v2395
    %v2398 = vmul.f32 %v2391, %v2290
    %v2399 = vadd.f32 %v2397, %v2398
    %2401 = vst [vmem:[#allocation1] sm:$0xff] %v2289
    %s2402 = scalar_lea.vmem [#allocation1], 6
    %v2403 = vld [vmem:[%s2402] ss:$9 sm:$0xff]
    %s2404 = scalar_lea.vmem [#allocation1], 7
    %v2405 = vld [vmem:[%s2404] ss:$9 sm:$0xff]
    %2408 = vst.msk [vmem:[#allocation7 + $0x7] sm:$0x1] %vm578, %v2403
    %2409 = vst.msk [vmem:[#allocation7 + $0xf] sm:$0x1] %vm578, %v2405
    %v2411 = vrot.slane %v2399, 1
    %v2412 = vperm.slane %v2399, 0
    %v2413 = vperm.slane %v2411, 0
    %2414 = vrot.lane.b32.xlu0 %v2412, 32
    %v2415 = vpop.permute.xlu0 %2414
    %2416 = vrot.lane.b32.xlu0 %v2413, 32
    %v2417 = vpop.permute.xlu0 %2416
    %2420 = vst.msk [vmem:[#allocation7] sm:$0x1] %vm595, %v2415
    %2421 = vst.msk [vmem:[#allocation7 + $0x8] sm:$0x1] %vm595, %v2417
    %v2422 = vrot.slane %v2399, 2
    %v2423 = vld [vmem:[%s6] sm:$0xff]
    %v2424 = vld [vmem:[%s6 + $0x8] sm:$0xff]
    %v2425 = vld [vmem:[%s6 + $0x10] sm:$0xff]
    %v2426 = vld [vmem:[%s6 + $0x18] sm:$0xff]
    %v2427 = vld [vmem:[%s6 + $0x20] sm:$0xff]
    %v2428 = vld [vmem:[%s6 + $0x28] sm:$0xff]
    %v2429 = vld [vmem:[%s6 + $0x30] sm:$0xff]
    %v2430 = vld [vmem:[%s6 + $0x38] sm:$0xff]
    %v2431 = vld [vmem:[%s6 + $0x40] sm:$0xff]
    %v2432 = vld [vmem:[%s6 + $0x48] sm:$0xff]
    %v2433 = vld [vmem:[%s6 + $0x50] sm:$0xff]
    %v2434 = vld [vmem:[%s6 + $0x58] sm:$0xff]
    %v2435 = vld [vmem:[%s6 + $0x60] sm:$0xff]
    %v2436 = vld [vmem:[%s6 + $0x68] sm:$0xff]
    %v2437 = vld [vmem:[%s6 + $0x70] sm:$0xff]
    %v2438 = vld [vmem:[%s6 + $0x78] sm:$0xff]
    %v2439 = vld [vmem:[%s6 + $0x80] sm:$0xff]
    %v2440 = vld [vmem:[%s6 + $0x88] sm:$0xff]
    %v2441 = vld [vmem:[%s6 + $0x90] sm:$0xff]
    %v2442 = vld [vmem:[%s6 + $0x98] sm:$0xff]
    %v2443 = vld [vmem:[%s6 + $0xa0] sm:$0xff]
    %v2444 = vld [vmem:[%s6 + $0xa8] sm:$0xff]
    %v2445 = vld [vmem:[%s6 + $0xb0] sm:$0xff]
    %v2446 = vld [vmem:[%s6 + $0xb8] sm:$0xff]
    %v2447 = vld [vmem:[%s6 + $0xc0] sm:$0xff]
    %v2448 = vld [vmem:[%s6 + $0xc8] sm:$0xff]
    %v2449 = vld [vmem:[%s6 + $0xd0] sm:$0xff]
    %v2450 = vld [vmem:[%s6 + $0xd8] sm:$0xff]
    %v2451 = vld [vmem:[%s6 + $0xe0] sm:$0xff]
    %v2452 = vld [vmem:[%s6 + $0xe8] sm:$0xff]
    %v2453 = vld [vmem:[%s6 + $0xf0] sm:$0xff]
    %v2454 = vld [vmem:[%s6 + $0xf8] sm:$0xff]
    %v2455 = vld [vmem:[%s7] sm:$0x1]
    %v2457 = vperm.slane %v2455, 0
    %v2459 = vrot.slane %v2289, 6
    %v2460 = vrot.slane %v2422, 6
    %2463 = vmatpush.msra.mxu0 %v2438
    %2464 = vmatpush.msra.mxu0 %v2437
    %2465 = vmatpush.msra.mxu0 %v2436
    %2466 = vmatpush.msra.mxu0 %v2435
    %2467 = vmatpush.msra.mxu0 %v2434
    %2468 = vmatpush.msra.mxu0 %v2433
    %2469 = vmatpush.msra.mxu0 %v2432
    %2470 = vmatpush.msra.mxu0 %v2431
    %2471 = vmatpush.msra.mxu0 %v2430
    %2472 = vmatpush.msra.mxu0 %v2429
    %2473 = vmatpush.msra.mxu0 %v2428
    %2474 = vmatpush.msra.mxu0 %v2427
    %2475 = vmatpush.msra.mxu0 %v2426
    %2476 = vmatpush.msra.mxu0 %v2425
    %2477 = vmatpush.msra.mxu0 %v2424
    %2478 = vmatpush.msra.mxu0 %v2423
    %2479 = vmatmul.f32.gmra.mxu0 %v2459
    %v2480 = vpop.f32.mrf.mxu0
    %v2481 = vadd.f32 %v2457, %v2480
    %2482 = vdwg.mxu0
    %2483 = vmatpush.msra.mxu0 %v2454
    %2484 = vmatpush.msra.mxu0 %v2453
    %2485 = vmatpush.msra.mxu0 %v2452
    %2486 = vmatpush.msra.mxu0 %v2451
    %2487 = vmatpush.msra.mxu0 %v2450
    %2488 = vmatpush.msra.mxu0 %v2449
    %2489 = vmatpush.msra.mxu0 %v2448
    %2490 = vmatpush.msra.mxu0 %v2447
    %2491 = vmatpush.msra.mxu0 %v2446
    %2492 = vmatpush.msra.mxu0 %v2445
    %2493 = vmatpush.msra.mxu0 %v2444
    %2494 = vmatpush.msra.mxu0 %v2443
    %2495 = vmatpush.msra.mxu0 %v2442
    %2496 = vmatpush.msra.mxu0 %v2441
    %2497 = vmatpush.msra.mxu0 %v2440
    %2498 = vmatpush.msra.mxu0 %v2439
    %2499 = vmatmul.f32.gmra.mxu0 %v2460
    %v2500 = vpop.f32.mrf.mxu0
    %v2501 = vadd.f32 %v2481, %v2500
    %2502 = vdwg.mxu0
    %v2503 = vtanh.pop %v2501
    %vm2504 = vcmask 254976
    %2505 = vst.msk [vmem:[#allocation8] sm:$0x3] %vm2504, %v2503
    // Predicated region
    $region42: #{tpu_custom_call.1} parent=1 // pred_check
      _
    $region43: #{tpu_custom_call.1} parent=1 // pred_check_branch
      %2507 = sbr.rel (0) target = $region45
    $region44: #{tpu_custom_call.1} parent=1 // pred_region
      %2509 = vsyncadd [#allocation4], 0
      %s2510 = sshll.u32 [#allocation7], 4
      %s2511 = int_to_ptr.vmem [resolvable:$true] %s2510
      %s2512 = sshll.u32 %s8, 4
      %s2513 = int_to_ptr.hbm [resolvable:$true] %s2512
      %2518 = dma.vmem_to_hbm [thread:$0]  %s2511, 256, %s2513, [#allocation4], 128, 128, 8
    $region45: #{tpu_custom_call.1} parent=1 // pred_fallthru
      _
    // Predicated region
    $region46: #{tpu_custom_call.1} parent=1 // pred_check
      _
    $region47: #{tpu_custom_call.1} parent=1 // pred_check_branch
      %2520 = sbr.rel (0) target = $region49
    $region48: #{tpu_custom_call.1} parent=1 // pred_region
      %2522 = vsyncadd [#allocation9], 0
      %s2524 = sshll.u32 [#allocation8], 4
      %s2525 = int_to_ptr.vmem [resolvable:$true] %s2524
      %s2526 = sshll.u32 %s9, 4
      %s2527 = int_to_ptr.hbm [resolvable:$true] %s2526
      %2529 = dma.vmem_to_hbm [thread:$0]  %s2525, 32, %s2527, [#allocation9]
    $region49: #{tpu_custom_call.1} parent=1 // pred_fallthru
      _
    // Predicated region
    $region50: #{tpu_custom_call.1} parent=1 // pred_check
      _
    $region51: #{tpu_custom_call.1} parent=1 // pred_check_branch
      %2531 = sbr.rel (0) target = $region53
    $region52: #{tpu_custom_call.1} parent=1 // pred_region
      %2533 = dma.done [#allocation4], 256
    $region53: #{tpu_custom_call.1} parent=1 // pred_fallthru
      _
    // Predicated region
    $region54: #{tpu_custom_call.1} parent=1 // pred_check
      _
    $region55: #{tpu_custom_call.1} parent=1 // pred_check_branch
      %2535 = sbr.rel (0) target = $region57
    $region56: #{tpu_custom_call.1} parent=1 // pred_region
      %2537 = dma.done [#allocation9], 32
    $region57: #{tpu_custom_call.1} parent=1 // pred_fallthru
      _
    %2538 = vsyncpa [#allocation3], 1
    %2539 = vsyncpa [#allocation6], 1
    %2540 = vsyncpa [#allocation4], 1
    %2541 = vsyncpa [#allocation9], 1

</llo_original>
